<compile_context>
chip_gen: v6e
topology: v6e:2x2x1
jax: 0.10.0
libtpu: 0.0.40
codegen_flags: <defaults>
</compile_context>

<pallas_src>
import jax
import jax.numpy as jnp
from jax.experimental import pallas as pl
from jax.experimental.pallas import tpu as pltpu


def _conv3x3_flat(src_ref, w_ref, m, wpad, cin, cout):
    """3x3 'same' conv over a zero-padded plane stored flat as (rows*wpad, cin).

    src_ref : (p_alloc, cin) VMEM scratch; interior value (h, w) sits at flat
              row (1+h)*wpad + (1+w); halos (and the alignment tail) are zero.
    w_ref   : (9*cin, cout) im2col weights, rows ordered (dy, dx, c_in).
    Returns (m, cout) float32 with m = hp*wpad; flat row q = h*wpad + w holds
    the conv output at (h, w); columns w >= wp are junk (masked / discarded).
    """
    acc = jnp.zeros((m, cout), jnp.float32)
    for t in range(9):                          # static unroll: 9 taps
        dy, dx = divmod(t, 3)
        off = dy * wpad + dx                    # static offset into the flat plane
        lhs = src_ref[pl.ds(off, m), :]                       # (m, cin)
        w_t = w_ref[pl.ds(t * cin, cin), :]                   # (cin, cout)
        acc = acc + jnp.dot(lhs, w_t, preferred_element_type=jnp.float32)
    return acc


def bottleneck_kernel(x_ref, w1_ref, w2_ref, scale_ref, shift_ref, mask_ref,
                      o_ref, pad1_ref, pad2_ref):
    # x_ref    : (1, Hp, 2, Wpad, 2*Cin)  pool-window-factored NHWC input block
    # w1_ref   : (9*Cin,  Cmid)           conv1 weights (im2col layout)
    # w2_ref   : (9*Cmid, Cmid)           conv2 weights (im2col layout)
    # scale_ref, shift_ref : (1, Cmid)    folded BatchNorm scale / shift (f32)
    # mask_ref : (Hp*Wpad, 1)             1.0 for valid columns (w < Wp), else 0.0
    # o_ref    : (1, Hp*Wpad, Cmid)       flat output block (junk cols sliced off outside)
    # pad1_ref : (p_alloc, Cin)           flat zero-padded pooled input
    # pad2_ref : (p_alloc, Cmid)          flat zero-padded relu(bn(conv1))
    Hp = x_ref.shape[1]
    Wpad = x_ref.shape[3]
    Cin = pad1_ref.shape[1]
    Cmid = o_ref.shape[2]
    m1 = Hp * Wpad
    top = Wpad + 1
    p_alloc = pad1_ref.shape[0]
    bot = p_alloc - (top + m1)

    # Zero only the halo strips (top strip, bottom strip + tail); the interior
    # [top, top + m1) is fully overwritten below.  Unconditional so it is also
    # correct when the "parallel" batch axis is sharded across TensorCores.
    pad1_ref[pl.ds(0, top), :] = jnp.zeros((top, Cin), pad1_ref.dtype)
    pad2_ref[pl.ds(0, top), :] = jnp.zeros((top, Cmid), pad2_ref.dtype)
    pad1_ref[pl.ds(top + m1, bot), :] = jnp.zeros((bot, Cin), pad1_ref.dtype)
    pad2_ref[pl.ds(top + m1, bot), :] = jnp.zeros((bot, Cmid), pad2_ref.dtype)

    # ---- MaxPool2d(kernel_size=2, stride=2), in the native dtype --------------
    x5 = x_ref[0]                                   # (Hp, 2, Wpad, 2*Cin)
    xh = jnp.maximum(x5[:, 0], x5[:, 1])            # max over the H offset
    pooled = jnp.maximum(xh[..., :Cin], xh[..., Cin:])   # max over the W offset
    # Write each pooled row (Wpad wide; last 2 cols are already zero thanks to
    # the wrapper-side W padding) into the flat padded plane.  Consecutive row
    # stores tile the interior contiguously, supplying the inter-row halos.
    for h in range(Hp):                             # static unroll
        pad1_ref[pl.ds((1 + h) * Wpad + 1, Wpad), :] = (
            pooled[h].astype(pad1_ref.dtype))

    # ---- conv1 (3x3, pad=1, no bias) + folded BatchNorm + ReLU ----------------
    acc1 = _conv3x3_flat(pad1_ref, w1_ref, m1, Wpad, Cin, Cmid)   # (m1, Cmid) f32
    y1 = jnp.maximum(acc1 * scale_ref[...] + shift_ref[...], 0.0)
    y1 = y1 * mask_ref[...]          # zero junk columns -> they become conv2's halos
    pad2_ref[pl.ds(top, m1), :] = y1.astype(pad2_ref.dtype)

    # ---- conv2 (3x3, pad=1, no bias); no norm/relu afterwards (see header) ----
    acc2 = _conv3x3_flat(pad2_ref, w2_ref, m1, Wpad, Cmid, Cmid)  # (m1, Cmid) f32
    o_ref[0] = acc2.astype(o_ref.dtype)


def bottleneck_forward(x, conv1_w, conv2_w, bn_gamma, bn_beta, bn_mean, bn_var,
                       eps=1e-5):
    """x: (B, 8F, H, W) NCHW; conv weights in PyTorch (C_out, C_in, 3, 3) layout."""
    B, Cin, H, W = x.shape
    Cmid = conv1_w.shape[0]
    assert H % 2 == 0 and W % 2 == 0, "MaxPool2d(2,2) path assumes even H, W"
    Hp, Wp = H // 2, W // 2
    Wpad = Wp + 2                     # pooled width incl. the 2 junk/halo columns
    m1 = Hp * Wpad
    # flat padded-plane length, with enough tail that every tap slice is in bounds
    p_alloc = pl.cdiv((Hp + 2) * Wpad + 2, 8) * 8

    # NCHW -> NHWC; zero-pad W by 4 input columns (= 2 pooled columns) so the
    # pooled plane carries its own zero halo columns; factor the 2x2 pool window
    # so the H-offset is a leading dim and the W-offset rides on the lane axis.
    x_nhwc = jnp.transpose(x, (0, 2, 3, 1))
    x_nhwc = jnp.pad(x_nhwc, ((0, 0), (0, 0), (0, 4), (0, 0)))
    x_pool = x_nhwc.reshape(B, Hp, 2, Wpad, 2 * Cin)

    # Conv weights -> im2col layout: rows ordered (dy, dx, c_in), cols = c_out.
    w1 = jnp.transpose(conv1_w, (2, 3, 1, 0)).reshape(9 * Cin, Cmid)
    w2 = jnp.transpose(conv2_w, (2, 3, 1, 0)).reshape(9 * Cmid, Cmid)

    # Fold inference-mode BatchNorm into per-channel scale / shift (f32, tiny).
    inv = jax.lax.rsqrt(bn_var.astype(jnp.float32) + eps)
    g32 = bn_gamma.astype(jnp.float32)
    scale = (g32 * inv).reshape(1, Cmid)
    shift = (bn_beta.astype(jnp.float32)
             - bn_mean.astype(jnp.float32) * g32 * inv).reshape(1, Cmid)

    # Validity mask over flat rows: row h*Wpad + w is a real output iff w < Wp.
    mask = jnp.tile(jnp.arange(Wpad) < Wp, Hp).astype(jnp.float32).reshape(m1, 1)

    out_flat = pl.pallas_call(
        bottleneck_kernel,
        out_shape=jax.ShapeDtypeStruct((B, m1, Cmid), x.dtype),
        grid=(B,),
        in_specs=[
            pl.BlockSpec((1, Hp, 2, Wpad, 2 * Cin), lambda b: (b, 0, 0, 0, 0)),
            pl.BlockSpec((9 * Cin, Cmid), lambda b: (0, 0)),
            pl.BlockSpec((9 * Cmid, Cmid), lambda b: (0, 0)),
            pl.BlockSpec((1, Cmid), lambda b: (0, 0)),
            pl.BlockSpec((1, Cmid), lambda b: (0, 0)),
            pl.BlockSpec((m1, 1), lambda b: (0, 0)),
        ],
        out_specs=pl.BlockSpec((1, m1, Cmid), lambda b: (b, 0, 0)),
        scratch_shapes=[
            pltpu.VMEM((p_alloc, Cin), x.dtype),    # flat zero-padded pooled input
            pltpu.VMEM((p_alloc, Cmid), x.dtype),   # flat zero-padded relu(bn(conv1))
        ],
        compiler_params=pltpu.CompilerParams(
            dimension_semantics=("parallel",),       # megacore-shard batch on v7x
            vmem_limit_bytes=32 * 1024 * 1024),
    )(x_pool, w1, w2, scale, shift, mask)

    # Drop the junk columns and return NCHW.
    out = out_flat.reshape(B, Hp, Wpad, Cmid)[:, :, :Wp, :]
    return jnp.transpose(out, (0, 3, 1, 2))


def reference_forward(x, conv1_w, conv2_w, gamma, beta, mean, var, eps=1e-5):
    """Pure-JAX reference of the literal PyTorch forward."""
    B, Cin, H, W = x.shape
    p = jnp.max(x.reshape(B, Cin, H // 2, 2, W // 2, 2), axis=(3, 5))
    dn = ("NCHW", "OIHW", "NCHW")
    y = jax.lax.conv_general_dilated(p, conv1_w, (1, 1), ((1, 1), (1, 1)),
                                     dimension_numbers=dn,
                                     precision=jax.lax.Precision.HIGHEST)
    y = (y - mean[None, :, None, None]) / jnp.sqrt(var + eps)[None, :, None, None]
    y = y * gamma[None, :, None, None] + beta[None, :, None, None]
    y = jnp.maximum(y, 0.0)
    y = jax.lax.conv_general_dilated(y, conv2_w, (1, 1), ((1, 1), (1, 1)),
                                     dimension_numbers=dn,
                                     precision=jax.lax.Precision.HIGHEST)
    return y


if __name__ == "__main__":
    init_features = 2                 # Bottleneck(init_features=2)
    Cin = init_features * 8           # 16 = bottleneck input channels
    Cmid = init_features * 16         # 32 = bottleneck features
    B, H, W = 2, 16, 16

    key = jax.random.PRNGKey(0)
    kx, k1, k2, kg, kb, km, kv = jax.random.split(key, 7)

    x = jax.random.normal(kx, (B, Cin, H, W), dtype=jnp.float32)
    conv1_w = 0.1 * jax.random.normal(k1, (Cmid, Cin, 3, 3), dtype=jnp.float32)
    conv2_w = 0.1 * jax.random.normal(k2, (Cmid, Cmid, 3, 3), dtype=jnp.float32)
    bn_gamma = 1.0 + 0.1 * jax.random.normal(kg, (Cmid,), dtype=jnp.float32)
    bn_beta = 0.1 * jax.random.normal(kb, (Cmid,), dtype=jnp.float32)
    bn_mean = 0.1 * jax.random.normal(km, (Cmid,), dtype=jnp.float32)
    bn_var = 0.5 + jax.random.uniform(kv, (Cmid,), dtype=jnp.float32)

    fwd = jax.jit(bottleneck_forward)
    out = jax.block_until_ready(
        fwd(x, conv1_w, conv2_w, bn_gamma, bn_beta, bn_mean, bn_var))

    ref = reference_forward(x, conv1_w, conv2_w, bn_gamma, bn_beta, bn_mean, bn_var)
    assert out.shape == (B, Cmid, H // 2, W // 2)
    # Tolerance accommodates MXU f32 multi-pass matmul numerics vs the
    # HIGHEST-precision XLA convolution reference.
    assert jnp.allclose(out, ref, atol=1e-2, rtol=1e-2), "mismatch vs reference"
    print("KERNEL_OK")
</pallas_src>

<mosaic_0001>
module attributes {stable_mosaic.version = 11 : i64} {
  func.func @bottleneck_kernel(%arg0: i32, %arg1: memref<1x8x2x10x32xf32, #tpu.memory_space<vmem>>, %arg2: memref<144x32xf32, #tpu.memory_space<vmem>>, %arg3: memref<288x32xf32, #tpu.memory_space<vmem>>, %arg4: memref<1x32xf32, #tpu.memory_space<vmem>>, %arg5: memref<1x32xf32, #tpu.memory_space<vmem>>, %arg6: memref<80x1xf32, #tpu.memory_space<vmem>>, %arg7: memref<1x80x32xf32, #tpu.memory_space<vmem>>, %arg8: memref<104x16xf32, #tpu.memory_space<vmem>>, %arg9: memref<104x32xf32, #tpu.memory_space<vmem>>) attributes {dimension_semantics = [#tpu.dimension_semantics<parallel>], iteration_bounds = array<i64: 2>, scalar_prefetch = 0 : i64, scratch_operands = 2 : i64, tpu.core_type = #tpu.core_type<tc>, window_params = [{transform_indices = @transform_0, window_bounds = array<i64: 1, 8, 2, 10, 32>}, {pipeline_mode = #tpu.pipeline_mode<synchronous>, transform_indices = @transform_1, window_bounds = array<i64: 144, 32>}, {pipeline_mode = #tpu.pipeline_mode<synchronous>, transform_indices = @transform_2, window_bounds = array<i64: 288, 32>}, {pipeline_mode = #tpu.pipeline_mode<synchronous>, transform_indices = @transform_3, window_bounds = array<i64: 1, 32>}, {pipeline_mode = #tpu.pipeline_mode<synchronous>, transform_indices = @transform_4, window_bounds = array<i64: 1, 32>}, {pipeline_mode = #tpu.pipeline_mode<synchronous>, transform_indices = @transform_5, window_bounds = array<i64: 80, 1>}, {transform_indices = @transform_6, window_bounds = array<i64: 1, 80, 32>}]} {
    %cst = arith.constant 0.000000e+00 : f32
    %0 = vector.broadcast %cst : f32 to vector<11x16xf32>
    %c0 = arith.constant 0 : index
    %c0_0 = arith.constant 0 : index
    %1 = vector.load %arg8[%c0, %c0_0] : memref<104x16xf32, #tpu.memory_space<vmem>>, vector<11x16xf32>
    tpu.vector_store %arg8[%c0, %c0_0], %0 {strides = array<i32>} : memref<104x16xf32, #tpu.memory_space<vmem>>, vector<11x16xf32>,
    %cst_1 = arith.constant 0.000000e+00 : f32
    %2 = vector.broadcast %cst_1 : f32 to vector<11x32xf32>
    %c0_2 = arith.constant 0 : index
    %c0_3 = arith.constant 0 : index
    %3 = vector.load %arg9[%c0_2, %c0_3] : memref<104x32xf32, #tpu.memory_space<vmem>>, vector<11x32xf32>
    tpu.vector_store %arg9[%c0_2, %c0_3], %2 {strides = array<i32>} : memref<104x32xf32, #tpu.memory_space<vmem>>, vector<11x32xf32>,
    %cst_4 = arith.constant 0.000000e+00 : f32
    %4 = vector.broadcast %cst_4 : f32 to vector<13x16xf32>
    %c91 = arith.constant 91 : index
    %c0_5 = arith.constant 0 : index
    %5 = vector.load %arg8[%c91, %c0_5] : memref<104x16xf32, #tpu.memory_space<vmem>>, vector<13x16xf32>
    tpu.vector_store %arg8[%c91, %c0_5], %4 {strides = array<i32>} : memref<104x16xf32, #tpu.memory_space<vmem>>, vector<13x16xf32>,
    %cst_6 = arith.constant 0.000000e+00 : f32
    %6 = vector.broadcast %cst_6 : f32 to vector<13x32xf32>
    %c91_7 = arith.constant 91 : index
    %c0_8 = arith.constant 0 : index
    %7 = vector.load %arg9[%c91_7, %c0_8] : memref<104x32xf32, #tpu.memory_space<vmem>>, vector<13x32xf32>
    tpu.vector_store %arg9[%c91_7, %c0_8], %6 {strides = array<i32>} : memref<104x32xf32, #tpu.memory_space<vmem>>, vector<13x32xf32>,
    %c0_9 = arith.constant 0 : index
    %c0_10 = arith.constant 0 : index
    %c0_11 = arith.constant 0 : index
    %c0_12 = arith.constant 0 : index
    %c0_13 = arith.constant 0 : index
    %8 = vector.load %arg1[%c0_9, %c0_10, %c0_11, %c0_12, %c0_13] : memref<1x8x2x10x32xf32, #tpu.memory_space<vmem>>, vector<1x8x2x10x32xf32>
    %9 = vector.shape_cast %8 : vector<1x8x2x10x32xf32> to vector<8x2x10x32xf32>
    %10 = vector.extract_strided_slice %9 {offsets = [0, 0, 0, 0], sizes = [8, 1, 10, 32], strides = [1, 1, 1, 1]} : vector<8x2x10x32xf32> to vector<8x1x10x32xf32>
    %11 = vector.shape_cast %10 : vector<8x1x10x32xf32> to vector<8x10x32xf32>
    %12 = vector.extract_strided_slice %9 {offsets = [0, 1, 0, 0], sizes = [8, 1, 10, 32], strides = [1, 1, 1, 1]} : vector<8x2x10x32xf32> to vector<8x1x10x32xf32>
    %13 = vector.shape_cast %12 : vector<8x1x10x32xf32> to vector<8x10x32xf32>
    %14 = arith.maximumf %11, %13 : vector<8x10x32xf32>
    %15 = vector.extract_strided_slice %14 {offsets = [0, 0, 0], sizes = [8, 10, 16], strides = [1, 1, 1]} : vector<8x10x32xf32> to vector<8x10x16xf32>
    %16 = vector.extract_strided_slice %14 {offsets = [0, 0, 16], sizes = [8, 10, 16], strides = [1, 1, 1]} : vector<8x10x32xf32> to vector<8x10x16xf32>
    %17 = arith.maximumf %15, %16 : vector<8x10x16xf32>
    %18 = vector.extract_strided_slice %17 {offsets = [0, 0, 0], sizes = [1, 10, 16], strides = [1, 1, 1]} : vector<8x10x16xf32> to vector<1x10x16xf32>
    %19 = vector.shape_cast %18 : vector<1x10x16xf32> to vector<10x16xf32>
    %c11 = arith.constant 11 : index
    %c0_14 = arith.constant 0 : index
    %20 = vector.load %arg8[%c11, %c0_14] : memref<104x16xf32, #tpu.memory_space<vmem>>, vector<10x16xf32>
    tpu.vector_store %arg8[%c11, %c0_14], %19 {strides = array<i32>} : memref<104x16xf32, #tpu.memory_space<vmem>>, vector<10x16xf32>,
    %21 = vector.extract_strided_slice %17 {offsets = [1, 0, 0], sizes = [1, 10, 16], strides = [1, 1, 1]} : vector<8x10x16xf32> to vector<1x10x16xf32>
    %22 = vector.shape_cast %21 : vector<1x10x16xf32> to vector<10x16xf32>
    %c21 = arith.constant 21 : index
    %c0_15 = arith.constant 0 : index
    %23 = vector.load %arg8[%c21, %c0_15] : memref<104x16xf32, #tpu.memory_space<vmem>>, vector<10x16xf32>
    tpu.vector_store %arg8[%c21, %c0_15], %22 {strides = array<i32>} : memref<104x16xf32, #tpu.memory_space<vmem>>, vector<10x16xf32>,
    %24 = vector.extract_strided_slice %17 {offsets = [2, 0, 0], sizes = [1, 10, 16], strides = [1, 1, 1]} : vector<8x10x16xf32> to vector<1x10x16xf32>
    %25 = vector.shape_cast %24 : vector<1x10x16xf32> to vector<10x16xf32>
    %c31 = arith.constant 31 : index
    %c0_16 = arith.constant 0 : index
    %26 = vector.load %arg8[%c31, %c0_16] : memref<104x16xf32, #tpu.memory_space<vmem>>, vector<10x16xf32>
    tpu.vector_store %arg8[%c31, %c0_16], %25 {strides = array<i32>} : memref<104x16xf32, #tpu.memory_space<vmem>>, vector<10x16xf32>,
    %27 = vector.extract_strided_slice %17 {offsets = [3, 0, 0], sizes = [1, 10, 16], strides = [1, 1, 1]} : vector<8x10x16xf32> to vector<1x10x16xf32>
    %28 = vector.shape_cast %27 : vector<1x10x16xf32> to vector<10x16xf32>
    %c41 = arith.constant 41 : index
    %c0_17 = arith.constant 0 : index
    %29 = vector.load %arg8[%c41, %c0_17] : memref<104x16xf32, #tpu.memory_space<vmem>>, vector<10x16xf32>
    tpu.vector_store %arg8[%c41, %c0_17], %28 {strides = array<i32>} : memref<104x16xf32, #tpu.memory_space<vmem>>, vector<10x16xf32>,
    %30 = vector.extract_strided_slice %17 {offsets = [4, 0, 0], sizes = [1, 10, 16], strides = [1, 1, 1]} : vector<8x10x16xf32> to vector<1x10x16xf32>
    %31 = vector.shape_cast %30 : vector<1x10x16xf32> to vector<10x16xf32>
    %c51 = arith.constant 51 : index
    %c0_18 = arith.constant 0 : index
    %32 = vector.load %arg8[%c51, %c0_18] : memref<104x16xf32, #tpu.memory_space<vmem>>, vector<10x16xf32>
    tpu.vector_store %arg8[%c51, %c0_18], %31 {strides = array<i32>} : memref<104x16xf32, #tpu.memory_space<vmem>>, vector<10x16xf32>,
    %33 = vector.extract_strided_slice %17 {offsets = [5, 0, 0], sizes = [1, 10, 16], strides = [1, 1, 1]} : vector<8x10x16xf32> to vector<1x10x16xf32>
    %34 = vector.shape_cast %33 : vector<1x10x16xf32> to vector<10x16xf32>
    %c61 = arith.constant 61 : index
    %c0_19 = arith.constant 0 : index
    %35 = vector.load %arg8[%c61, %c0_19] : memref<104x16xf32, #tpu.memory_space<vmem>>, vector<10x16xf32>
    tpu.vector_store %arg8[%c61, %c0_19], %34 {strides = array<i32>} : memref<104x16xf32, #tpu.memory_space<vmem>>, vector<10x16xf32>,
    %36 = vector.extract_strided_slice %17 {offsets = [6, 0, 0], sizes = [1, 10, 16], strides = [1, 1, 1]} : vector<8x10x16xf32> to vector<1x10x16xf32>
    %37 = vector.shape_cast %36 : vector<1x10x16xf32> to vector<10x16xf32>
    %c71 = arith.constant 71 : index
    %c0_20 = arith.constant 0 : index
    %38 = vector.load %arg8[%c71, %c0_20] : memref<104x16xf32, #tpu.memory_space<vmem>>, vector<10x16xf32>
    tpu.vector_store %arg8[%c71, %c0_20], %37 {strides = array<i32>} : memref<104x16xf32, #tpu.memory_space<vmem>>, vector<10x16xf32>,
    %39 = vector.extract_strided_slice %17 {offsets = [7, 0, 0], sizes = [1, 10, 16], strides = [1, 1, 1]} : vector<8x10x16xf32> to vector<1x10x16xf32>
    %40 = vector.shape_cast %39 : vector<1x10x16xf32> to vector<10x16xf32>
    %c81 = arith.constant 81 : index
    %c0_21 = arith.constant 0 : index
    %41 = vector.load %arg8[%c81, %c0_21] : memref<104x16xf32, #tpu.memory_space<vmem>>, vector<10x16xf32>
    tpu.vector_store %arg8[%c81, %c0_21], %40 {strides = array<i32>} : memref<104x16xf32, #tpu.memory_space<vmem>>, vector<10x16xf32>,
    %cst_22 = arith.constant 0.000000e+00 : f32
    %42 = vector.broadcast %cst_22 : f32 to vector<80x32xf32>
    %c0_23 = arith.constant 0 : index
    %c0_24 = arith.constant 0 : index
    %43 = vector.load %arg8[%c0_23, %c0_24] : memref<104x16xf32, #tpu.memory_space<vmem>>, vector<80x16xf32>
    %c0_25 = arith.constant 0 : index
    %c0_26 = arith.constant 0 : index
    %44 = vector.load %arg2[%c0_25, %c0_26] : memref<144x32xf32, #tpu.memory_space<vmem>>, vector<16x32xf32>
    %cst_27 = arith.constant dense<0.000000e+00> : vector<80x32xf32>
    %45 = tpu.matmul %43, %44, %cst_27 {dimension_numbers = #tpu.dot_dimension_numbers<[1], [0], [0], [1], [0, 0, 1, 1], [], []>} : vector<80x16xf32>, vector<16x32xf32>, vector<80x32xf32> -> vector<80x32xf32>
    %46 = arith.addf %42, %45 : vector<80x32xf32>
    %c1 = arith.constant 1 : index
    %c0_28 = arith.constant 0 : index
    %47 = vector.load %arg8[%c1, %c0_28] : memref<104x16xf32, #tpu.memory_space<vmem>>, vector<80x16xf32>
    %c16 = arith.constant 16 : index
    %c0_29 = arith.constant 0 : index
    %48 = vector.load %arg2[%c16, %c0_29] : memref<144x32xf32, #tpu.memory_space<vmem>>, vector<16x32xf32>
    %cst_30 = arith.constant dense<0.000000e+00> : vector<80x32xf32>
    %49 = tpu.matmul %47, %48, %cst_30 {dimension_numbers = #tpu.dot_dimension_numbers<[1], [0], [0], [1], [0, 0, 1, 1], [], []>} : vector<80x16xf32>, vector<16x32xf32>, vector<80x32xf32> -> vector<80x32xf32>
    %50 = arith.addf %46, %49 : vector<80x32xf32>
    %c2 = arith.constant 2 : index
    %c0_31 = arith.constant 0 : index
    %51 = vector.load %arg8[%c2, %c0_31] : memref<104x16xf32, #tpu.memory_space<vmem>>, vector<80x16xf32>
    %c32 = arith.constant 32 : index
    %c0_32 = arith.constant 0 : index
    %52 = vector.load %arg2[%c32, %c0_32] : memref<144x32xf32, #tpu.memory_space<vmem>>, vector<16x32xf32>
    %cst_33 = arith.constant dense<0.000000e+00> : vector<80x32xf32>
    %53 = tpu.matmul %51, %52, %cst_33 {dimension_numbers = #tpu.dot_dimension_numbers<[1], [0], [0], [1], [0, 0, 1, 1], [], []>} : vector<80x16xf32>, vector<16x32xf32>, vector<80x32xf32> -> vector<80x32xf32>
    %54 = arith.addf %50, %53 : vector<80x32xf32>
    %c10 = arith.constant 10 : index
    %c0_34 = arith.constant 0 : index
    %55 = vector.load %arg8[%c10, %c0_34] : memref<104x16xf32, #tpu.memory_space<vmem>>, vector<80x16xf32>
    %c48 = arith.constant 48 : index
    %c0_35 = arith.constant 0 : index
    %56 = vector.load %arg2[%c48, %c0_35] : memref<144x32xf32, #tpu.memory_space<vmem>>, vector<16x32xf32>
    %cst_36 = arith.constant dense<0.000000e+00> : vector<80x32xf32>
    %57 = tpu.matmul %55, %56, %cst_36 {dimension_numbers = #tpu.dot_dimension_numbers<[1], [0], [0], [1], [0, 0, 1, 1], [], []>} : vector<80x16xf32>, vector<16x32xf32>, vector<80x32xf32> -> vector<80x32xf32>
    %58 = arith.addf %54, %57 : vector<80x32xf32>
    %c11_37 = arith.constant 11 : index
    %c0_38 = arith.constant 0 : index
    %59 = vector.load %arg8[%c11_37, %c0_38] : memref<104x16xf32, #tpu.memory_space<vmem>>, vector<80x16xf32>
    %c64 = arith.constant 64 : index
    %c0_39 = arith.constant 0 : index
    %60 = vector.load %arg2[%c64, %c0_39] : memref<144x32xf32, #tpu.memory_space<vmem>>, vector<16x32xf32>
    %cst_40 = arith.constant dense<0.000000e+00> : vector<80x32xf32>
    %61 = tpu.matmul %59, %60, %cst_40 {dimension_numbers = #tpu.dot_dimension_numbers<[1], [0], [0], [1], [0, 0, 1, 1], [], []>} : vector<80x16xf32>, vector<16x32xf32>, vector<80x32xf32> -> vector<80x32xf32>
    %62 = arith.addf %58, %61 : vector<80x32xf32>
    %c12 = arith.constant 12 : index
    %c0_41 = arith.constant 0 : index
    %63 = vector.load %arg8[%c12, %c0_41] : memref<104x16xf32, #tpu.memory_space<vmem>>, vector<80x16xf32>
    %c80 = arith.constant 80 : index
    %c0_42 = arith.constant 0 : index
    %64 = vector.load %arg2[%c80, %c0_42] : memref<144x32xf32, #tpu.memory_space<vmem>>, vector<16x32xf32>
    %cst_43 = arith.constant dense<0.000000e+00> : vector<80x32xf32>
    %65 = tpu.matmul %63, %64, %cst_43 {dimension_numbers = #tpu.dot_dimension_numbers<[1], [0], [0], [1], [0, 0, 1, 1], [], []>} : vector<80x16xf32>, vector<16x32xf32>, vector<80x32xf32> -> vector<80x32xf32>
    %66 = arith.addf %62, %65 : vector<80x32xf32>
    %c20 = arith.constant 20 : index
    %c0_44 = arith.constant 0 : index
    %67 = vector.load %arg8[%c20, %c0_44] : memref<104x16xf32, #tpu.memory_space<vmem>>, vector<80x16xf32>
    %c96 = arith.constant 96 : index
    %c0_45 = arith.constant 0 : index
    %68 = vector.load %arg2[%c96, %c0_45] : memref<144x32xf32, #tpu.memory_space<vmem>>, vector<16x32xf32>
    %cst_46 = arith.constant dense<0.000000e+00> : vector<80x32xf32>
    %69 = tpu.matmul %67, %68, %cst_46 {dimension_numbers = #tpu.dot_dimension_numbers<[1], [0], [0], [1], [0, 0, 1, 1], [], []>} : vector<80x16xf32>, vector<16x32xf32>, vector<80x32xf32> -> vector<80x32xf32>
    %70 = arith.addf %66, %69 : vector<80x32xf32>
    %c21_47 = arith.constant 21 : index
    %c0_48 = arith.constant 0 : index
    %71 = vector.load %arg8[%c21_47, %c0_48] : memref<104x16xf32, #tpu.memory_space<vmem>>, vector<80x16xf32>
    %c112 = arith.constant 112 : index
    %c0_49 = arith.constant 0 : index
    %72 = vector.load %arg2[%c112, %c0_49] : memref<144x32xf32, #tpu.memory_space<vmem>>, vector<16x32xf32>
    %cst_50 = arith.constant dense<0.000000e+00> : vector<80x32xf32>
    %73 = tpu.matmul %71, %72, %cst_50 {dimension_numbers = #tpu.dot_dimension_numbers<[1], [0], [0], [1], [0, 0, 1, 1], [], []>} : vector<80x16xf32>, vector<16x32xf32>, vector<80x32xf32> -> vector<80x32xf32>
    %74 = arith.addf %70, %73 : vector<80x32xf32>
    %c22 = arith.constant 22 : index
    %c0_51 = arith.constant 0 : index
    %75 = vector.load %arg8[%c22, %c0_51] : memref<104x16xf32, #tpu.memory_space<vmem>>, vector<80x16xf32>
    %c128 = arith.constant 128 : index
    %c0_52 = arith.constant 0 : index
    %76 = vector.load %arg2[%c128, %c0_52] : memref<144x32xf32, #tpu.memory_space<vmem>>, vector<16x32xf32>
    %cst_53 = arith.constant dense<0.000000e+00> : vector<80x32xf32>
    %77 = tpu.matmul %75, %76, %cst_53 {dimension_numbers = #tpu.dot_dimension_numbers<[1], [0], [0], [1], [0, 0, 1, 1], [], []>} : vector<80x16xf32>, vector<16x32xf32>, vector<80x32xf32> -> vector<80x32xf32>
    %78 = arith.addf %74, %77 : vector<80x32xf32>
    %c0_54 = arith.constant 0 : index
    %c0_55 = arith.constant 0 : index
    %79 = vector.load %arg4[%c0_54, %c0_55] : memref<1x32xf32, #tpu.memory_space<vmem>>, vector<1x32xf32>
    %80 = vector.broadcast %79 : vector<1x32xf32> to vector<80x32xf32>
    %81 = arith.mulf %78, %80 : vector<80x32xf32>
    %c0_56 = arith.constant 0 : index
    %c0_57 = arith.constant 0 : index
    %82 = vector.load %arg5[%c0_56, %c0_57] : memref<1x32xf32, #tpu.memory_space<vmem>>, vector<1x32xf32>
    %83 = vector.broadcast %82 : vector<1x32xf32> to vector<80x32xf32>
    %84 = arith.addf %81, %83 : vector<80x32xf32>
    %cst_58 = arith.constant 0.000000e+00 : f32
    %85 = vector.broadcast %cst_58 : f32 to vector<80x32xf32>
    %86 = arith.maximumf %84, %85 : vector<80x32xf32>
    %c0_59 = arith.constant 0 : index
    %c0_60 = arith.constant 0 : index
    %87 = vector.load %arg6[%c0_59, %c0_60] : memref<80x1xf32, #tpu.memory_space<vmem>>, vector<80x1xf32>
    %88 = vector.broadcast %87 : vector<80x1xf32> to vector<80x32xf32>
    %89 = arith.mulf %86, %88 : vector<80x32xf32>
    %c11_61 = arith.constant 11 : index
    %c0_62 = arith.constant 0 : index
    %90 = vector.load %arg9[%c11_61, %c0_62] : memref<104x32xf32, #tpu.memory_space<vmem>>, vector<80x32xf32>
    tpu.vector_store %arg9[%c11_61, %c0_62], %89 {strides = array<i32>} : memref<104x32xf32, #tpu.memory_space<vmem>>, vector<80x32xf32>,
    %cst_63 = arith.constant 0.000000e+00 : f32
    %91 = vector.broadcast %cst_63 : f32 to vector<80x32xf32>
    %c0_64 = arith.constant 0 : index
    %c0_65 = arith.constant 0 : index
    %92 = vector.load %arg9[%c0_64, %c0_65] : memref<104x32xf32, #tpu.memory_space<vmem>>, vector<80x32xf32>
    %c0_66 = arith.constant 0 : index
    %c0_67 = arith.constant 0 : index
    %93 = vector.load %arg3[%c0_66, %c0_67] : memref<288x32xf32, #tpu.memory_space<vmem>>, vector<32x32xf32>
    %cst_68 = arith.constant dense<0.000000e+00> : vector<80x32xf32>
    %94 = tpu.matmul %92, %93, %cst_68 {dimension_numbers = #tpu.dot_dimension_numbers<[1], [0], [0], [1], [0, 0, 1, 1], [], []>} : vector<80x32xf32>, vector<32x32xf32>, vector<80x32xf32> -> vector<80x32xf32>
    %95 = arith.addf %91, %94 : vector<80x32xf32>
    %c1_69 = arith.constant 1 : index
    %c0_70 = arith.constant 0 : index
    %96 = vector.load %arg9[%c1_69, %c0_70] : memref<104x32xf32, #tpu.memory_space<vmem>>, vector<80x32xf32>
    %c32_71 = arith.constant 32 : index
    %c0_72 = arith.constant 0 : index
    %97 = vector.load %arg3[%c32_71, %c0_72] : memref<288x32xf32, #tpu.memory_space<vmem>>, vector<32x32xf32>
    %cst_73 = arith.constant dense<0.000000e+00> : vector<80x32xf32>
    %98 = tpu.matmul %96, %97, %cst_73 {dimension_numbers = #tpu.dot_dimension_numbers<[1], [0], [0], [1], [0, 0, 1, 1], [], []>} : vector<80x32xf32>, vector<32x32xf32>, vector<80x32xf32> -> vector<80x32xf32>
    %99 = arith.addf %95, %98 : vector<80x32xf32>
    %c2_74 = arith.constant 2 : index
    %c0_75 = arith.constant 0 : index
    %100 = vector.load %arg9[%c2_74, %c0_75] : memref<104x32xf32, #tpu.memory_space<vmem>>, vector<80x32xf32>
    %c64_76 = arith.constant 64 : index
    %c0_77 = arith.constant 0 : index
    %101 = vector.load %arg3[%c64_76, %c0_77] : memref<288x32xf32, #tpu.memory_space<vmem>>, vector<32x32xf32>
    %cst_78 = arith.constant dense<0.000000e+00> : vector<80x32xf32>
    %102 = tpu.matmul %100, %101, %cst_78 {dimension_numbers = #tpu.dot_dimension_numbers<[1], [0], [0], [1], [0, 0, 1, 1], [], []>} : vector<80x32xf32>, vector<32x32xf32>, vector<80x32xf32> -> vector<80x32xf32>
    %103 = arith.addf %99, %102 : vector<80x32xf32>
    %c10_79 = arith.constant 10 : index
    %c0_80 = arith.constant 0 : index
    %104 = vector.load %arg9[%c10_79, %c0_80] : memref<104x32xf32, #tpu.memory_space<vmem>>, vector<80x32xf32>
    %c96_81 = arith.constant 96 : index
    %c0_82 = arith.constant 0 : index
    %105 = vector.load %arg3[%c96_81, %c0_82] : memref<288x32xf32, #tpu.memory_space<vmem>>, vector<32x32xf32>
    %cst_83 = arith.constant dense<0.000000e+00> : vector<80x32xf32>
    %106 = tpu.matmul %104, %105, %cst_83 {dimension_numbers = #tpu.dot_dimension_numbers<[1], [0], [0], [1], [0, 0, 1, 1], [], []>} : vector<80x32xf32>, vector<32x32xf32>, vector<80x32xf32> -> vector<80x32xf32>
    %107 = arith.addf %103, %106 : vector<80x32xf32>
    %c11_84 = arith.constant 11 : index
    %c0_85 = arith.constant 0 : index
    %108 = vector.load %arg9[%c11_84, %c0_85] : memref<104x32xf32, #tpu.memory_space<vmem>>, vector<80x32xf32>
    %c128_86 = arith.constant 128 : index
    %c0_87 = arith.constant 0 : index
    %109 = vector.load %arg3[%c128_86, %c0_87] : memref<288x32xf32, #tpu.memory_space<vmem>>, vector<32x32xf32>
    %cst_88 = arith.constant dense<0.000000e+00> : vector<80x32xf32>
    %110 = tpu.matmul %108, %109, %cst_88 {dimension_numbers = #tpu.dot_dimension_numbers<[1], [0], [0], [1], [0, 0, 1, 1], [], []>} : vector<80x32xf32>, vector<32x32xf32>, vector<80x32xf32> -> vector<80x32xf32>
    %111 = arith.addf %107, %110 : vector<80x32xf32>
    %c12_89 = arith.constant 12 : index
    %c0_90 = arith.constant 0 : index
    %112 = vector.load %arg9[%c12_89, %c0_90] : memref<104x32xf32, #tpu.memory_space<vmem>>, vector<80x32xf32>
    %c160 = arith.constant 160 : index
    %c0_91 = arith.constant 0 : index
    %113 = vector.load %arg3[%c160, %c0_91] : memref<288x32xf32, #tpu.memory_space<vmem>>, vector<32x32xf32>
    %cst_92 = arith.constant dense<0.000000e+00> : vector<80x32xf32>
    %114 = tpu.matmul %112, %113, %cst_92 {dimension_numbers = #tpu.dot_dimension_numbers<[1], [0], [0], [1], [0, 0, 1, 1], [], []>} : vector<80x32xf32>, vector<32x32xf32>, vector<80x32xf32> -> vector<80x32xf32>
    %115 = arith.addf %111, %114 : vector<80x32xf32>
    %c20_93 = arith.constant 20 : index
    %c0_94 = arith.constant 0 : index
    %116 = vector.load %arg9[%c20_93, %c0_94] : memref<104x32xf32, #tpu.memory_space<vmem>>, vector<80x32xf32>
    %c192 = arith.constant 192 : index
    %c0_95 = arith.constant 0 : index
    %117 = vector.load %arg3[%c192, %c0_95] : memref<288x32xf32, #tpu.memory_space<vmem>>, vector<32x32xf32>
    %cst_96 = arith.constant dense<0.000000e+00> : vector<80x32xf32>
    %118 = tpu.matmul %116, %117, %cst_96 {dimension_numbers = #tpu.dot_dimension_numbers<[1], [0], [0], [1], [0, 0, 1, 1], [], []>} : vector<80x32xf32>, vector<32x32xf32>, vector<80x32xf32> -> vector<80x32xf32>
    %119 = arith.addf %115, %118 : vector<80x32xf32>
    %c21_97 = arith.constant 21 : index
    %c0_98 = arith.constant 0 : index
    %120 = vector.load %arg9[%c21_97, %c0_98] : memref<104x32xf32, #tpu.memory_space<vmem>>, vector<80x32xf32>
    %c224 = arith.constant 224 : index
    %c0_99 = arith.constant 0 : index
    %121 = vector.load %arg3[%c224, %c0_99] : memref<288x32xf32, #tpu.memory_space<vmem>>, vector<32x32xf32>
    %cst_100 = arith.constant dense<0.000000e+00> : vector<80x32xf32>
    %122 = tpu.matmul %120, %121, %cst_100 {dimension_numbers = #tpu.dot_dimension_numbers<[1], [0], [0], [1], [0, 0, 1, 1], [], []>} : vector<80x32xf32>, vector<32x32xf32>, vector<80x32xf32> -> vector<80x32xf32>
    %123 = arith.addf %119, %122 : vector<80x32xf32>
    %c22_101 = arith.constant 22 : index
    %c0_102 = arith.constant 0 : index
    %124 = vector.load %arg9[%c22_101, %c0_102] : memref<104x32xf32, #tpu.memory_space<vmem>>, vector<80x32xf32>
    %c256 = arith.constant 256 : index
    %c0_103 = arith.constant 0 : index
    %125 = vector.load %arg3[%c256, %c0_103] : memref<288x32xf32, #tpu.memory_space<vmem>>, vector<32x32xf32>
    %cst_104 = arith.constant dense<0.000000e+00> : vector<80x32xf32>
    %126 = tpu.matmul %124, %125, %cst_104 {dimension_numbers = #tpu.dot_dimension_numbers<[1], [0], [0], [1], [0, 0, 1, 1], [], []>} : vector<80x32xf32>, vector<32x32xf32>, vector<80x32xf32> -> vector<80x32xf32>
    %127 = arith.addf %123, %126 : vector<80x32xf32>
    %c0_105 = arith.constant 0 : index
    %c0_106 = arith.constant 0 : index
    %c0_107 = arith.constant 0 : index
    %128 = vector.load %arg7[%c0_105, %c0_106, %c0_107] : memref<1x80x32xf32, #tpu.memory_space<vmem>>, vector<1x80x32xf32>
    %129 = vector.shape_cast %128 : vector<1x80x32xf32> to vector<80x32xf32>
    %130 = vector.shape_cast %127 : vector<80x32xf32> to vector<1x80x32xf32>
    tpu.vector_store %arg7[%c0_105, %c0_106, %c0_107], %130 {strides = array<i32>} : memref<1x80x32xf32, #tpu.memory_space<vmem>>, vector<1x80x32xf32>,
    return
  }
  func.func @transform_0(%arg0: i32) -> (i32, i32, i32, i32, i32) {
    %c0_i32 = arith.constant 0 : i32
    %c0_i32_0 = arith.constant 0 : i32
    %c0_i32_1 = arith.constant 0 : i32
    %c0_i32_2 = arith.constant 0 : i32
    %c0_i32_3 = arith.constant 0 : i32
    return %arg0, %c0_i32, %c0_i32_0, %c0_i32_1, %c0_i32_2 : i32, i32, i32, i32, i32
  }
  func.func @transform_1(%arg0: i32) -> (i32, i32) {
    %c0_i32 = arith.constant 0 : i32
    %c0_i32_0 = arith.constant 0 : i32
    %c0_i32_1 = arith.constant 0 : i32
    return %c0_i32, %c0_i32_0 : i32, i32
  }
  func.func @transform_2(%arg0: i32) -> (i32, i32) {
    %c0_i32 = arith.constant 0 : i32
    %c0_i32_0 = arith.constant 0 : i32
    %c0_i32_1 = arith.constant 0 : i32
    return %c0_i32, %c0_i32_0 : i32, i32
  }
  func.func @transform_3(%arg0: i32) -> (i32, i32) {
    %c0_i32 = arith.constant 0 : i32
    %c0_i32_0 = arith.constant 0 : i32
    %c0_i32_1 = arith.constant 0 : i32
    return %c0_i32, %c0_i32_0 : i32, i32
  }
  func.func @transform_4(%arg0: i32) -> (i32, i32) {
    %c0_i32 = arith.constant 0 : i32
    %c0_i32_0 = arith.constant 0 : i32
    %c0_i32_1 = arith.constant 0 : i32
    return %c0_i32, %c0_i32_0 : i32, i32
  }
  func.func @transform_5(%arg0: i32) -> (i32, i32) {
    %c0_i32 = arith.constant 0 : i32
    %c0_i32_0 = arith.constant 0 : i32
    %c0_i32_1 = arith.constant 0 : i32
    return %c0_i32, %c0_i32_0 : i32, i32
  }
  func.func @transform_6(%arg0: i32) -> (i32, i32, i32) {
    %c0_i32 = arith.constant 0 : i32
    %c0_i32_0 = arith.constant 0 : i32
    %c0_i32_1 = arith.constant 0 : i32
    return %arg0, %c0_i32, %c0_i32_0 : i32, i32, i32
  }
}

</mosaic_0001>

<llo_original>
// kernel: bottleneck_forward.1
$region0: #{bottleneck_forward.1}
  #allocation0 [shape = 'u32[]', space=smem, size = 0x4, offset = 0x4, fixed_abs, tag = 'smem constant byte address 0x4 - core index']
  #allocation1 [shape = 'u32[144,128]{1,0:T(1,128)}', space=vmem, size = 0x12000, scoped, tag = 'internal scratch']
  #allocation2 [shape = 'f32[104,16]{1,0:T(8,128)}', space=vmem, size = 0xd000, scoped, tag = 'scratch operand']
  #allocation3 [shape = 'f32[104,32]{1,0:T(8,128)}', space=vmem, size = 0xd000, scoped, tag = 'scratch operand']
  %s0 = inlined_call_operand.vmem [shape: f32[2,8,2,10,32], index: 0, kind: input, shape index: {}]
  %s1 = inlined_call_operand.vmem [shape: f32[144,32], index: 1, kind: input, shape index: {}]
  %s2 = inlined_call_operand.vmem [shape: f32[288,32], index: 2, kind: input, shape index: {}]
  %s3 = inlined_call_operand.vmem [shape: f32[1,32], index: 3, kind: input, shape index: {}]
  %s4 = inlined_call_operand.vmem [shape: f32[1,32], index: 4, kind: input, shape index: {}]
  %s5 = inlined_call_operand.vmem [shape: f32[80,1], index: 5, kind: input, shape index: {}]
  %s6 = inlined_call_operand.vmem [shape: f32[2,80,32], index: 6, kind: output, shape index: {}]
  %s7 = sld [smem:[#allocation0]]
  $region57: #{bottleneck_forward.1} parent=0
    _
  %s9 = ssub.s32 1, %s7
  %s10 = scalar_select 0, %s9, %s7
  loop: start=0, step=1, limit=4
  $region2: #{bottleneck_forward.1} parent=0 // loop_pre_header
    _
  $region3: #{bottleneck_forward.1} parent=0 // loop_header
    %s12 = sphi 0, %s16
    %p13 = scmp.ge.s32.totalorder %s12, 4
    %s22 = sphi 0, %s24
    %s25 = sphi 0, %s22
    %s26 = sphi 0, %s25
    %s42 = sphi 0, %s26
    %s46 = sphi 0, %s46
    %s48 = sphi 0, %s46
    %s49 = sphi 0, %s48
    %s63 = sphi 0, %s49
    %s67 = sphi 0, %s67
    %s69 = sphi 0, %s67
    %s70 = sphi 0, %s69
    %s84 = sphi 0, %s70
    %s88 = sphi 0, %s88
    %s90 = sphi 0, %s88
    %s91 = sphi 0, %s90
    %s105 = sphi 0, %s91
    %s109 = sphi 0, %s109
    %s111 = sphi 0, %s109
    %s112 = sphi 0, %s111
    %s126 = sphi 0, %s112
    %s130 = sphi 0, %s130
    %s132 = sphi 0, %s130
    %s133 = sphi 0, %s132
    %s147 = sphi 0, %s133
    %s153 = sphi 0, %s155
    %s156 = sphi 0, %s153
    %s157 = sphi 0, %s156
    %s173 = sphi 0, %s157
  $region4: #{bottleneck_forward.1} parent=0 // loop_header_branch
    %15 = sbr.rel (%p13) target = $region8
  $region5: #{bottleneck_forward.1} parent=0 // loop_body
    %s17 = ssub.s32 %s12, 1
    %s18 = ssub.s32 %s12, 2
    %s19 = sadd.s32 %s12, 1
    %s20 = ssub.s32 %s12, %s19
    %p21 = scmp.eq.s32.totalorder %s20, 0
    %s23 = sadd.s32 %s22, 1
    %s24 = scalar_select %p21, %s22, %s23
    %p27 = pneg %p21
    %p28 = scmp.eq.s32.totalorder %s12, 1
    %p29 = por %p27, %p28
    %p30 = scmp.ne.s32.totalorder %s22, %s25
    %p31 = scmp.eq.s32.totalorder %s12, 0
    %p32 = por %p30, %p31
    %p33 = scmp.ne.s32.totalorder %s22, %s25
    %p34 = scmp.eq.s32.totalorder %s17, 1
    %p35 = por %p33, %p34
    %p36 = scmp.ne.s32.totalorder %s25, %s26
    %p37 = scmp.eq.s32.totalorder %s17, 0
    %p38 = por %p36, %p37
    %p39 = scmp.ne.s32.totalorder %s25, %s26
    %p40 = scmp.eq.s32.totalorder %s18, 1
    %p41 = por %p39, %p40
    %p43 = scmp.ne.s32.totalorder %s26, %s42
    %p44 = scmp.eq.s32.totalorder %s18, 0
    %p45 = por %p43, %p44
    %s47 = sadd.s32 %s46, 1
    %p50 = scmp.eq.s32.totalorder %s12, 1
    %p51 = scmp.ne.s32.totalorder %s46, %s48
    %p52 = scmp.eq.s32.totalorder %s12, 0
    %p53 = por %p51, %p52
    %p54 = scmp.ne.s32.totalorder %s46, %s48
    %p55 = scmp.eq.s32.totalorder %s17, 1
    %p56 = por %p54, %p55
    %p57 = scmp.ne.s32.totalorder %s48, %s49
    %p58 = scmp.eq.s32.totalorder %s17, 0
    %p59 = por %p57, %p58
    %p60 = scmp.ne.s32.totalorder %s48, %s49
    %p61 = scmp.eq.s32.totalorder %s18, 1
    %p62 = por %p60, %p61
    %p64 = scmp.ne.s32.totalorder %s49, %s63
    %p65 = scmp.eq.s32.totalorder %s18, 0
    %p66 = por %p64, %p65
    %s68 = sadd.s32 %s67, 1
    %p71 = scmp.eq.s32.totalorder %s12, 1
    %p72 = scmp.ne.s32.totalorder %s67, %s69
    %p73 = scmp.eq.s32.totalorder %s12, 0
    %p74 = por %p72, %p73
    %p75 = scmp.ne.s32.totalorder %s67, %s69
    %p76 = scmp.eq.s32.totalorder %s17, 1
    %p77 = por %p75, %p76
    %p78 = scmp.ne.s32.totalorder %s69, %s70
    %p79 = scmp.eq.s32.totalorder %s17, 0
    %p80 = por %p78, %p79
    %p81 = scmp.ne.s32.totalorder %s69, %s70
    %p82 = scmp.eq.s32.totalorder %s18, 1
    %p83 = por %p81, %p82
    %p85 = scmp.ne.s32.totalorder %s70, %s84
    %p86 = scmp.eq.s32.totalorder %s18, 0
    %p87 = por %p85, %p86
    %s89 = sadd.s32 %s88, 1
    %p92 = scmp.eq.s32.totalorder %s12, 1
    %p93 = scmp.ne.s32.totalorder %s88, %s90
    %p94 = scmp.eq.s32.totalorder %s12, 0
    %p95 = por %p93, %p94
    %p96 = scmp.ne.s32.totalorder %s88, %s90
    %p97 = scmp.eq.s32.totalorder %s17, 1
    %p98 = por %p96, %p97
    %p99 = scmp.ne.s32.totalorder %s90, %s91
    %p100 = scmp.eq.s32.totalorder %s17, 0
    %p101 = por %p99, %p100
    %p102 = scmp.ne.s32.totalorder %s90, %s91
    %p103 = scmp.eq.s32.totalorder %s18, 1
    %p104 = por %p102, %p103
    %p106 = scmp.ne.s32.totalorder %s91, %s105
    %p107 = scmp.eq.s32.totalorder %s18, 0
    %p108 = por %p106, %p107
    %s110 = sadd.s32 %s109, 1
    %p113 = scmp.eq.s32.totalorder %s12, 1
    %p114 = scmp.ne.s32.totalorder %s109, %s111
    %p115 = scmp.eq.s32.totalorder %s12, 0
    %p116 = por %p114, %p115
    %p117 = scmp.ne.s32.totalorder %s109, %s111
    %p118 = scmp.eq.s32.totalorder %s17, 1
    %p119 = por %p117, %p118
    %p120 = scmp.ne.s32.totalorder %s111, %s112
    %p121 = scmp.eq.s32.totalorder %s17, 0
    %p122 = por %p120, %p121
    %p123 = scmp.ne.s32.totalorder %s111, %s112
    %p124 = scmp.eq.s32.totalorder %s18, 1
    %p125 = por %p123, %p124
    %p127 = scmp.ne.s32.totalorder %s112, %s126
    %p128 = scmp.eq.s32.totalorder %s18, 0
    %p129 = por %p127, %p128
    %s131 = sadd.s32 %s130, 1
    %p134 = scmp.eq.s32.totalorder %s12, 1
    %p135 = scmp.ne.s32.totalorder %s130, %s132
    %p136 = scmp.eq.s32.totalorder %s12, 0
    %p137 = por %p135, %p136
    %p138 = scmp.ne.s32.totalorder %s130, %s132
    %p139 = scmp.eq.s32.totalorder %s17, 1
    %p140 = por %p138, %p139
    %p141 = scmp.ne.s32.totalorder %s132, %s133
    %p142 = scmp.eq.s32.totalorder %s17, 0
    %p143 = por %p141, %p142
    %p144 = scmp.ne.s32.totalorder %s132, %s133
    %p145 = scmp.eq.s32.totalorder %s18, 1
    %p146 = por %p144, %p145
    %p148 = scmp.ne.s32.totalorder %s133, %s147
    %p149 = scmp.eq.s32.totalorder %s18, 0
    %p150 = por %p148, %p149
    %s151 = ssub.s32 %s12, %s19
    %p152 = scmp.eq.s32.totalorder %s151, 0
    %s154 = sadd.s32 %s153, 1
    %s155 = scalar_select %p152, %s153, %s154
    %p158 = pneg %p152
    %p159 = scmp.eq.s32.totalorder %s12, 1
    %p160 = por %p158, %p159
    %p161 = scmp.ne.s32.totalorder %s153, %s156
    %p162 = scmp.eq.s32.totalorder %s12, 0
    %p163 = por %p161, %p162
    %p164 = scmp.ne.s32.totalorder %s153, %s156
    %p165 = scmp.eq.s32.totalorder %s17, 1
    %p166 = por %p164, %p165
    %p167 = scmp.ne.s32.totalorder %s156, %s157
    %p168 = scmp.eq.s32.totalorder %s17, 0
    %p169 = por %p167, %p168
    %p170 = scmp.ne.s32.totalorder %s156, %s157
    %p171 = scmp.eq.s32.totalorder %s18, 1
    %p172 = por %p170, %p171
    %p174 = scmp.ne.s32.totalorder %s157, %s173
    %p175 = scmp.eq.s32.totalorder %s18, 0
    %p176 = por %p174, %p175
    %p177 = scmp.le.s32.totalorder 1, %s12
    %p178 = scmp.lt.s32.totalorder %s12, 3
    %p179 = pnand %p177, %p178
    %p180 = pneg %p179
    // Predicated region
    $region9: #{bottleneck_forward.1} parent=5 // pred_check
      _
    $region10: #{bottleneck_forward.1} parent=5 // pred_check_branch
      %182 = sbr.rel (%p179) target = $region12
    $region11: #{bottleneck_forward.1} parent=5 // pred_region
      %s183 = ssub.s32 %s12, 1
      // Predicated region
      $region13: #{bottleneck_forward.1} parent=11 // pred_check
        %p184 = pneg %p59
      $region14: #{bottleneck_forward.1} parent=11 // pred_check_branch
        %186 = sbr.rel (%p184) target = $region16
      $region15: #{bottleneck_forward.1} parent=11 // pred_region
        _
      $region16: #{bottleneck_forward.1} parent=11 // pred_fallthru
        _
      // Predicated region
      $region17: #{bottleneck_forward.1} parent=11 // pred_check
        %p187 = pneg %p80
      $region18: #{bottleneck_forward.1} parent=11 // pred_check_branch
        %189 = sbr.rel (%p187) target = $region20
      $region19: #{bottleneck_forward.1} parent=11 // pred_region
        _
      $region20: #{bottleneck_forward.1} parent=11 // pred_fallthru
        _
      // Predicated region
      $region21: #{bottleneck_forward.1} parent=11 // pred_check
        %p190 = pneg %p101
      $region22: #{bottleneck_forward.1} parent=11 // pred_check_branch
        %192 = sbr.rel (%p190) target = $region24
      $region23: #{bottleneck_forward.1} parent=11 // pred_region
        _
      $region24: #{bottleneck_forward.1} parent=11 // pred_fallthru
        _
      // Predicated region
      $region25: #{bottleneck_forward.1} parent=11 // pred_check
        %p193 = pneg %p122
      $region26: #{bottleneck_forward.1} parent=11 // pred_check_branch
        %195 = sbr.rel (%p193) target = $region28
      $region27: #{bottleneck_forward.1} parent=11 // pred_region
        _
      $region28: #{bottleneck_forward.1} parent=11 // pred_fallthru
        _
      // Predicated region
      $region29: #{bottleneck_forward.1} parent=11 // pred_check
        %p196 = pneg %p143
      $region30: #{bottleneck_forward.1} parent=11 // pred_check_branch
        %198 = sbr.rel (%p196) target = $region32
      $region31: #{bottleneck_forward.1} parent=11 // pred_region
        _
      $region32: #{bottleneck_forward.1} parent=11 // pred_fallthru
        _
    $region12: #{bottleneck_forward.1} parent=5 // pred_fallthru
      _
    %p199 = scmp.lt.s32.totalorder %s12, 2
    // Predicated region
    $region33: #{bottleneck_forward.1} parent=5 // pred_check
      %p200 = pneg %p199
    $region34: #{bottleneck_forward.1} parent=5 // pred_check_branch
      %202 = sbr.rel (%p200) target = $region36
    $region35: #{bottleneck_forward.1} parent=5 // pred_region
      // Predicated region
      $region37: #{bottleneck_forward.1} parent=35 // pred_check
        %p203 = pneg %p32
      $region38: #{bottleneck_forward.1} parent=35 // pred_check_branch
        %205 = sbr.rel (%p203) target = $region40
      $region39: #{bottleneck_forward.1} parent=35 // pred_region
        %p206 = scmp.lt.s32.totalorder %s12, 1
        %s207 = scalar_select %p206, %s12, 1
        %s208 = smul.addr %s207, 32
        %s209 = smul.addr %s208, 8
        %s210 = scalar_lea.vmem %s0, %s209
      $region40: #{bottleneck_forward.1} parent=35 // pred_fallthru
        _
    $region36: #{bottleneck_forward.1} parent=5 // pred_fallthru
      _
    %p211 = scmp.le.s32.totalorder 1, %s12
    %p212 = scmp.lt.s32.totalorder %s12, 3
    %p213 = pnand %p211, %p212
    %p214 = pneg %p213
    // Predicated region
    $region41: #{bottleneck_forward.1} parent=5 // pred_check
      _
    $region42: #{bottleneck_forward.1} parent=5 // pred_check_branch
      %216 = sbr.rel (%p213) target = $region44
    $region43: #{bottleneck_forward.1} parent=5 // pred_region
      %s217 = ssub.s32 %s12, 1
      %p218 = scmp.lt.s32.totalorder %s17, 1
      %s219 = scalar_select %p218, %s17, 1
      %s220 = smul.addr %s219, 32
      %s221 = smul.addr %s220, 8
      %s222 = scalar_lea.vmem %s0, %s221
      %p223 = pneg %p38
      %p224 = pneg %p35
      %p225 = pneg %p59
      %p226 = pneg %p56
      %p227 = pneg %p80
      %p228 = pneg %p77
      %p229 = pneg %p101
      %p230 = pneg %p98
      %p231 = pneg %p122
      %p232 = pneg %p119
      %p233 = pneg %p143
      %p234 = pneg %p140
      %p235 = pneg %p169
      %p236 = pneg %p166
      %p237 = scmp.lt.s32.totalorder %s17, 1
      %s238 = scalar_select %p237, %s17, 1
      %s239 = smul.addr %s238, 10
      %s240 = smul.addr %s239, 8
      %s241 = scalar_lea.vmem %s6, %s240
      %p242 = scmp.lt.s32.totalorder %s17, 1
      %s243 = scalar_select %p242, %s17, 1
      %s244 = smul.addr %s243, 32
      %s245 = smul.addr %s244, 8
      %s246 = scalar_lea.vmem %s0, %s245
      %p247 = scmp.lt.s32.totalorder %s17, 1
      %s248 = scalar_select %p247, %s17, 1
      %s249 = smul.addr %s248, 10
      %s250 = smul.addr %s249, 8
      %s251 = scalar_lea.vmem %s6, %s250
      %vm252 = vcmask 130048
      %253 = vst.msk [vmem:[#allocation2] sm:$0xff] %vm252, 0.0
      %vm254 = vcmask 124928
      %255 = vst.msk [vmem:[#allocation2 + $0x8] sm:$0x7] %vm254, 0.0
      %vm256 = vcmask 261120
      %257 = vst.msk [vmem:[#allocation3] sm:$0xff] %vm256, 0.0
      %vm258 = vcmask 256000
      %259 = vst.msk [vmem:[#allocation3 + $0x8] sm:$0x7] %vm258, 0.0
      %260 = vst.msk [vmem:[#allocation2 + $0x5b] sm:$0xff] %vm252, 0.0
      %vm261 = vcmask 126976
      %262 = vst.msk [vmem:[#allocation2 + $0x63] sm:$0x1f] %vm261, 0.0
      %263 = vst.msk [vmem:[#allocation3 + $0x5b] sm:$0xff] %vm256, 0.0
      %vm264 = vcmask 258048
      %265 = vst.msk [vmem:[#allocation3 + $0x63] sm:$0x1f] %vm264, 0.0
      %v266 = vld [vmem:[%s246] sm:$0xff]
      %v267 = vld [vmem:[%s246 + $0x8] sm:$0x3]
      %v268 = vld [vmem:[%s246 + $0x10] sm:$0xff]
      %v269 = vld [vmem:[%s246 + $0x18] sm:$0x3]
      %v270 = vld [vmem:[%s246 + $0x20] sm:$0xff]
      %v271 = vld [vmem:[%s246 + $0x28] sm:$0x3]
      %v272 = vld [vmem:[%s246 + $0x30] sm:$0xff]
      %v273 = vld [vmem:[%s246 + $0x38] sm:$0x3]
      %v274 = vld [vmem:[%s246 + $0x40] sm:$0xff]
      %v275 = vld [vmem:[%s246 + $0x48] sm:$0x3]
      %v276 = vld [vmem:[%s246 + $0x50] sm:$0xff]
      %v277 = vld [vmem:[%s246 + $0x58] sm:$0x3]
      %v278 = vld [vmem:[%s246 + $0x60] sm:$0xff]
      %v279 = vld [vmem:[%s246 + $0x68] sm:$0x3]
      %v280 = vld [vmem:[%s246 + $0x70] sm:$0xff]
      %v281 = vld [vmem:[%s246 + $0x78] sm:$0x3]
      %v282 = vld [vmem:[%s246 + $0x80] sm:$0xff]
      %v283 = vld [vmem:[%s246 + $0x88] sm:$0x3]
      %v284 = vld [vmem:[%s246 + $0x90] sm:$0xff]
      %v285 = vld [vmem:[%s246 + $0x98] sm:$0x3]
      %v286 = vld [vmem:[%s246 + $0xa0] sm:$0xff]
      %v287 = vld [vmem:[%s246 + $0xa8] sm:$0x3]
      %v288 = vld [vmem:[%s246 + $0xb0] sm:$0xff]
      %v289 = vld [vmem:[%s246 + $0xb8] sm:$0x3]
      %v290 = vld [vmem:[%s246 + $0xc0] sm:$0xff]
      %v291 = vld [vmem:[%s246 + $0xc8] sm:$0x3]
      %v292 = vld [vmem:[%s246 + $0xd0] sm:$0xff]
      %v293 = vld [vmem:[%s246 + $0xd8] sm:$0x3]
      %v294 = vld [vmem:[%s246 + $0xe0] sm:$0xff]
      %v295 = vld [vmem:[%s246 + $0xe8] sm:$0x3]
      %v296 = vld [vmem:[%s246 + $0xf0] sm:$0xff]
      %v297 = vld [vmem:[%s246 + $0xf8] sm:$0x3]
      %v298 = vmax.f32 %v266, %v268
      %v299 = vmax.f32 %v267, %v269
      %v300 = vmax.f32 %v270, %v272
      %v301 = vmax.f32 %v271, %v273
      %v302 = vmax.f32 %v274, %v276
      %v303 = vmax.f32 %v275, %v277
      %v304 = vmax.f32 %v278, %v280
      %v305 = vmax.f32 %v279, %v281
      %v306 = vmax.f32 %v282, %v284
      %v307 = vmax.f32 %v283, %v285
      %v308 = vmax.f32 %v286, %v288
      %v309 = vmax.f32 %v287, %v289
      %v310 = vmax.f32 %v290, %v292
      %v311 = vmax.f32 %v291, %v293
      %v312 = vmax.f32 %v294, %v296
      %v313 = vmax.f32 %v295, %v297
      %330 = vrot.lane.b32.xlu0 %v298, 112
      %v331 = vpop.permute.xlu0 %330
      %332 = vrot.lane.b32.xlu0 %v299, 112
      %v333 = vpop.permute.xlu0 %332
      %334 = vrot.lane.b32.xlu0 %v300, 112
      %v335 = vpop.permute.xlu0 %334
      %336 = vrot.lane.b32.xlu0 %v301, 112
      %v337 = vpop.permute.xlu0 %336
      %338 = vrot.lane.b32.xlu0 %v302, 112
      %v339 = vpop.permute.xlu0 %338
      %340 = vrot.lane.b32.xlu0 %v303, 112
      %v341 = vpop.permute.xlu0 %340
      %342 = vrot.lane.b32.xlu0 %v304, 112
      %v343 = vpop.permute.xlu0 %342
      %344 = vrot.lane.b32.xlu0 %v305, 112
      %v345 = vpop.permute.xlu0 %344
      %346 = vrot.lane.b32.xlu0 %v306, 112
      %v347 = vpop.permute.xlu0 %346
      %348 = vrot.lane.b32.xlu0 %v307, 112
      %v349 = vpop.permute.xlu0 %348
      %350 = vrot.lane.b32.xlu0 %v308, 112
      %v351 = vpop.permute.xlu0 %350
      %352 = vrot.lane.b32.xlu0 %v309, 112
      %v353 = vpop.permute.xlu0 %352
      %354 = vrot.lane.b32.xlu0 %v310, 112
      %v355 = vpop.permute.xlu0 %354
      %356 = vrot.lane.b32.xlu0 %v311, 112
      %v357 = vpop.permute.xlu0 %356
      %358 = vrot.lane.b32.xlu0 %v312, 112
      %v359 = vpop.permute.xlu0 %358
      %360 = vrot.lane.b32.xlu0 %v313, 112
      %v361 = vpop.permute.xlu0 %360
      %v378 = vmax.f32 %v298, %v331
      %v379 = vmax.f32 %v299, %v333
      %v380 = vmax.f32 %v300, %v335
      %v381 = vmax.f32 %v301, %v337
      %v382 = vmax.f32 %v302, %v339
      %v383 = vmax.f32 %v303, %v341
      %v384 = vmax.f32 %v304, %v343
      %v385 = vmax.f32 %v305, %v345
      %v386 = vmax.f32 %v306, %v347
      %v387 = vmax.f32 %v307, %v349
      %v388 = vmax.f32 %v308, %v351
      %v389 = vmax.f32 %v309, %v353
      %v390 = vmax.f32 %v310, %v355
      %v391 = vmax.f32 %v311, %v357
      %v392 = vmax.f32 %v312, %v359
      %v393 = vmax.f32 %v313, %v361
      %394 = vst.msk [vmem:[#allocation2 + $0xb] sm:$0xff] %vm252, %v378
      %vm395 = vcmask 123904
      %396 = vst.msk [vmem:[#allocation2 + $0x13] sm:$0x3] %vm395, %v379
      %397 = vst.msk [vmem:[#allocation2 + $0x15] sm:$0xff] %vm252, %v380
      %398 = vst.msk [vmem:[#allocation2 + $0x1d] sm:$0x3] %vm395, %v381
      %399 = vst.msk [vmem:[#allocation2 + $0x1f] sm:$0xff] %vm252, %v382
      %400 = vst.msk [vmem:[#allocation2 + $0x27] sm:$0x3] %vm395, %v383
      %401 = vst.msk [vmem:[#allocation2 + $0x29] sm:$0xff] %vm252, %v384
      %402 = vst.msk [vmem:[#allocation2 + $0x31] sm:$0x3] %vm395, %v385
      %403 = vst.msk [vmem:[#allocation2 + $0x33] sm:$0xff] %vm252, %v386
      %404 = vst.msk [vmem:[#allocation2 + $0x3b] sm:$0x3] %vm395, %v387
      %405 = vst.msk [vmem:[#allocation2 + $0x3d] sm:$0xff] %vm252, %v388
      %406 = vst.msk [vmem:[#allocation2 + $0x45] sm:$0x3] %vm395, %v389
      %407 = vst.msk [vmem:[#allocation2 + $0x47] sm:$0xff] %vm252, %v390
      %408 = vst.msk [vmem:[#allocation2 + $0x4f] sm:$0x3] %vm395, %v391
      %409 = vst.msk [vmem:[#allocation2 + $0x51] sm:$0xff] %vm252, %v392
      %410 = vst.msk [vmem:[#allocation2 + $0x59] sm:$0x3] %vm395, %v393
      %v411 = vld [vmem:[#allocation2] sm:$0xff]
      %v412 = vld [vmem:[#allocation2 + $0x8] sm:$0xff]
      %v413 = vld [vmem:[#allocation2 + $0x10] sm:$0xff]
      %v414 = vld [vmem:[#allocation2 + $0x18] sm:$0xff]
      %v415 = vld [vmem:[#allocation2 + $0x20] sm:$0xff]
      %v416 = vld [vmem:[#allocation2 + $0x28] sm:$0xff]
      %v417 = vld [vmem:[#allocation2 + $0x30] sm:$0xff]
      %v418 = vld [vmem:[#allocation2 + $0x38] sm:$0xff]
      %v419 = vld [vmem:[#allocation2 + $0x40] sm:$0xff]
      %v420 = vld [vmem:[#allocation2 + $0x48] sm:$0xff]
      %v421 = vld [vmem:[%s1] sm:$0xff]
      %v422 = vld [vmem:[%s1 + $0x8] sm:$0xff]
      %v423 = vld [vmem:[#allocation2 + $0x1] sm:$0xff]
      %v424 = vld [vmem:[#allocation2 + $0x9] sm:$0xff]
      %v425 = vld [vmem:[#allocation2 + $0x11] sm:$0xff]
      %v426 = vld [vmem:[#allocation2 + $0x19] sm:$0xff]
      %v427 = vld [vmem:[#allocation2 + $0x21] sm:$0xff]
      %v428 = vld [vmem:[#allocation2 + $0x29] sm:$0xff]
      %v429 = vld [vmem:[#allocation2 + $0x31] sm:$0xff]
      %v430 = vld [vmem:[#allocation2 + $0x39] sm:$0xff]
      %v431 = vld [vmem:[#allocation2 + $0x41] sm:$0xff]
      %v432 = vld [vmem:[#allocation2 + $0x49] sm:$0xff]
      %v433 = vld [vmem:[%s1 + $0x10] sm:$0xff]
      %v434 = vld [vmem:[%s1 + $0x18] sm:$0xff]
      %v436 = vsel %vm252, %v423, 0
      %v439 = vsel %vm252, %v424, 0
      %v442 = vsel %vm252, %v425, 0
      %v445 = vsel %vm252, %v426, 0
      %v448 = vsel %vm252, %v427, 0
      %v451 = vsel %vm252, %v428, 0
      %v454 = vsel %vm252, %v429, 0
      %v457 = vsel %vm252, %v430, 0
      %v460 = vsel %vm252, %v431, 0
      %v463 = vsel %vm252, %v432, 0
      %465 = vmatprep.subr.mxu0 0.0
      %466 = vmatpush1.msra.mxu0 0.0
      %467 = vmatprep.subr.mxu0 0.0
      %468 = vmatpush1.msra.mxu0 0.0
      %469 = vmatprep.subr.mxu0 0.0
      %470 = vmatpush1.msra.mxu0 0.0
      %471 = vmatprep.subr.mxu0 0.0
      %472 = vmatpush1.msra.mxu0 0.0
      %473 = vmatprep.subr.mxu0 0.0
      %474 = vmatpush1.msra.mxu0 0.0
      %475 = vmatprep.subr.mxu0 0.0
      %476 = vmatpush1.msra.mxu0 0.0
      %477 = vmatprep.subr.mxu0 0.0
      %478 = vmatpush1.msra.mxu0 0.0
      %479 = vmatprep.subr.mxu0 0.0
      %480 = vmatpush1.msra.mxu0 0.0
      %481 = vmatprep.subr.mxu0 0.0
      %482 = vmatpush1.msra.mxu0 0.0
      %483 = vmatprep.subr.mxu0 0.0
      %484 = vmatpush1.msra.mxu0 0.0
      %485 = vmatprep.subr.mxu0 0.0
      %486 = vmatpush1.msra.mxu0 0.0
      %487 = vmatprep.subr.mxu0 0.0
      %488 = vmatpush1.msra.mxu0 0.0
      %489 = vmatprep.subr.mxu0 0.0
      %490 = vmatpush1.msra.mxu0 0.0
      %491 = vmatprep.subr.mxu0 0.0
      %492 = vmatpush1.msra.mxu0 0.0
      %493 = vmatprep.subr.mxu0 0.0
      %494 = vmatpush1.msra.mxu0 %v434
      %495 = vmatprep.subr.mxu0 0.0
      %496 = vmatpush1.msra.mxu0 %v433
      %497 = vmatprep.subr.mxu0 0.0
      %498 = vmatpush2.msra.mxu0 0.0
      %499 = vmatprep.subr.mxu0 0.0
      %500 = vmatpush2.msra.mxu0 0.0
      %501 = vmatprep.subr.mxu0 0.0
      %502 = vmatpush2.msra.mxu0 0.0
      %503 = vmatprep.subr.mxu0 0.0
      %504 = vmatpush2.msra.mxu0 0.0
      %505 = vmatprep.subr.mxu0 0.0
      %506 = vmatpush2.msra.mxu0 0.0
      %507 = vmatprep.subr.mxu0 0.0
      %508 = vmatpush2.msra.mxu0 0.0
      %509 = vmatprep.subr.mxu0 0.0
      %510 = vmatpush2.msra.mxu0 0.0
      %511 = vmatprep.subr.mxu0 0.0
      %512 = vmatpush2.msra.mxu0 0.0
      %513 = vmatprep.subr.mxu0 0.0
      %514 = vmatpush2.msra.mxu0 0.0
      %515 = vmatprep.subr.mxu0 0.0
      %516 = vmatpush2.msra.mxu0 0.0
      %517 = vmatprep.subr.mxu0 0.0
      %518 = vmatpush2.msra.mxu0 0.0
      %519 = vmatprep.subr.mxu0 0.0
      %520 = vmatpush2.msra.mxu0 0.0
      %521 = vmatprep.subr.mxu0 0.0
      %522 = vmatpush2.msra.mxu0 0.0
      %523 = vmatprep.subr.mxu0 0.0
      %524 = vmatpush2.msra.mxu0 0.0
      %525 = vmatprep.subr.mxu0 0.0
      %526 = vmatpush2.msra.mxu0 0.0
      %527 = vmatprep.subr.mxu0 0.0
      %528 = vmatpush2.msra.mxu0 0.0
      %529 = vmatprep.mubr.f32.mxu0 0.0
      %530 = vmatmul.mubr.f32.gmra.mxu0 %v436
      %v531 = vpop.f32.mrf.mxu0
      %v532 = vadd.f32 0.0, %v531
      %v533 = vpop.f32.mrf.mxu0
      %534 = vmatprep.mubr.f32.mxu0 0.0
      %535 = vmatmul.mubr.f32.gmra.mxu0 %v439
      %v536 = vpop.f32.mrf.mxu0
      %v537 = vadd.f32 0.0, %v536
      %v538 = vpop.f32.mrf.mxu0
      %539 = vmatprep.mubr.f32.mxu0 0.0
      %540 = vmatmul.mubr.f32.gmra.mxu0 %v442
      %v541 = vpop.f32.mrf.mxu0
      %v542 = vadd.f32 0.0, %v541
      %v543 = vpop.f32.mrf.mxu0
      %544 = vmatprep.mubr.f32.mxu0 0.0
      %545 = vmatmul.mubr.f32.gmra.mxu0 %v445
      %v546 = vpop.f32.mrf.mxu0
      %v547 = vadd.f32 0.0, %v546
      %v548 = vpop.f32.mrf.mxu0
      %549 = vmatprep.mubr.f32.mxu0 0.0
      %550 = vmatmul.mubr.f32.gmra.mxu0 %v448
      %v551 = vpop.f32.mrf.mxu0
      %v552 = vadd.f32 0.0, %v551
      %v553 = vpop.f32.mrf.mxu0
      %554 = vmatprep.mubr.f32.mxu0 0.0
      %555 = vmatmul.mubr.f32.gmra.mxu0 %v451
      %v556 = vpop.f32.mrf.mxu0
      %v557 = vadd.f32 0.0, %v556
      %v558 = vpop.f32.mrf.mxu0
      %559 = vmatprep.mubr.f32.mxu0 0.0
      %560 = vmatmul.mubr.f32.gmra.mxu0 %v454
      %v561 = vpop.f32.mrf.mxu0
      %v562 = vadd.f32 0.0, %v561
      %v563 = vpop.f32.mrf.mxu0
      %564 = vmatprep.mubr.f32.mxu0 0.0
      %565 = vmatmul.mubr.f32.gmra.mxu0 %v457
      %v566 = vpop.f32.mrf.mxu0
      %v567 = vadd.f32 0.0, %v566
      %v568 = vpop.f32.mrf.mxu0
      %569 = vmatprep.mubr.f32.mxu0 0.0
      %570 = vmatmul.mubr.f32.gmra.mxu0 %v460
      %v571 = vpop.f32.mrf.mxu0
      %v572 = vadd.f32 0.0, %v571
      %v573 = vpop.f32.mrf.mxu0
      %574 = vmatprep.mubr.f32.mxu0 0.0
      %575 = vmatmul.mubr.f32.gmra.mxu0 %v463
      %v576 = vpop.f32.mrf.mxu0
      %v577 = vadd.f32 0.0, %v576
      %v578 = vpop.f32.mrf.mxu0
      %579 = vdwg.mxu0
      %v581 = vsel %vm252, %v411, 0
      %v584 = vsel %vm252, %v412, 0
      %v587 = vsel %vm252, %v413, 0
      %v590 = vsel %vm252, %v414, 0
      %v593 = vsel %vm252, %v415, 0
      %v596 = vsel %vm252, %v416, 0
      %v599 = vsel %vm252, %v417, 0
      %v602 = vsel %vm252, %v418, 0
      %v605 = vsel %vm252, %v419, 0
      %v608 = vsel %vm252, %v420, 0
      %610 = vmatprep.subr.mxu0 0.0
      %611 = vmatpush1.msra.mxu0 0.0
      %612 = vmatprep.subr.mxu0 0.0
      %613 = vmatpush1.msra.mxu0 0.0
      %614 = vmatprep.subr.mxu0 0.0
      %615 = vmatpush1.msra.mxu0 0.0
      %616 = vmatprep.subr.mxu0 0.0
      %617 = vmatpush1.msra.mxu0 0.0
      %618 = vmatprep.subr.mxu0 0.0
      %619 = vmatpush1.msra.mxu0 0.0
      %620 = vmatprep.subr.mxu0 0.0
      %621 = vmatpush1.msra.mxu0 0.0
      %622 = vmatprep.subr.mxu0 0.0
      %623 = vmatpush1.msra.mxu0 0.0
      %624 = vmatprep.subr.mxu0 0.0
      %625 = vmatpush1.msra.mxu0 0.0
      %626 = vmatprep.subr.mxu0 0.0
      %627 = vmatpush1.msra.mxu0 0.0
      %628 = vmatprep.subr.mxu0 0.0
      %629 = vmatpush1.msra.mxu0 0.0
      %630 = vmatprep.subr.mxu0 0.0
      %631 = vmatpush1.msra.mxu0 0.0
      %632 = vmatprep.subr.mxu0 0.0
      %633 = vmatpush1.msra.mxu0 0.0
      %634 = vmatprep.subr.mxu0 0.0
      %635 = vmatpush1.msra.mxu0 0.0
      %636 = vmatprep.subr.mxu0 0.0
      %637 = vmatpush1.msra.mxu0 0.0
      %638 = vmatprep.subr.mxu0 0.0
      %639 = vmatpush1.msra.mxu0 %v422
      %640 = vmatprep.subr.mxu0 0.0
      %641 = vmatpush1.msra.mxu0 %v421
      %642 = vmatprep.subr.mxu0 0.0
      %643 = vmatpush2.msra.mxu0 0.0
      %644 = vmatprep.subr.mxu0 0.0
      %645 = vmatpush2.msra.mxu0 0.0
      %646 = vmatprep.subr.mxu0 0.0
      %647 = vmatpush2.msra.mxu0 0.0
      %648 = vmatprep.subr.mxu0 0.0
      %649 = vmatpush2.msra.mxu0 0.0
      %650 = vmatprep.subr.mxu0 0.0
      %651 = vmatpush2.msra.mxu0 0.0
      %652 = vmatprep.subr.mxu0 0.0
      %653 = vmatpush2.msra.mxu0 0.0
      %654 = vmatprep.subr.mxu0 0.0
      %655 = vmatpush2.msra.mxu0 0.0
      %656 = vmatprep.subr.mxu0 0.0
      %657 = vmatpush2.msra.mxu0 0.0
      %658 = vmatprep.subr.mxu0 0.0
      %659 = vmatpush2.msra.mxu0 0.0
      %660 = vmatprep.subr.mxu0 0.0
      %661 = vmatpush2.msra.mxu0 0.0
      %662 = vmatprep.subr.mxu0 0.0
      %663 = vmatpush2.msra.mxu0 0.0
      %664 = vmatprep.subr.mxu0 0.0
      %665 = vmatpush2.msra.mxu0 0.0
      %666 = vmatprep.subr.mxu0 0.0
      %667 = vmatpush2.msra.mxu0 0.0
      %668 = vmatprep.subr.mxu0 0.0
      %669 = vmatpush2.msra.mxu0 0.0
      %670 = vmatprep.subr.mxu0 0.0
      %671 = vmatpush2.msra.mxu0 0.0
      %672 = vmatprep.subr.mxu0 0.0
      %673 = vmatpush2.msra.mxu0 0.0
      %674 = vmatprep.mubr.f32.mxu0 0.0
      %675 = vmatmul.mubr.f32.gmra.mxu0 %v581
      %v676 = vpop.f32.mrf.mxu0
      %v677 = vadd.f32 %v532, %v676
      %v678 = vpop.f32.mrf.mxu0
      %679 = vmatprep.mubr.f32.mxu0 0.0
      %680 = vmatmul.mubr.f32.gmra.mxu0 %v584
      %v681 = vpop.f32.mrf.mxu0
      %v682 = vadd.f32 %v537, %v681
      %v683 = vpop.f32.mrf.mxu0
      %684 = vmatprep.mubr.f32.mxu0 0.0
      %685 = vmatmul.mubr.f32.gmra.mxu0 %v587
      %v686 = vpop.f32.mrf.mxu0
      %v687 = vadd.f32 %v542, %v686
      %v688 = vpop.f32.mrf.mxu0
      %689 = vmatprep.mubr.f32.mxu0 0.0
      %690 = vmatmul.mubr.f32.gmra.mxu0 %v590
      %v691 = vpop.f32.mrf.mxu0
      %v692 = vadd.f32 %v547, %v691
      %v693 = vpop.f32.mrf.mxu0
      %694 = vmatprep.mubr.f32.mxu0 0.0
      %695 = vmatmul.mubr.f32.gmra.mxu0 %v593
      %v696 = vpop.f32.mrf.mxu0
      %v697 = vadd.f32 %v552, %v696
      %v698 = vpop.f32.mrf.mxu0
      %699 = vmatprep.mubr.f32.mxu0 0.0
      %700 = vmatmul.mubr.f32.gmra.mxu0 %v596
      %v701 = vpop.f32.mrf.mxu0
      %v702 = vadd.f32 %v557, %v701
      %v703 = vpop.f32.mrf.mxu0
      %704 = vmatprep.mubr.f32.mxu0 0.0
      %705 = vmatmul.mubr.f32.gmra.mxu0 %v599
      %v706 = vpop.f32.mrf.mxu0
      %v707 = vadd.f32 %v562, %v706
      %v708 = vpop.f32.mrf.mxu0
      %709 = vmatprep.mubr.f32.mxu0 0.0
      %710 = vmatmul.mubr.f32.gmra.mxu0 %v602
      %v711 = vpop.f32.mrf.mxu0
      %v712 = vadd.f32 %v567, %v711
      %v713 = vpop.f32.mrf.mxu0
      %714 = vmatprep.mubr.f32.mxu0 0.0
      %715 = vmatmul.mubr.f32.gmra.mxu0 %v605
      %v716 = vpop.f32.mrf.mxu0
      %v717 = vadd.f32 %v572, %v716
      %v718 = vpop.f32.mrf.mxu0
      %719 = vmatprep.mubr.f32.mxu0 0.0
      %720 = vmatmul.mubr.f32.gmra.mxu0 %v608
      %v721 = vpop.f32.mrf.mxu0
      %v722 = vadd.f32 %v577, %v721
      %v723 = vpop.f32.mrf.mxu0
      %724 = vdwg.mxu0
      %v725 = vld [vmem:[#allocation2 + $0x2] sm:$0xff]
      %v726 = vld [vmem:[#allocation2 + $0xa] sm:$0xff]
      %v727 = vld [vmem:[#allocation2 + $0x12] sm:$0xff]
      %v728 = vld [vmem:[#allocation2 + $0x1a] sm:$0xff]
      %v729 = vld [vmem:[#allocation2 + $0x22] sm:$0xff]
      %v730 = vld [vmem:[#allocation2 + $0x2a] sm:$0xff]
      %v731 = vld [vmem:[#allocation2 + $0x32] sm:$0xff]
      %v732 = vld [vmem:[#allocation2 + $0x3a] sm:$0xff]
      %v733 = vld [vmem:[#allocation2 + $0x42] sm:$0xff]
      %v734 = vld [vmem:[#allocation2 + $0x4a] sm:$0xff]
      %v735 = vld [vmem:[%s1 + $0x20] sm:$0xff]
      %v736 = vld [vmem:[%s1 + $0x28] sm:$0xff]
      %v738 = vsel %vm252, %v725, 0
      %v741 = vsel %vm252, %v726, 0
      %v744 = vsel %vm252, %v727, 0
      %v747 = vsel %vm252, %v728, 0
      %v750 = vsel %vm252, %v729, 0
      %v753 = vsel %vm252, %v730, 0
      %v756 = vsel %vm252, %v731, 0
      %v759 = vsel %vm252, %v732, 0
      %v762 = vsel %vm252, %v733, 0
      %v765 = vsel %vm252, %v734, 0
      %767 = vmatprep.subr.mxu0 0.0
      %768 = vmatpush1.msra.mxu0 0.0
      %769 = vmatprep.subr.mxu0 0.0
      %770 = vmatpush1.msra.mxu0 0.0
      %771 = vmatprep.subr.mxu0 0.0
      %772 = vmatpush1.msra.mxu0 0.0
      %773 = vmatprep.subr.mxu0 0.0
      %774 = vmatpush1.msra.mxu0 0.0
      %775 = vmatprep.subr.mxu0 0.0
      %776 = vmatpush1.msra.mxu0 0.0
      %777 = vmatprep.subr.mxu0 0.0
      %778 = vmatpush1.msra.mxu0 0.0
      %779 = vmatprep.subr.mxu0 0.0
      %780 = vmatpush1.msra.mxu0 0.0
      %781 = vmatprep.subr.mxu0 0.0
      %782 = vmatpush1.msra.mxu0 0.0
      %783 = vmatprep.subr.mxu0 0.0
      %784 = vmatpush1.msra.mxu0 0.0
      %785 = vmatprep.subr.mxu0 0.0
      %786 = vmatpush1.msra.mxu0 0.0
      %787 = vmatprep.subr.mxu0 0.0
      %788 = vmatpush1.msra.mxu0 0.0
      %789 = vmatprep.subr.mxu0 0.0
      %790 = vmatpush1.msra.mxu0 0.0
      %791 = vmatprep.subr.mxu0 0.0
      %792 = vmatpush1.msra.mxu0 0.0
      %793 = vmatprep.subr.mxu0 0.0
      %794 = vmatpush1.msra.mxu0 0.0
      %795 = vmatprep.subr.mxu0 0.0
      %796 = vmatpush1.msra.mxu0 %v736
      %797 = vmatprep.subr.mxu0 0.0
      %798 = vmatpush1.msra.mxu0 %v735
      %799 = vmatprep.subr.mxu0 0.0
      %800 = vmatpush2.msra.mxu0 0.0
      %801 = vmatprep.subr.mxu0 0.0
      %802 = vmatpush2.msra.mxu0 0.0
      %803 = vmatprep.subr.mxu0 0.0
      %804 = vmatpush2.msra.mxu0 0.0
      %805 = vmatprep.subr.mxu0 0.0
      %806 = vmatpush2.msra.mxu0 0.0
      %807 = vmatprep.subr.mxu0 0.0
      %808 = vmatpush2.msra.mxu0 0.0
      %809 = vmatprep.subr.mxu0 0.0
      %810 = vmatpush2.msra.mxu0 0.0
      %811 = vmatprep.subr.mxu0 0.0
      %812 = vmatpush2.msra.mxu0 0.0
      %813 = vmatprep.subr.mxu0 0.0
      %814 = vmatpush2.msra.mxu0 0.0
      %815 = vmatprep.subr.mxu0 0.0
      %816 = vmatpush2.msra.mxu0 0.0
      %817 = vmatprep.subr.mxu0 0.0
      %818 = vmatpush2.msra.mxu0 0.0
      %819 = vmatprep.subr.mxu0 0.0
      %820 = vmatpush2.msra.mxu0 0.0
      %821 = vmatprep.subr.mxu0 0.0
      %822 = vmatpush2.msra.mxu0 0.0
      %823 = vmatprep.subr.mxu0 0.0
      %824 = vmatpush2.msra.mxu0 0.0
      %825 = vmatprep.subr.mxu0 0.0
      %826 = vmatpush2.msra.mxu0 0.0
      %827 = vmatprep.subr.mxu0 0.0
      %828 = vmatpush2.msra.mxu0 0.0
      %829 = vmatprep.subr.mxu0 0.0
      %830 = vmatpush2.msra.mxu0 0.0
      %831 = vmatprep.mubr.f32.mxu0 0.0
      %832 = vmatmul.mubr.f32.gmra.mxu0 %v738
      %v833 = vpop.f32.mrf.mxu0
      %v834 = vadd.f32 0.0, %v833
      %v835 = vpop.f32.mrf.mxu0
      %836 = vmatprep.mubr.f32.mxu0 0.0
      %837 = vmatmul.mubr.f32.gmra.mxu0 %v741
      %v838 = vpop.f32.mrf.mxu0
      %v839 = vadd.f32 0.0, %v838
      %v840 = vpop.f32.mrf.mxu0
      %841 = vmatprep.mubr.f32.mxu0 0.0
      %842 = vmatmul.mubr.f32.gmra.mxu0 %v744
      %v843 = vpop.f32.mrf.mxu0
      %v844 = vadd.f32 0.0, %v843
      %v845 = vpop.f32.mrf.mxu0
      %846 = vmatprep.mubr.f32.mxu0 0.0
      %847 = vmatmul.mubr.f32.gmra.mxu0 %v747
      %v848 = vpop.f32.mrf.mxu0
      %v849 = vadd.f32 0.0, %v848
      %v850 = vpop.f32.mrf.mxu0
      %851 = vmatprep.mubr.f32.mxu0 0.0
      %852 = vmatmul.mubr.f32.gmra.mxu0 %v750
      %v853 = vpop.f32.mrf.mxu0
      %v854 = vadd.f32 0.0, %v853
      %v855 = vpop.f32.mrf.mxu0
      %856 = vmatprep.mubr.f32.mxu0 0.0
      %857 = vmatmul.mubr.f32.gmra.mxu0 %v753
      %v858 = vpop.f32.mrf.mxu0
      %v859 = vadd.f32 0.0, %v858
      %v860 = vpop.f32.mrf.mxu0
      %861 = vmatprep.mubr.f32.mxu0 0.0
      %862 = vmatmul.mubr.f32.gmra.mxu0 %v756
      %v863 = vpop.f32.mrf.mxu0
      %v864 = vadd.f32 0.0, %v863
      %v865 = vpop.f32.mrf.mxu0
      %866 = vmatprep.mubr.f32.mxu0 0.0
      %867 = vmatmul.mubr.f32.gmra.mxu0 %v759
      %v868 = vpop.f32.mrf.mxu0
      %v869 = vadd.f32 0.0, %v868
      %v870 = vpop.f32.mrf.mxu0
      %871 = vmatprep.mubr.f32.mxu0 0.0
      %872 = vmatmul.mubr.f32.gmra.mxu0 %v762
      %v873 = vpop.f32.mrf.mxu0
      %v874 = vadd.f32 0.0, %v873
      %v875 = vpop.f32.mrf.mxu0
      %876 = vmatprep.mubr.f32.mxu0 0.0
      %877 = vmatmul.mubr.f32.gmra.mxu0 %v765
      %v878 = vpop.f32.mrf.mxu0
      %v879 = vadd.f32 0.0, %v878
      %v880 = vpop.f32.mrf.mxu0
      %881 = vdwg.mxu0
      %v882 = vadd.f32 %v677, %v834
      %v883 = vadd.f32 %v682, %v839
      %v884 = vadd.f32 %v687, %v844
      %v885 = vadd.f32 %v692, %v849
      %v886 = vadd.f32 %v697, %v854
      %v887 = vadd.f32 %v702, %v859
      %v888 = vadd.f32 %v707, %v864
      %v889 = vadd.f32 %v712, %v869
      %v890 = vadd.f32 %v717, %v874
      %v891 = vadd.f32 %v722, %v879
      %v892 = vld [vmem:[#allocation2 + $0xa] sm:$0xff]
      %v893 = vld [vmem:[#allocation2 + $0x12] sm:$0xff]
      %v894 = vld [vmem:[#allocation2 + $0x1a] sm:$0xff]
      %v895 = vld [vmem:[#allocation2 + $0x22] sm:$0xff]
      %v896 = vld [vmem:[#allocation2 + $0x2a] sm:$0xff]
      %v897 = vld [vmem:[#allocation2 + $0x32] sm:$0xff]
      %v898 = vld [vmem:[#allocation2 + $0x3a] sm:$0xff]
      %v899 = vld [vmem:[#allocation2 + $0x42] sm:$0xff]
      %v900 = vld [vmem:[#allocation2 + $0x4a] sm:$0xff]
      %v901 = vld [vmem:[#allocation2 + $0x52] sm:$0xff]
      %v902 = vld [vmem:[%s1 + $0x30] sm:$0xff]
      %v903 = vld [vmem:[%s1 + $0x38] sm:$0xff]
      %v905 = vsel %vm252, %v892, 0
      %v908 = vsel %vm252, %v893, 0
      %v911 = vsel %vm252, %v894, 0
      %v914 = vsel %vm252, %v895, 0
      %v917 = vsel %vm252, %v896, 0
      %v920 = vsel %vm252, %v897, 0
      %v923 = vsel %vm252, %v898, 0
      %v926 = vsel %vm252, %v899, 0
      %v929 = vsel %vm252, %v900, 0
      %v932 = vsel %vm252, %v901, 0
      %934 = vmatprep.subr.mxu0 0.0
      %935 = vmatpush1.msra.mxu0 0.0
      %936 = vmatprep.subr.mxu0 0.0
      %937 = vmatpush1.msra.mxu0 0.0
      %938 = vmatprep.subr.mxu0 0.0
      %939 = vmatpush1.msra.mxu0 0.0
      %940 = vmatprep.subr.mxu0 0.0
      %941 = vmatpush1.msra.mxu0 0.0
      %942 = vmatprep.subr.mxu0 0.0
      %943 = vmatpush1.msra.mxu0 0.0
      %944 = vmatprep.subr.mxu0 0.0
      %945 = vmatpush1.msra.mxu0 0.0
      %946 = vmatprep.subr.mxu0 0.0
      %947 = vmatpush1.msra.mxu0 0.0
      %948 = vmatprep.subr.mxu0 0.0
      %949 = vmatpush1.msra.mxu0 0.0
      %950 = vmatprep.subr.mxu0 0.0
      %951 = vmatpush1.msra.mxu0 0.0
      %952 = vmatprep.subr.mxu0 0.0
      %953 = vmatpush1.msra.mxu0 0.0
      %954 = vmatprep.subr.mxu0 0.0
      %955 = vmatpush1.msra.mxu0 0.0
      %956 = vmatprep.subr.mxu0 0.0
      %957 = vmatpush1.msra.mxu0 0.0
      %958 = vmatprep.subr.mxu0 0.0
      %959 = vmatpush1.msra.mxu0 0.0
      %960 = vmatprep.subr.mxu0 0.0
      %961 = vmatpush1.msra.mxu0 0.0
      %962 = vmatprep.subr.mxu0 0.0
      %963 = vmatpush1.msra.mxu0 %v903
      %964 = vmatprep.subr.mxu0 0.0
      %965 = vmatpush1.msra.mxu0 %v902
      %966 = vmatprep.subr.mxu0 0.0
      %967 = vmatpush2.msra.mxu0 0.0
      %968 = vmatprep.subr.mxu0 0.0
      %969 = vmatpush2.msra.mxu0 0.0
      %970 = vmatprep.subr.mxu0 0.0
      %971 = vmatpush2.msra.mxu0 0.0
      %972 = vmatprep.subr.mxu0 0.0
      %973 = vmatpush2.msra.mxu0 0.0
      %974 = vmatprep.subr.mxu0 0.0
      %975 = vmatpush2.msra.mxu0 0.0
      %976 = vmatprep.subr.mxu0 0.0
      %977 = vmatpush2.msra.mxu0 0.0
      %978 = vmatprep.subr.mxu0 0.0
      %979 = vmatpush2.msra.mxu0 0.0
      %980 = vmatprep.subr.mxu0 0.0
      %981 = vmatpush2.msra.mxu0 0.0
      %982 = vmatprep.subr.mxu0 0.0
      %983 = vmatpush2.msra.mxu0 0.0
      %984 = vmatprep.subr.mxu0 0.0
      %985 = vmatpush2.msra.mxu0 0.0
      %986 = vmatprep.subr.mxu0 0.0
      %987 = vmatpush2.msra.mxu0 0.0
      %988 = vmatprep.subr.mxu0 0.0
      %989 = vmatpush2.msra.mxu0 0.0
      %990 = vmatprep.subr.mxu0 0.0
      %991 = vmatpush2.msra.mxu0 0.0
      %992 = vmatprep.subr.mxu0 0.0
      %993 = vmatpush2.msra.mxu0 0.0
      %994 = vmatprep.subr.mxu0 0.0
      %995 = vmatpush2.msra.mxu0 0.0
      %996 = vmatprep.subr.mxu0 0.0
      %997 = vmatpush2.msra.mxu0 0.0
      %998 = vmatprep.mubr.f32.mxu0 0.0
      %999 = vmatmul.mubr.f32.gmra.mxu0 %v905
      %v1000 = vpop.f32.mrf.mxu0
      %v1001 = vadd.f32 0.0, %v1000
      %v1002 = vpop.f32.mrf.mxu0
      %1003 = vmatprep.mubr.f32.mxu0 0.0
      %1004 = vmatmul.mubr.f32.gmra.mxu0 %v908
      %v1005 = vpop.f32.mrf.mxu0
      %v1006 = vadd.f32 0.0, %v1005
      %v1007 = vpop.f32.mrf.mxu0
      %1008 = vmatprep.mubr.f32.mxu0 0.0
      %1009 = vmatmul.mubr.f32.gmra.mxu0 %v911
      %v1010 = vpop.f32.mrf.mxu0
      %v1011 = vadd.f32 0.0, %v1010
      %v1012 = vpop.f32.mrf.mxu0
      %1013 = vmatprep.mubr.f32.mxu0 0.0
      %1014 = vmatmul.mubr.f32.gmra.mxu0 %v914
      %v1015 = vpop.f32.mrf.mxu0
      %v1016 = vadd.f32 0.0, %v1015
      %v1017 = vpop.f32.mrf.mxu0
      %1018 = vmatprep.mubr.f32.mxu0 0.0
      %1019 = vmatmul.mubr.f32.gmra.mxu0 %v917
      %v1020 = vpop.f32.mrf.mxu0
      %v1021 = vadd.f32 0.0, %v1020
      %v1022 = vpop.f32.mrf.mxu0
      %1023 = vmatprep.mubr.f32.mxu0 0.0
      %1024 = vmatmul.mubr.f32.gmra.mxu0 %v920
      %v1025 = vpop.f32.mrf.mxu0
      %v1026 = vadd.f32 0.0, %v1025
      %v1027 = vpop.f32.mrf.mxu0
      %1028 = vmatprep.mubr.f32.mxu0 0.0
      %1029 = vmatmul.mubr.f32.gmra.mxu0 %v923
      %v1030 = vpop.f32.mrf.mxu0
      %v1031 = vadd.f32 0.0, %v1030
      %v1032 = vpop.f32.mrf.mxu0
      %1033 = vmatprep.mubr.f32.mxu0 0.0
      %1034 = vmatmul.mubr.f32.gmra.mxu0 %v926
      %v1035 = vpop.f32.mrf.mxu0
      %v1036 = vadd.f32 0.0, %v1035
      %v1037 = vpop.f32.mrf.mxu0
      %1038 = vmatprep.mubr.f32.mxu0 0.0
      %1039 = vmatmul.mubr.f32.gmra.mxu0 %v929
      %v1040 = vpop.f32.mrf.mxu0
      %v1041 = vadd.f32 0.0, %v1040
      %v1042 = vpop.f32.mrf.mxu0
      %1043 = vmatprep.mubr.f32.mxu0 0.0
      %1044 = vmatmul.mubr.f32.gmra.mxu0 %v932
      %v1045 = vpop.f32.mrf.mxu0
      %v1046 = vadd.f32 0.0, %v1045
      %v1047 = vpop.f32.mrf.mxu0
      %1048 = vdwg.mxu0
      %v1049 = vadd.f32 %v882, %v1001
      %v1050 = vadd.f32 %v883, %v1006
      %v1051 = vadd.f32 %v884, %v1011
      %v1052 = vadd.f32 %v885, %v1016
      %v1053 = vadd.f32 %v886, %v1021
      %v1054 = vadd.f32 %v887, %v1026
      %v1055 = vadd.f32 %v888, %v1031
      %v1056 = vadd.f32 %v889, %v1036
      %v1057 = vadd.f32 %v890, %v1041
      %v1058 = vadd.f32 %v891, %v1046
      %v1059 = vld [vmem:[#allocation2 + $0xb] sm:$0xff]
      %v1060 = vld [vmem:[#allocation2 + $0x13] sm:$0xff]
      %v1061 = vld [vmem:[#allocation2 + $0x1b] sm:$0xff]
      %v1062 = vld [vmem:[#allocation2 + $0x23] sm:$0xff]
      %v1063 = vld [vmem:[#allocation2 + $0x2b] sm:$0xff]
      %v1064 = vld [vmem:[#allocation2 + $0x33] sm:$0xff]
      %v1065 = vld [vmem:[#allocation2 + $0x3b] sm:$0xff]
      %v1066 = vld [vmem:[#allocation2 + $0x43] sm:$0xff]
      %v1067 = vld [vmem:[#allocation2 + $0x4b] sm:$0xff]
      %v1068 = vld [vmem:[#allocation2 + $0x53] sm:$0xff]
      %v1069 = vld [vmem:[%s1 + $0x40] sm:$0xff]
      %v1070 = vld [vmem:[%s1 + $0x48] sm:$0xff]
      %v1072 = vsel %vm252, %v1059, 0
      %v1075 = vsel %vm252, %v1060, 0
      %v1078 = vsel %vm252, %v1061, 0
      %v1081 = vsel %vm252, %v1062, 0
      %v1084 = vsel %vm252, %v1063, 0
      %v1087 = vsel %vm252, %v1064, 0
      %v1090 = vsel %vm252, %v1065, 0
      %v1093 = vsel %vm252, %v1066, 0
      %v1096 = vsel %vm252, %v1067, 0
      %v1099 = vsel %vm252, %v1068, 0
      %1101 = vmatprep.subr.mxu0 0.0
      %1102 = vmatpush1.msra.mxu0 0.0
      %1103 = vmatprep.subr.mxu0 0.0
      %1104 = vmatpush1.msra.mxu0 0.0
      %1105 = vmatprep.subr.mxu0 0.0
      %1106 = vmatpush1.msra.mxu0 0.0
      %1107 = vmatprep.subr.mxu0 0.0
      %1108 = vmatpush1.msra.mxu0 0.0
      %1109 = vmatprep.subr.mxu0 0.0
      %1110 = vmatpush1.msra.mxu0 0.0
      %1111 = vmatprep.subr.mxu0 0.0
      %1112 = vmatpush1.msra.mxu0 0.0
      %1113 = vmatprep.subr.mxu0 0.0
      %1114 = vmatpush1.msra.mxu0 0.0
      %1115 = vmatprep.subr.mxu0 0.0
      %1116 = vmatpush1.msra.mxu0 0.0
      %1117 = vmatprep.subr.mxu0 0.0
      %1118 = vmatpush1.msra.mxu0 0.0
      %1119 = vmatprep.subr.mxu0 0.0
      %1120 = vmatpush1.msra.mxu0 0.0
      %1121 = vmatprep.subr.mxu0 0.0
      %1122 = vmatpush1.msra.mxu0 0.0
      %1123 = vmatprep.subr.mxu0 0.0
      %1124 = vmatpush1.msra.mxu0 0.0
      %1125 = vmatprep.subr.mxu0 0.0
      %1126 = vmatpush1.msra.mxu0 0.0
      %1127 = vmatprep.subr.mxu0 0.0
      %1128 = vmatpush1.msra.mxu0 0.0
      %1129 = vmatprep.subr.mxu0 0.0
      %1130 = vmatpush1.msra.mxu0 %v1070
      %1131 = vmatprep.subr.mxu0 0.0
      %1132 = vmatpush1.msra.mxu0 %v1069
      %1133 = vmatprep.subr.mxu0 0.0
      %1134 = vmatpush2.msra.mxu0 0.0
      %1135 = vmatprep.subr.mxu0 0.0
      %1136 = vmatpush2.msra.mxu0 0.0
      %1137 = vmatprep.subr.mxu0 0.0
      %1138 = vmatpush2.msra.mxu0 0.0
      %1139 = vmatprep.subr.mxu0 0.0
      %1140 = vmatpush2.msra.mxu0 0.0
      %1141 = vmatprep.subr.mxu0 0.0
      %1142 = vmatpush2.msra.mxu0 0.0
      %1143 = vmatprep.subr.mxu0 0.0
      %1144 = vmatpush2.msra.mxu0 0.0
      %1145 = vmatprep.subr.mxu0 0.0
      %1146 = vmatpush2.msra.mxu0 0.0
      %1147 = vmatprep.subr.mxu0 0.0
      %1148 = vmatpush2.msra.mxu0 0.0
      %1149 = vmatprep.subr.mxu0 0.0
      %1150 = vmatpush2.msra.mxu0 0.0
      %1151 = vmatprep.subr.mxu0 0.0
      %1152 = vmatpush2.msra.mxu0 0.0
      %1153 = vmatprep.subr.mxu0 0.0
      %1154 = vmatpush2.msra.mxu0 0.0
      %1155 = vmatprep.subr.mxu0 0.0
      %1156 = vmatpush2.msra.mxu0 0.0
      %1157 = vmatprep.subr.mxu0 0.0
      %1158 = vmatpush2.msra.mxu0 0.0
      %1159 = vmatprep.subr.mxu0 0.0
      %1160 = vmatpush2.msra.mxu0 0.0
      %1161 = vmatprep.subr.mxu0 0.0
      %1162 = vmatpush2.msra.mxu0 0.0
      %1163 = vmatprep.subr.mxu0 0.0
      %1164 = vmatpush2.msra.mxu0 0.0
      %1165 = vmatprep.mubr.f32.mxu0 0.0
      %1166 = vmatmul.mubr.f32.gmra.mxu0 %v1072
      %v1167 = vpop.f32.mrf.mxu0
      %v1168 = vadd.f32 0.0, %v1167
      %v1169 = vpop.f32.mrf.mxu0
      %1170 = vmatprep.mubr.f32.mxu0 0.0
      %1171 = vmatmul.mubr.f32.gmra.mxu0 %v1075
      %v1172 = vpop.f32.mrf.mxu0
      %v1173 = vadd.f32 0.0, %v1172
      %v1174 = vpop.f32.mrf.mxu0
      %1175 = vmatprep.mubr.f32.mxu0 0.0
      %1176 = vmatmul.mubr.f32.gmra.mxu0 %v1078
      %v1177 = vpop.f32.mrf.mxu0
      %v1178 = vadd.f32 0.0, %v1177
      %v1179 = vpop.f32.mrf.mxu0
      %1180 = vmatprep.mubr.f32.mxu0 0.0
      %1181 = vmatmul.mubr.f32.gmra.mxu0 %v1081
      %v1182 = vpop.f32.mrf.mxu0
      %v1183 = vadd.f32 0.0, %v1182
      %v1184 = vpop.f32.mrf.mxu0
      %1185 = vmatprep.mubr.f32.mxu0 0.0
      %1186 = vmatmul.mubr.f32.gmra.mxu0 %v1084
      %v1187 = vpop.f32.mrf.mxu0
      %v1188 = vadd.f32 0.0, %v1187
      %v1189 = vpop.f32.mrf.mxu0
      %1190 = vmatprep.mubr.f32.mxu0 0.0
      %1191 = vmatmul.mubr.f32.gmra.mxu0 %v1087
      %v1192 = vpop.f32.mrf.mxu0
      %v1193 = vadd.f32 0.0, %v1192
      %v1194 = vpop.f32.mrf.mxu0
      %1195 = vmatprep.mubr.f32.mxu0 0.0
      %1196 = vmatmul.mubr.f32.gmra.mxu0 %v1090
      %v1197 = vpop.f32.mrf.mxu0
      %v1198 = vadd.f32 0.0, %v1197
      %v1199 = vpop.f32.mrf.mxu0
      %1200 = vmatprep.mubr.f32.mxu0 0.0
      %1201 = vmatmul.mubr.f32.gmra.mxu0 %v1093
      %v1202 = vpop.f32.mrf.mxu0
      %v1203 = vadd.f32 0.0, %v1202
      %v1204 = vpop.f32.mrf.mxu0
      %1205 = vmatprep.mubr.f32.mxu0 0.0
      %1206 = vmatmul.mubr.f32.gmra.mxu0 %v1096
      %v1207 = vpop.f32.mrf.mxu0
      %v1208 = vadd.f32 0.0, %v1207
      %v1209 = vpop.f32.mrf.mxu0
      %1210 = vmatprep.mubr.f32.mxu0 0.0
      %1211 = vmatmul.mubr.f32.gmra.mxu0 %v1099
      %v1212 = vpop.f32.mrf.mxu0
      %v1213 = vadd.f32 0.0, %v1212
      %v1214 = vpop.f32.mrf.mxu0
      %1215 = vdwg.mxu0
      %v1216 = vadd.f32 %v1049, %v1168
      %v1217 = vadd.f32 %v1050, %v1173
      %v1218 = vadd.f32 %v1051, %v1178
      %v1219 = vadd.f32 %v1052, %v1183
      %v1220 = vadd.f32 %v1053, %v1188
      %v1221 = vadd.f32 %v1054, %v1193
      %v1222 = vadd.f32 %v1055, %v1198
      %v1223 = vadd.f32 %v1056, %v1203
      %v1224 = vadd.f32 %v1057, %v1208
      %v1225 = vadd.f32 %v1058, %v1213
      %v1226 = vld [vmem:[#allocation2 + $0xc] sm:$0xff]
      %v1227 = vld [vmem:[#allocation2 + $0x14] sm:$0xff]
      %v1228 = vld [vmem:[#allocation2 + $0x1c] sm:$0xff]
      %v1229 = vld [vmem:[#allocation2 + $0x24] sm:$0xff]
      %v1230 = vld [vmem:[#allocation2 + $0x2c] sm:$0xff]
      %v1231 = vld [vmem:[#allocation2 + $0x34] sm:$0xff]
      %v1232 = vld [vmem:[#allocation2 + $0x3c] sm:$0xff]
      %v1233 = vld [vmem:[#allocation2 + $0x44] sm:$0xff]
      %v1234 = vld [vmem:[#allocation2 + $0x4c] sm:$0xff]
      %v1235 = vld [vmem:[#allocation2 + $0x54] sm:$0xff]
      %v1236 = vld [vmem:[%s1 + $0x50] sm:$0xff]
      %v1237 = vld [vmem:[%s1 + $0x58] sm:$0xff]
      %v1239 = vsel %vm252, %v1226, 0
      %v1242 = vsel %vm252, %v1227, 0
      %v1245 = vsel %vm252, %v1228, 0
      %v1248 = vsel %vm252, %v1229, 0
      %v1251 = vsel %vm252, %v1230, 0
      %v1254 = vsel %vm252, %v1231, 0
      %v1257 = vsel %vm252, %v1232, 0
      %v1260 = vsel %vm252, %v1233, 0
      %v1263 = vsel %vm252, %v1234, 0
      %v1266 = vsel %vm252, %v1235, 0
      %1268 = vmatprep.subr.mxu0 0.0
      %1269 = vmatpush1.msra.mxu0 0.0
      %1270 = vmatprep.subr.mxu0 0.0
      %1271 = vmatpush1.msra.mxu0 0.0
      %1272 = vmatprep.subr.mxu0 0.0
      %1273 = vmatpush1.msra.mxu0 0.0
      %1274 = vmatprep.subr.mxu0 0.0
      %1275 = vmatpush1.msra.mxu0 0.0
      %1276 = vmatprep.subr.mxu0 0.0
      %1277 = vmatpush1.msra.mxu0 0.0
      %1278 = vmatprep.subr.mxu0 0.0
      %1279 = vmatpush1.msra.mxu0 0.0
      %1280 = vmatprep.subr.mxu0 0.0
      %1281 = vmatpush1.msra.mxu0 0.0
      %1282 = vmatprep.subr.mxu0 0.0
      %1283 = vmatpush1.msra.mxu0 0.0
      %1284 = vmatprep.subr.mxu0 0.0
      %1285 = vmatpush1.msra.mxu0 0.0
      %1286 = vmatprep.subr.mxu0 0.0
      %1287 = vmatpush1.msra.mxu0 0.0
      %1288 = vmatprep.subr.mxu0 0.0
      %1289 = vmatpush1.msra.mxu0 0.0
      %1290 = vmatprep.subr.mxu0 0.0
      %1291 = vmatpush1.msra.mxu0 0.0
      %1292 = vmatprep.subr.mxu0 0.0
      %1293 = vmatpush1.msra.mxu0 0.0
      %1294 = vmatprep.subr.mxu0 0.0
      %1295 = vmatpush1.msra.mxu0 0.0
      %1296 = vmatprep.subr.mxu0 0.0
      %1297 = vmatpush1.msra.mxu0 %v1237
      %1298 = vmatprep.subr.mxu0 0.0
      %1299 = vmatpush1.msra.mxu0 %v1236
      %1300 = vmatprep.subr.mxu0 0.0
      %1301 = vmatpush2.msra.mxu0 0.0
      %1302 = vmatprep.subr.mxu0 0.0
      %1303 = vmatpush2.msra.mxu0 0.0
      %1304 = vmatprep.subr.mxu0 0.0
      %1305 = vmatpush2.msra.mxu0 0.0
      %1306 = vmatprep.subr.mxu0 0.0
      %1307 = vmatpush2.msra.mxu0 0.0
      %1308 = vmatprep.subr.mxu0 0.0
      %1309 = vmatpush2.msra.mxu0 0.0
      %1310 = vmatprep.subr.mxu0 0.0
      %1311 = vmatpush2.msra.mxu0 0.0
      %1312 = vmatprep.subr.mxu0 0.0
      %1313 = vmatpush2.msra.mxu0 0.0
      %1314 = vmatprep.subr.mxu0 0.0
      %1315 = vmatpush2.msra.mxu0 0.0
      %1316 = vmatprep.subr.mxu0 0.0
      %1317 = vmatpush2.msra.mxu0 0.0
      %1318 = vmatprep.subr.mxu0 0.0
      %1319 = vmatpush2.msra.mxu0 0.0
      %1320 = vmatprep.subr.mxu0 0.0
      %1321 = vmatpush2.msra.mxu0 0.0
      %1322 = vmatprep.subr.mxu0 0.0
      %1323 = vmatpush2.msra.mxu0 0.0
      %1324 = vmatprep.subr.mxu0 0.0
      %1325 = vmatpush2.msra.mxu0 0.0
      %1326 = vmatprep.subr.mxu0 0.0
      %1327 = vmatpush2.msra.mxu0 0.0
      %1328 = vmatprep.subr.mxu0 0.0
      %1329 = vmatpush2.msra.mxu0 0.0
      %1330 = vmatprep.subr.mxu0 0.0
      %1331 = vmatpush2.msra.mxu0 0.0
      %1332 = vmatprep.mubr.f32.mxu0 0.0
      %1333 = vmatmul.mubr.f32.gmra.mxu0 %v1239
      %v1334 = vpop.f32.mrf.mxu0
      %v1335 = vadd.f32 0.0, %v1334
      %v1336 = vpop.f32.mrf.mxu0
      %1337 = vmatprep.mubr.f32.mxu0 0.0
      %1338 = vmatmul.mubr.f32.gmra.mxu0 %v1242
      %v1339 = vpop.f32.mrf.mxu0
      %v1340 = vadd.f32 0.0, %v1339
      %v1341 = vpop.f32.mrf.mxu0
      %1342 = vmatprep.mubr.f32.mxu0 0.0
      %1343 = vmatmul.mubr.f32.gmra.mxu0 %v1245
      %v1344 = vpop.f32.mrf.mxu0
      %v1345 = vadd.f32 0.0, %v1344
      %v1346 = vpop.f32.mrf.mxu0
      %1347 = vmatprep.mubr.f32.mxu0 0.0
      %1348 = vmatmul.mubr.f32.gmra.mxu0 %v1248
      %v1349 = vpop.f32.mrf.mxu0
      %v1350 = vadd.f32 0.0, %v1349
      %v1351 = vpop.f32.mrf.mxu0
      %1352 = vmatprep.mubr.f32.mxu0 0.0
      %1353 = vmatmul.mubr.f32.gmra.mxu0 %v1251
      %v1354 = vpop.f32.mrf.mxu0
      %v1355 = vadd.f32 0.0, %v1354
      %v1356 = vpop.f32.mrf.mxu0
      %1357 = vmatprep.mubr.f32.mxu0 0.0
      %1358 = vmatmul.mubr.f32.gmra.mxu0 %v1254
      %v1359 = vpop.f32.mrf.mxu0
      %v1360 = vadd.f32 0.0, %v1359
      %v1361 = vpop.f32.mrf.mxu0
      %1362 = vmatprep.mubr.f32.mxu0 0.0
      %1363 = vmatmul.mubr.f32.gmra.mxu0 %v1257
      %v1364 = vpop.f32.mrf.mxu0
      %v1365 = vadd.f32 0.0, %v1364
      %v1366 = vpop.f32.mrf.mxu0
      %1367 = vmatprep.mubr.f32.mxu0 0.0
      %1368 = vmatmul.mubr.f32.gmra.mxu0 %v1260
      %v1369 = vpop.f32.mrf.mxu0
      %v1370 = vadd.f32 0.0, %v1369
      %v1371 = vpop.f32.mrf.mxu0
      %1372 = vmatprep.mubr.f32.mxu0 0.0
      %1373 = vmatmul.mubr.f32.gmra.mxu0 %v1263
      %v1374 = vpop.f32.mrf.mxu0
      %v1375 = vadd.f32 0.0, %v1374
      %v1376 = vpop.f32.mrf.mxu0
      %1377 = vmatprep.mubr.f32.mxu0 0.0
      %1378 = vmatmul.mubr.f32.gmra.mxu0 %v1266
      %v1379 = vpop.f32.mrf.mxu0
      %v1380 = vadd.f32 0.0, %v1379
      %v1381 = vpop.f32.mrf.mxu0
      %1382 = vdwg.mxu0
      %v1383 = vadd.f32 %v1216, %v1335
      %v1384 = vadd.f32 %v1217, %v1340
      %v1385 = vadd.f32 %v1218, %v1345
      %v1386 = vadd.f32 %v1219, %v1350
      %v1387 = vadd.f32 %v1220, %v1355
      %v1388 = vadd.f32 %v1221, %v1360
      %v1389 = vadd.f32 %v1222, %v1365
      %v1390 = vadd.f32 %v1223, %v1370
      %v1391 = vadd.f32 %v1224, %v1375
      %v1392 = vadd.f32 %v1225, %v1380
      %v1393 = vld [vmem:[#allocation2 + $0x14] sm:$0xff]
      %v1394 = vld [vmem:[#allocation2 + $0x1c] sm:$0xff]
      %v1395 = vld [vmem:[#allocation2 + $0x24] sm:$0xff]
      %v1396 = vld [vmem:[#allocation2 + $0x2c] sm:$0xff]
      %v1397 = vld [vmem:[#allocation2 + $0x34] sm:$0xff]
      %v1398 = vld [vmem:[#allocation2 + $0x3c] sm:$0xff]
      %v1399 = vld [vmem:[#allocation2 + $0x44] sm:$0xff]
      %v1400 = vld [vmem:[#allocation2 + $0x4c] sm:$0xff]
      %v1401 = vld [vmem:[#allocation2 + $0x54] sm:$0xff]
      %v1402 = vld [vmem:[#allocation2 + $0x5c] sm:$0xff]
      %v1403 = vld [vmem:[%s1 + $0x60] sm:$0xff]
      %v1404 = vld [vmem:[%s1 + $0x68] sm:$0xff]
      %v1406 = vsel %vm252, %v1393, 0
      %v1409 = vsel %vm252, %v1394, 0
      %v1412 = vsel %vm252, %v1395, 0
      %v1415 = vsel %vm252, %v1396, 0
      %v1418 = vsel %vm252, %v1397, 0
      %v1421 = vsel %vm252, %v1398, 0
      %v1424 = vsel %vm252, %v1399, 0
      %v1427 = vsel %vm252, %v1400, 0
      %v1430 = vsel %vm252, %v1401, 0
      %v1433 = vsel %vm252, %v1402, 0
      %1435 = vmatprep.subr.mxu0 0.0
      %1436 = vmatpush1.msra.mxu0 0.0
      %1437 = vmatprep.subr.mxu0 0.0
      %1438 = vmatpush1.msra.mxu0 0.0
      %1439 = vmatprep.subr.mxu0 0.0
      %1440 = vmatpush1.msra.mxu0 0.0
      %1441 = vmatprep.subr.mxu0 0.0
      %1442 = vmatpush1.msra.mxu0 0.0
      %1443 = vmatprep.subr.mxu0 0.0
      %1444 = vmatpush1.msra.mxu0 0.0
      %1445 = vmatprep.subr.mxu0 0.0
      %1446 = vmatpush1.msra.mxu0 0.0
      %1447 = vmatprep.subr.mxu0 0.0
      %1448 = vmatpush1.msra.mxu0 0.0
      %1449 = vmatprep.subr.mxu0 0.0
      %1450 = vmatpush1.msra.mxu0 0.0
      %1451 = vmatprep.subr.mxu0 0.0
      %1452 = vmatpush1.msra.mxu0 0.0
      %1453 = vmatprep.subr.mxu0 0.0
      %1454 = vmatpush1.msra.mxu0 0.0
      %1455 = vmatprep.subr.mxu0 0.0
      %1456 = vmatpush1.msra.mxu0 0.0
      %1457 = vmatprep.subr.mxu0 0.0
      %1458 = vmatpush1.msra.mxu0 0.0
      %1459 = vmatprep.subr.mxu0 0.0
      %1460 = vmatpush1.msra.mxu0 0.0
      %1461 = vmatprep.subr.mxu0 0.0
      %1462 = vmatpush1.msra.mxu0 0.0
      %1463 = vmatprep.subr.mxu0 0.0
      %1464 = vmatpush1.msra.mxu0 %v1404
      %1465 = vmatprep.subr.mxu0 0.0
      %1466 = vmatpush1.msra.mxu0 %v1403
      %1467 = vmatprep.subr.mxu0 0.0
      %1468 = vmatpush2.msra.mxu0 0.0
      %1469 = vmatprep.subr.mxu0 0.0
      %1470 = vmatpush2.msra.mxu0 0.0
      %1471 = vmatprep.subr.mxu0 0.0
      %1472 = vmatpush2.msra.mxu0 0.0
      %1473 = vmatprep.subr.mxu0 0.0
      %1474 = vmatpush2.msra.mxu0 0.0
      %1475 = vmatprep.subr.mxu0 0.0
      %1476 = vmatpush2.msra.mxu0 0.0
      %1477 = vmatprep.subr.mxu0 0.0
      %1478 = vmatpush2.msra.mxu0 0.0
      %1479 = vmatprep.subr.mxu0 0.0
      %1480 = vmatpush2.msra.mxu0 0.0
      %1481 = vmatprep.subr.mxu0 0.0
      %1482 = vmatpush2.msra.mxu0 0.0
      %1483 = vmatprep.subr.mxu0 0.0
      %1484 = vmatpush2.msra.mxu0 0.0
      %1485 = vmatprep.subr.mxu0 0.0
      %1486 = vmatpush2.msra.mxu0 0.0
      %1487 = vmatprep.subr.mxu0 0.0
      %1488 = vmatpush2.msra.mxu0 0.0
      %1489 = vmatprep.subr.mxu0 0.0
      %1490 = vmatpush2.msra.mxu0 0.0
      %1491 = vmatprep.subr.mxu0 0.0
      %1492 = vmatpush2.msra.mxu0 0.0
      %1493 = vmatprep.subr.mxu0 0.0
      %1494 = vmatpush2.msra.mxu0 0.0
      %1495 = vmatprep.subr.mxu0 0.0
      %1496 = vmatpush2.msra.mxu0 0.0
      %1497 = vmatprep.subr.mxu0 0.0
      %1498 = vmatpush2.msra.mxu0 0.0
      %1499 = vmatprep.mubr.f32.mxu0 0.0
      %1500 = vmatmul.mubr.f32.gmra.mxu0 %v1406
      %v1501 = vpop.f32.mrf.mxu0
      %v1502 = vadd.f32 0.0, %v1501
      %v1503 = vpop.f32.mrf.mxu0
      %1504 = vmatprep.mubr.f32.mxu0 0.0
      %1505 = vmatmul.mubr.f32.gmra.mxu0 %v1409
      %v1506 = vpop.f32.mrf.mxu0
      %v1507 = vadd.f32 0.0, %v1506
      %v1508 = vpop.f32.mrf.mxu0
      %1509 = vmatprep.mubr.f32.mxu0 0.0
      %1510 = vmatmul.mubr.f32.gmra.mxu0 %v1412
      %v1511 = vpop.f32.mrf.mxu0
      %v1512 = vadd.f32 0.0, %v1511
      %v1513 = vpop.f32.mrf.mxu0
      %1514 = vmatprep.mubr.f32.mxu0 0.0
      %1515 = vmatmul.mubr.f32.gmra.mxu0 %v1415
      %v1516 = vpop.f32.mrf.mxu0
      %v1517 = vadd.f32 0.0, %v1516
      %v1518 = vpop.f32.mrf.mxu0
      %1519 = vmatprep.mubr.f32.mxu0 0.0
      %1520 = vmatmul.mubr.f32.gmra.mxu0 %v1418
      %v1521 = vpop.f32.mrf.mxu0
      %v1522 = vadd.f32 0.0, %v1521
      %v1523 = vpop.f32.mrf.mxu0
      %1524 = vmatprep.mubr.f32.mxu0 0.0
      %1525 = vmatmul.mubr.f32.gmra.mxu0 %v1421
      %v1526 = vpop.f32.mrf.mxu0
      %v1527 = vadd.f32 0.0, %v1526
      %v1528 = vpop.f32.mrf.mxu0
      %1529 = vmatprep.mubr.f32.mxu0 0.0
      %1530 = vmatmul.mubr.f32.gmra.mxu0 %v1424
      %v1531 = vpop.f32.mrf.mxu0
      %v1532 = vadd.f32 0.0, %v1531
      %v1533 = vpop.f32.mrf.mxu0
      %1534 = vmatprep.mubr.f32.mxu0 0.0
      %1535 = vmatmul.mubr.f32.gmra.mxu0 %v1427
      %v1536 = vpop.f32.mrf.mxu0
      %v1537 = vadd.f32 0.0, %v1536
      %v1538 = vpop.f32.mrf.mxu0
      %1539 = vmatprep.mubr.f32.mxu0 0.0
      %1540 = vmatmul.mubr.f32.gmra.mxu0 %v1430
      %v1541 = vpop.f32.mrf.mxu0
      %v1542 = vadd.f32 0.0, %v1541
      %v1543 = vpop.f32.mrf.mxu0
      %1544 = vmatprep.mubr.f32.mxu0 0.0
      %1545 = vmatmul.mubr.f32.gmra.mxu0 %v1433
      %v1546 = vpop.f32.mrf.mxu0
      %v1547 = vadd.f32 0.0, %v1546
      %v1548 = vpop.f32.mrf.mxu0
      %1549 = vdwg.mxu0
      %v1550 = vadd.f32 %v1383, %v1502
      %v1551 = vadd.f32 %v1384, %v1507
      %v1552 = vadd.f32 %v1385, %v1512
      %v1553 = vadd.f32 %v1386, %v1517
      %v1554 = vadd.f32 %v1387, %v1522
      %v1555 = vadd.f32 %v1388, %v1527
      %v1556 = vadd.f32 %v1389, %v1532
      %v1557 = vadd.f32 %v1390, %v1537
      %v1558 = vadd.f32 %v1391, %v1542
      %v1559 = vadd.f32 %v1392, %v1547
      %v1560 = vld [vmem:[#allocation2 + $0x15] sm:$0xff]
      %v1561 = vld [vmem:[#allocation2 + $0x1d] sm:$0xff]
      %v1562 = vld [vmem:[#allocation2 + $0x25] sm:$0xff]
      %v1563 = vld [vmem:[#allocation2 + $0x2d] sm:$0xff]
      %v1564 = vld [vmem:[#allocation2 + $0x35] sm:$0xff]
      %v1565 = vld [vmem:[#allocation2 + $0x3d] sm:$0xff]
      %v1566 = vld [vmem:[#allocation2 + $0x45] sm:$0xff]
      %v1567 = vld [vmem:[#allocation2 + $0x4d] sm:$0xff]
      %v1568 = vld [vmem:[#allocation2 + $0x55] sm:$0xff]
      %v1569 = vld [vmem:[#allocation2 + $0x5d] sm:$0xff]
      %v1570 = vld [vmem:[%s1 + $0x70] sm:$0xff]
      %v1571 = vld [vmem:[%s1 + $0x78] sm:$0xff]
      %v1573 = vsel %vm252, %v1560, 0
      %v1576 = vsel %vm252, %v1561, 0
      %v1579 = vsel %vm252, %v1562, 0
      %v1582 = vsel %vm252, %v1563, 0
      %v1585 = vsel %vm252, %v1564, 0
      %v1588 = vsel %vm252, %v1565, 0
      %v1591 = vsel %vm252, %v1566, 0
      %v1594 = vsel %vm252, %v1567, 0
      %v1597 = vsel %vm252, %v1568, 0
      %v1600 = vsel %vm252, %v1569, 0
      %1602 = vmatprep.subr.mxu0 0.0
      %1603 = vmatpush1.msra.mxu0 0.0
      %1604 = vmatprep.subr.mxu0 0.0
      %1605 = vmatpush1.msra.mxu0 0.0
      %1606 = vmatprep.subr.mxu0 0.0
      %1607 = vmatpush1.msra.mxu0 0.0
      %1608 = vmatprep.subr.mxu0 0.0
      %1609 = vmatpush1.msra.mxu0 0.0
      %1610 = vmatprep.subr.mxu0 0.0
      %1611 = vmatpush1.msra.mxu0 0.0
      %1612 = vmatprep.subr.mxu0 0.0
      %1613 = vmatpush1.msra.mxu0 0.0
      %1614 = vmatprep.subr.mxu0 0.0
      %1615 = vmatpush1.msra.mxu0 0.0
      %1616 = vmatprep.subr.mxu0 0.0
      %1617 = vmatpush1.msra.mxu0 0.0
      %1618 = vmatprep.subr.mxu0 0.0
      %1619 = vmatpush1.msra.mxu0 0.0
      %1620 = vmatprep.subr.mxu0 0.0
      %1621 = vmatpush1.msra.mxu0 0.0
      %1622 = vmatprep.subr.mxu0 0.0
      %1623 = vmatpush1.msra.mxu0 0.0
      %1624 = vmatprep.subr.mxu0 0.0
      %1625 = vmatpush1.msra.mxu0 0.0
      %1626 = vmatprep.subr.mxu0 0.0
      %1627 = vmatpush1.msra.mxu0 0.0
      %1628 = vmatprep.subr.mxu0 0.0
      %1629 = vmatpush1.msra.mxu0 0.0
      %1630 = vmatprep.subr.mxu0 0.0
      %1631 = vmatpush1.msra.mxu0 %v1571
      %1632 = vmatprep.subr.mxu0 0.0
      %1633 = vmatpush1.msra.mxu0 %v1570
      %1634 = vmatprep.subr.mxu0 0.0
      %1635 = vmatpush2.msra.mxu0 0.0
      %1636 = vmatprep.subr.mxu0 0.0
      %1637 = vmatpush2.msra.mxu0 0.0
      %1638 = vmatprep.subr.mxu0 0.0
      %1639 = vmatpush2.msra.mxu0 0.0
      %1640 = vmatprep.subr.mxu0 0.0
      %1641 = vmatpush2.msra.mxu0 0.0
      %1642 = vmatprep.subr.mxu0 0.0
      %1643 = vmatpush2.msra.mxu0 0.0
      %1644 = vmatprep.subr.mxu0 0.0
      %1645 = vmatpush2.msra.mxu0 0.0
      %1646 = vmatprep.subr.mxu0 0.0
      %1647 = vmatpush2.msra.mxu0 0.0
      %1648 = vmatprep.subr.mxu0 0.0
      %1649 = vmatpush2.msra.mxu0 0.0
      %1650 = vmatprep.subr.mxu0 0.0
      %1651 = vmatpush2.msra.mxu0 0.0
      %1652 = vmatprep.subr.mxu0 0.0
      %1653 = vmatpush2.msra.mxu0 0.0
      %1654 = vmatprep.subr.mxu0 0.0
      %1655 = vmatpush2.msra.mxu0 0.0
      %1656 = vmatprep.subr.mxu0 0.0
      %1657 = vmatpush2.msra.mxu0 0.0
      %1658 = vmatprep.subr.mxu0 0.0
      %1659 = vmatpush2.msra.mxu0 0.0
      %1660 = vmatprep.subr.mxu0 0.0
      %1661 = vmatpush2.msra.mxu0 0.0
      %1662 = vmatprep.subr.mxu0 0.0
      %1663 = vmatpush2.msra.mxu0 0.0
      %1664 = vmatprep.subr.mxu0 0.0
      %1665 = vmatpush2.msra.mxu0 0.0
      %1666 = vmatprep.mubr.f32.mxu0 0.0
      %1667 = vmatmul.mubr.f32.gmra.mxu0 %v1573
      %v1668 = vpop.f32.mrf.mxu0
      %v1669 = vadd.f32 0.0, %v1668
      %v1670 = vpop.f32.mrf.mxu0
      %1671 = vmatprep.mubr.f32.mxu0 0.0
      %1672 = vmatmul.mubr.f32.gmra.mxu0 %v1576
      %v1673 = vpop.f32.mrf.mxu0
      %v1674 = vadd.f32 0.0, %v1673
      %v1675 = vpop.f32.mrf.mxu0
      %1676 = vmatprep.mubr.f32.mxu0 0.0
      %1677 = vmatmul.mubr.f32.gmra.mxu0 %v1579
      %v1678 = vpop.f32.mrf.mxu0
      %v1679 = vadd.f32 0.0, %v1678
      %v1680 = vpop.f32.mrf.mxu0
      %1681 = vmatprep.mubr.f32.mxu0 0.0
      %1682 = vmatmul.mubr.f32.gmra.mxu0 %v1582
      %v1683 = vpop.f32.mrf.mxu0
      %v1684 = vadd.f32 0.0, %v1683
      %v1685 = vpop.f32.mrf.mxu0
      %1686 = vmatprep.mubr.f32.mxu0 0.0
      %1687 = vmatmul.mubr.f32.gmra.mxu0 %v1585
      %v1688 = vpop.f32.mrf.mxu0
      %v1689 = vadd.f32 0.0, %v1688
      %v1690 = vpop.f32.mrf.mxu0
      %1691 = vmatprep.mubr.f32.mxu0 0.0
      %1692 = vmatmul.mubr.f32.gmra.mxu0 %v1588
      %v1693 = vpop.f32.mrf.mxu0
      %v1694 = vadd.f32 0.0, %v1693
      %v1695 = vpop.f32.mrf.mxu0
      %1696 = vmatprep.mubr.f32.mxu0 0.0
      %1697 = vmatmul.mubr.f32.gmra.mxu0 %v1591
      %v1698 = vpop.f32.mrf.mxu0
      %v1699 = vadd.f32 0.0, %v1698
      %v1700 = vpop.f32.mrf.mxu0
      %1701 = vmatprep.mubr.f32.mxu0 0.0
      %1702 = vmatmul.mubr.f32.gmra.mxu0 %v1594
      %v1703 = vpop.f32.mrf.mxu0
      %v1704 = vadd.f32 0.0, %v1703
      %v1705 = vpop.f32.mrf.mxu0
      %1706 = vmatprep.mubr.f32.mxu0 0.0
      %1707 = vmatmul.mubr.f32.gmra.mxu0 %v1597
      %v1708 = vpop.f32.mrf.mxu0
      %v1709 = vadd.f32 0.0, %v1708
      %v1710 = vpop.f32.mrf.mxu0
      %1711 = vmatprep.mubr.f32.mxu0 0.0
      %1712 = vmatmul.mubr.f32.gmra.mxu0 %v1600
      %v1713 = vpop.f32.mrf.mxu0
      %v1714 = vadd.f32 0.0, %v1713
      %v1715 = vpop.f32.mrf.mxu0
      %1716 = vdwg.mxu0
      %v1717 = vadd.f32 %v1550, %v1669
      %v1718 = vadd.f32 %v1551, %v1674
      %v1719 = vadd.f32 %v1552, %v1679
      %v1720 = vadd.f32 %v1553, %v1684
      %v1721 = vadd.f32 %v1554, %v1689
      %v1722 = vadd.f32 %v1555, %v1694
      %v1723 = vadd.f32 %v1556, %v1699
      %v1724 = vadd.f32 %v1557, %v1704
      %v1725 = vadd.f32 %v1558, %v1709
      %v1726 = vadd.f32 %v1559, %v1714
      %v1727 = vld [vmem:[#allocation2 + $0x16] sm:$0xff]
      %v1728 = vld [vmem:[#allocation2 + $0x1e] sm:$0xff]
      %v1729 = vld [vmem:[#allocation2 + $0x26] sm:$0xff]
      %v1730 = vld [vmem:[#allocation2 + $0x2e] sm:$0xff]
      %v1731 = vld [vmem:[#allocation2 + $0x36] sm:$0xff]
      %v1732 = vld [vmem:[#allocation2 + $0x3e] sm:$0xff]
      %v1733 = vld [vmem:[#allocation2 + $0x46] sm:$0xff]
      %v1734 = vld [vmem:[#allocation2 + $0x4e] sm:$0xff]
      %v1735 = vld [vmem:[#allocation2 + $0x56] sm:$0xff]
      %v1736 = vld [vmem:[#allocation2 + $0x5e] sm:$0xff]
      %v1737 = vld [vmem:[%s1 + $0x80] sm:$0xff]
      %v1738 = vld [vmem:[%s1 + $0x88] sm:$0xff]
      %v1740 = vsel %vm252, %v1727, 0
      %v1743 = vsel %vm252, %v1728, 0
      %v1746 = vsel %vm252, %v1729, 0
      %v1749 = vsel %vm252, %v1730, 0
      %v1752 = vsel %vm252, %v1731, 0
      %v1755 = vsel %vm252, %v1732, 0
      %v1758 = vsel %vm252, %v1733, 0
      %v1761 = vsel %vm252, %v1734, 0
      %v1764 = vsel %vm252, %v1735, 0
      %v1767 = vsel %vm252, %v1736, 0
      %1769 = vmatprep.subr.mxu0 0.0
      %1770 = vmatpush1.msra.mxu0 0.0
      %1771 = vmatprep.subr.mxu0 0.0
      %1772 = vmatpush1.msra.mxu0 0.0
      %1773 = vmatprep.subr.mxu0 0.0
      %1774 = vmatpush1.msra.mxu0 0.0
      %1775 = vmatprep.subr.mxu0 0.0
      %1776 = vmatpush1.msra.mxu0 0.0
      %1777 = vmatprep.subr.mxu0 0.0
      %1778 = vmatpush1.msra.mxu0 0.0
      %1779 = vmatprep.subr.mxu0 0.0
      %1780 = vmatpush1.msra.mxu0 0.0
      %1781 = vmatprep.subr.mxu0 0.0
      %1782 = vmatpush1.msra.mxu0 0.0
      %1783 = vmatprep.subr.mxu0 0.0
      %1784 = vmatpush1.msra.mxu0 0.0
      %1785 = vmatprep.subr.mxu0 0.0
      %1786 = vmatpush1.msra.mxu0 0.0
      %1787 = vmatprep.subr.mxu0 0.0
      %1788 = vmatpush1.msra.mxu0 0.0
      %1789 = vmatprep.subr.mxu0 0.0
      %1790 = vmatpush1.msra.mxu0 0.0
      %1791 = vmatprep.subr.mxu0 0.0
      %1792 = vmatpush1.msra.mxu0 0.0
      %1793 = vmatprep.subr.mxu0 0.0
      %1794 = vmatpush1.msra.mxu0 0.0
      %1795 = vmatprep.subr.mxu0 0.0
      %1796 = vmatpush1.msra.mxu0 0.0
      %1797 = vmatprep.subr.mxu0 0.0
      %1798 = vmatpush1.msra.mxu0 %v1738
      %1799 = vmatprep.subr.mxu0 0.0
      %1800 = vmatpush1.msra.mxu0 %v1737
      %1801 = vmatprep.subr.mxu0 0.0
      %1802 = vmatpush2.msra.mxu0 0.0
      %1803 = vmatprep.subr.mxu0 0.0
      %1804 = vmatpush2.msra.mxu0 0.0
      %1805 = vmatprep.subr.mxu0 0.0
      %1806 = vmatpush2.msra.mxu0 0.0
      %1807 = vmatprep.subr.mxu0 0.0
      %1808 = vmatpush2.msra.mxu0 0.0
      %1809 = vmatprep.subr.mxu0 0.0
      %1810 = vmatpush2.msra.mxu0 0.0
      %1811 = vmatprep.subr.mxu0 0.0
      %1812 = vmatpush2.msra.mxu0 0.0
      %1813 = vmatprep.subr.mxu0 0.0
      %1814 = vmatpush2.msra.mxu0 0.0
      %1815 = vmatprep.subr.mxu0 0.0
      %1816 = vmatpush2.msra.mxu0 0.0
      %1817 = vmatprep.subr.mxu0 0.0
      %1818 = vmatpush2.msra.mxu0 0.0
      %1819 = vmatprep.subr.mxu0 0.0
      %1820 = vmatpush2.msra.mxu0 0.0
      %1821 = vmatprep.subr.mxu0 0.0
      %1822 = vmatpush2.msra.mxu0 0.0
      %1823 = vmatprep.subr.mxu0 0.0
      %1824 = vmatpush2.msra.mxu0 0.0
      %1825 = vmatprep.subr.mxu0 0.0
      %1826 = vmatpush2.msra.mxu0 0.0
      %1827 = vmatprep.subr.mxu0 0.0
      %1828 = vmatpush2.msra.mxu0 0.0
      %1829 = vmatprep.subr.mxu0 0.0
      %1830 = vmatpush2.msra.mxu0 0.0
      %1831 = vmatprep.subr.mxu0 0.0
      %1832 = vmatpush2.msra.mxu0 0.0
      %1833 = vmatprep.mubr.f32.mxu0 0.0
      %1834 = vmatmul.mubr.f32.gmra.mxu0 %v1740
      %v1835 = vpop.f32.mrf.mxu0
      %v1836 = vadd.f32 0.0, %v1835
      %v1837 = vpop.f32.mrf.mxu0
      %1838 = vmatprep.mubr.f32.mxu0 0.0
      %1839 = vmatmul.mubr.f32.gmra.mxu0 %v1743
      %v1840 = vpop.f32.mrf.mxu0
      %v1841 = vadd.f32 0.0, %v1840
      %v1842 = vpop.f32.mrf.mxu0
      %1843 = vmatprep.mubr.f32.mxu0 0.0
      %1844 = vmatmul.mubr.f32.gmra.mxu0 %v1746
      %v1845 = vpop.f32.mrf.mxu0
      %v1846 = vadd.f32 0.0, %v1845
      %v1847 = vpop.f32.mrf.mxu0
      %1848 = vmatprep.mubr.f32.mxu0 0.0
      %1849 = vmatmul.mubr.f32.gmra.mxu0 %v1749
      %v1850 = vpop.f32.mrf.mxu0
      %v1851 = vadd.f32 0.0, %v1850
      %v1852 = vpop.f32.mrf.mxu0
      %1853 = vmatprep.mubr.f32.mxu0 0.0
      %1854 = vmatmul.mubr.f32.gmra.mxu0 %v1752
      %v1855 = vpop.f32.mrf.mxu0
      %v1856 = vadd.f32 0.0, %v1855
      %v1857 = vpop.f32.mrf.mxu0
      %1858 = vmatprep.mubr.f32.mxu0 0.0
      %1859 = vmatmul.mubr.f32.gmra.mxu0 %v1755
      %v1860 = vpop.f32.mrf.mxu0
      %v1861 = vadd.f32 0.0, %v1860
      %v1862 = vpop.f32.mrf.mxu0
      %1863 = vmatprep.mubr.f32.mxu0 0.0
      %1864 = vmatmul.mubr.f32.gmra.mxu0 %v1758
      %v1865 = vpop.f32.mrf.mxu0
      %v1866 = vadd.f32 0.0, %v1865
      %v1867 = vpop.f32.mrf.mxu0
      %1868 = vmatprep.mubr.f32.mxu0 0.0
      %1869 = vmatmul.mubr.f32.gmra.mxu0 %v1761
      %v1870 = vpop.f32.mrf.mxu0
      %v1871 = vadd.f32 0.0, %v1870
      %v1872 = vpop.f32.mrf.mxu0
      %1873 = vmatprep.mubr.f32.mxu0 0.0
      %1874 = vmatmul.mubr.f32.gmra.mxu0 %v1764
      %v1875 = vpop.f32.mrf.mxu0
      %v1876 = vadd.f32 0.0, %v1875
      %v1877 = vpop.f32.mrf.mxu0
      %1878 = vmatprep.mubr.f32.mxu0 0.0
      %1879 = vmatmul.mubr.f32.gmra.mxu0 %v1767
      %v1880 = vpop.f32.mrf.mxu0
      %v1881 = vadd.f32 0.0, %v1880
      %v1882 = vpop.f32.mrf.mxu0
      %1883 = vdwg.mxu0
      %v1884 = vadd.f32 %v1717, %v1836
      %v1885 = vadd.f32 %v1718, %v1841
      %v1886 = vadd.f32 %v1719, %v1846
      %v1887 = vadd.f32 %v1720, %v1851
      %v1888 = vadd.f32 %v1721, %v1856
      %v1889 = vadd.f32 %v1722, %v1861
      %v1890 = vadd.f32 %v1723, %v1866
      %v1891 = vadd.f32 %v1724, %v1871
      %v1892 = vadd.f32 %v1725, %v1876
      %v1893 = vadd.f32 %v1726, %v1881
      %v1894 = vld [vmem:[%s3] sm:$0x1]
      %v1896 = vlaneseq
      %v1897 = vshrl.u32 %v1896, 7
      %v1898 = vsub.s32 0, %v1897
      %v1899 = vrot.slane %v1894, %v1898
      %v1901 = vmul.f32 %v1884, %v1899
      %v1902 = vmul.f32 %v1885, %v1899
      %v1903 = vmul.f32 %v1886, %v1899
      %v1904 = vmul.f32 %v1887, %v1899
      %v1905 = vmul.f32 %v1888, %v1899
      %v1906 = vmul.f32 %v1889, %v1899
      %v1907 = vmul.f32 %v1890, %v1899
      %v1908 = vmul.f32 %v1891, %v1899
      %v1909 = vmul.f32 %v1892, %v1899
      %v1910 = vmul.f32 %v1893, %v1899
      %v1911 = vld [vmem:[%s4] sm:$0x1]
      %v1913 = vlaneseq
      %v1914 = vshrl.u32 %v1913, 7
      %v1915 = vsub.s32 0, %v1914
      %v1916 = vrot.slane %v1911, %v1915
      %v1918 = vadd.f32 %v1901, %v1916
      %v1919 = vadd.f32 %v1902, %v1916
      %v1920 = vadd.f32 %v1903, %v1916
      %v1921 = vadd.f32 %v1904, %v1916
      %v1922 = vadd.f32 %v1905, %v1916
      %v1923 = vadd.f32 %v1906, %v1916
      %v1924 = vadd.f32 %v1907, %v1916
      %v1925 = vadd.f32 %v1908, %v1916
      %v1926 = vadd.f32 %v1909, %v1916
      %v1927 = vadd.f32 %v1910, %v1916
      %v1928 = vmax.f32 %v1918, 0.0
      %v1929 = vmax.f32 %v1919, 0.0
      %v1930 = vmax.f32 %v1920, 0.0
      %v1931 = vmax.f32 %v1921, 0.0
      %v1932 = vmax.f32 %v1922, 0.0
      %v1933 = vmax.f32 %v1923, 0.0
      %v1934 = vmax.f32 %v1924, 0.0
      %v1935 = vmax.f32 %v1925, 0.0
      %v1936 = vmax.f32 %v1926, 0.0
      %v1937 = vmax.f32 %v1927, 0.0
      %v1938 = vld [vmem:[%s5] sm:$0xff]
      %v1939 = vld [vmem:[%s5 + $0x8] sm:$0xff]
      %v1940 = vld [vmem:[%s5 + $0x10] sm:$0xff]
      %v1941 = vld [vmem:[%s5 + $0x18] sm:$0xff]
      %v1942 = vld [vmem:[%s5 + $0x20] sm:$0xff]
      %v1943 = vld [vmem:[%s5 + $0x28] sm:$0xff]
      %v1944 = vld [vmem:[%s5 + $0x30] sm:$0xff]
      %v1945 = vld [vmem:[%s5 + $0x38] sm:$0xff]
      %v1946 = vld [vmem:[%s5 + $0x40] sm:$0xff]
      %v1947 = vld [vmem:[%s5 + $0x48] sm:$0xff]
      %1949 = vset.pattern.permute.xlu0 0
      %1950 = vperm.xlu0 %1949, %v1938
      %v1951 = vpop.permute.xlu0 %1950
      %1954 = vset.pattern.permute.xlu0 0
      %1955 = vperm.xlu0 %1954, %v1939
      %v1956 = vpop.permute.xlu0 %1955
      %1959 = vset.pattern.permute.xlu0 0
      %1960 = vperm.xlu0 %1959, %v1940
      %v1961 = vpop.permute.xlu0 %1960
      %1964 = vset.pattern.permute.xlu0 0
      %1965 = vperm.xlu0 %1964, %v1941
      %v1966 = vpop.permute.xlu0 %1965
      %1969 = vset.pattern.permute.xlu0 0
      %1970 = vperm.xlu0 %1969, %v1942
      %v1971 = vpop.permute.xlu0 %1970
      %1974 = vset.pattern.permute.xlu0 0
      %1975 = vperm.xlu0 %1974, %v1943
      %v1976 = vpop.permute.xlu0 %1975
      %1979 = vset.pattern.permute.xlu0 0
      %1980 = vperm.xlu0 %1979, %v1944
      %v1981 = vpop.permute.xlu0 %1980
      %1984 = vset.pattern.permute.xlu0 0
      %1985 = vperm.xlu0 %1984, %v1945
      %v1986 = vpop.permute.xlu0 %1985
      %1989 = vset.pattern.permute.xlu0 0
      %1990 = vperm.xlu0 %1989, %v1946
      %v1991 = vpop.permute.xlu0 %1990
      %1994 = vset.pattern.permute.xlu0 0
      %1995 = vperm.xlu0 %1994, %v1947
      %v1996 = vpop.permute.xlu0 %1995
      %v1998 = vmul.f32 %v1928, %v1951
      %v1999 = vmul.f32 %v1929, %v1956
      %v2000 = vmul.f32 %v1930, %v1961
      %v2001 = vmul.f32 %v1931, %v1966
      %v2002 = vmul.f32 %v1932, %v1971
      %v2003 = vmul.f32 %v1933, %v1976
      %v2004 = vmul.f32 %v1934, %v1981
      %v2005 = vmul.f32 %v1935, %v1986
      %v2006 = vmul.f32 %v1936, %v1991
      %v2007 = vmul.f32 %v1937, %v1996
      %2008 = vst.msk [vmem:[#allocation3 + $0xb] sm:$0xff] %vm256, %v1998
      %2009 = vst.msk [vmem:[#allocation3 + $0x13] sm:$0xff] %vm256, %v1999
      %2010 = vst.msk [vmem:[#allocation3 + $0x1b] sm:$0xff] %vm256, %v2000
      %2011 = vst.msk [vmem:[#allocation3 + $0x23] sm:$0xff] %vm256, %v2001
      %2012 = vst.msk [vmem:[#allocation3 + $0x2b] sm:$0xff] %vm256, %v2002
      %2013 = vst.msk [vmem:[#allocation3 + $0x33] sm:$0xff] %vm256, %v2003
      %2014 = vst.msk [vmem:[#allocation3 + $0x3b] sm:$0xff] %vm256, %v2004
      %2015 = vst.msk [vmem:[#allocation3 + $0x43] sm:$0xff] %vm256, %v2005
      %2016 = vst.msk [vmem:[#allocation3 + $0x4b] sm:$0xff] %vm256, %v2006
      %2017 = vst.msk [vmem:[#allocation3 + $0x53] sm:$0xff] %vm256, %v2007
      %v2018 = vld [vmem:[#allocation3] sm:$0xff]
      %v2019 = vld [vmem:[#allocation3 + $0x8] sm:$0xff]
      %v2020 = vld [vmem:[#allocation3 + $0x10] sm:$0xff]
      %v2021 = vld [vmem:[#allocation3 + $0x18] sm:$0xff]
      %v2022 = vld [vmem:[#allocation3 + $0x20] sm:$0xff]
      %v2023 = vld [vmem:[#allocation3 + $0x28] sm:$0xff]
      %v2024 = vld [vmem:[#allocation3 + $0x30] sm:$0xff]
      %v2025 = vld [vmem:[#allocation3 + $0x38] sm:$0xff]
      %v2026 = vld [vmem:[#allocation3 + $0x40] sm:$0xff]
      %v2027 = vld [vmem:[#allocation3 + $0x48] sm:$0xff]
      %v2028 = vld [vmem:[%s2] sm:$0xff]
      %v2029 = vld [vmem:[%s2 + $0x8] sm:$0xff]
      %v2030 = vld [vmem:[%s2 + $0x10] sm:$0xff]
      %v2031 = vld [vmem:[%s2 + $0x18] sm:$0xff]
      %v2032 = vld [vmem:[#allocation3 + $0x1] sm:$0xff]
      %v2033 = vld [vmem:[#allocation3 + $0x9] sm:$0xff]
      %v2034 = vld [vmem:[#allocation3 + $0x11] sm:$0xff]
      %v2035 = vld [vmem:[#allocation3 + $0x19] sm:$0xff]
      %v2036 = vld [vmem:[#allocation3 + $0x21] sm:$0xff]
      %v2037 = vld [vmem:[#allocation3 + $0x29] sm:$0xff]
      %v2038 = vld [vmem:[#allocation3 + $0x31] sm:$0xff]
      %v2039 = vld [vmem:[#allocation3 + $0x39] sm:$0xff]
      %v2040 = vld [vmem:[#allocation3 + $0x41] sm:$0xff]
      %v2041 = vld [vmem:[#allocation3 + $0x49] sm:$0xff]
      %v2042 = vld [vmem:[%s2 + $0x20] sm:$0xff]
      %v2043 = vld [vmem:[%s2 + $0x28] sm:$0xff]
      %v2044 = vld [vmem:[%s2 + $0x30] sm:$0xff]
      %v2045 = vld [vmem:[%s2 + $0x38] sm:$0xff]
      %v2047 = vsel %vm256, %v2032, 0
      %v2050 = vsel %vm256, %v2033, 0
      %v2053 = vsel %vm256, %v2034, 0
      %v2056 = vsel %vm256, %v2035, 0
      %v2059 = vsel %vm256, %v2036, 0
      %v2062 = vsel %vm256, %v2037, 0
      %v2065 = vsel %vm256, %v2038, 0
      %v2068 = vsel %vm256, %v2039, 0
      %v2071 = vsel %vm256, %v2040, 0
      %v2074 = vsel %vm256, %v2041, 0
      %2076 = vmatprep.subr.mxu0 0.0
      %2077 = vmatpush1.msra.mxu0 0.0
      %2078 = vmatprep.subr.mxu0 0.0
      %2079 = vmatpush1.msra.mxu0 0.0
      %2080 = vmatprep.subr.mxu0 0.0
      %2081 = vmatpush1.msra.mxu0 0.0
      %2082 = vmatprep.subr.mxu0 0.0
      %2083 = vmatpush1.msra.mxu0 0.0
      %2084 = vmatprep.subr.mxu0 0.0
      %2085 = vmatpush1.msra.mxu0 0.0
      %2086 = vmatprep.subr.mxu0 0.0
      %2087 = vmatpush1.msra.mxu0 0.0
      %2088 = vmatprep.subr.mxu0 0.0
      %2089 = vmatpush1.msra.mxu0 0.0
      %2090 = vmatprep.subr.mxu0 0.0
      %2091 = vmatpush1.msra.mxu0 0.0
      %2092 = vmatprep.subr.mxu0 0.0
      %2093 = vmatpush1.msra.mxu0 0.0
      %2094 = vmatprep.subr.mxu0 0.0
      %2095 = vmatpush1.msra.mxu0 0.0
      %2096 = vmatprep.subr.mxu0 0.0
      %2097 = vmatpush1.msra.mxu0 0.0
      %2098 = vmatprep.subr.mxu0 0.0
      %2099 = vmatpush1.msra.mxu0 0.0
      %2100 = vmatprep.subr.mxu0 0.0
      %2101 = vmatpush1.msra.mxu0 %v2045
      %2102 = vmatprep.subr.mxu0 0.0
      %2103 = vmatpush1.msra.mxu0 %v2044
      %2104 = vmatprep.subr.mxu0 0.0
      %2105 = vmatpush1.msra.mxu0 %v2043
      %2106 = vmatprep.subr.mxu0 0.0
      %2107 = vmatpush1.msra.mxu0 %v2042
      %2108 = vmatprep.subr.mxu0 0.0
      %2109 = vmatpush2.msra.mxu0 0.0
      %2110 = vmatprep.subr.mxu0 0.0
      %2111 = vmatpush2.msra.mxu0 0.0
      %2112 = vmatprep.subr.mxu0 0.0
      %2113 = vmatpush2.msra.mxu0 0.0
      %2114 = vmatprep.subr.mxu0 0.0
      %2115 = vmatpush2.msra.mxu0 0.0
      %2116 = vmatprep.subr.mxu0 0.0
      %2117 = vmatpush2.msra.mxu0 0.0
      %2118 = vmatprep.subr.mxu0 0.0
      %2119 = vmatpush2.msra.mxu0 0.0
      %2120 = vmatprep.subr.mxu0 0.0
      %2121 = vmatpush2.msra.mxu0 0.0
      %2122 = vmatprep.subr.mxu0 0.0
      %2123 = vmatpush2.msra.mxu0 0.0
      %2124 = vmatprep.subr.mxu0 0.0
      %2125 = vmatpush2.msra.mxu0 0.0
      %2126 = vmatprep.subr.mxu0 0.0
      %2127 = vmatpush2.msra.mxu0 0.0
      %2128 = vmatprep.subr.mxu0 0.0
      %2129 = vmatpush2.msra.mxu0 0.0
      %2130 = vmatprep.subr.mxu0 0.0
      %2131 = vmatpush2.msra.mxu0 0.0
      %2132 = vmatprep.subr.mxu0 0.0
      %2133 = vmatpush2.msra.mxu0 0.0
      %2134 = vmatprep.subr.mxu0 0.0
      %2135 = vmatpush2.msra.mxu0 0.0
      %2136 = vmatprep.subr.mxu0 0.0
      %2137 = vmatpush2.msra.mxu0 0.0
      %2138 = vmatprep.subr.mxu0 0.0
      %2139 = vmatpush2.msra.mxu0 0.0
      %2140 = vmatprep.mubr.f32.mxu0 0.0
      %2141 = vmatmul.mubr.f32.gmra.mxu0 %v2047
      %v2142 = vpop.f32.mrf.mxu0
      %v2143 = vadd.f32 0.0, %v2142
      %v2144 = vpop.f32.mrf.mxu0
      %2145 = vmatprep.mubr.f32.mxu0 0.0
      %2146 = vmatmul.mubr.f32.gmra.mxu0 %v2050
      %v2147 = vpop.f32.mrf.mxu0
      %v2148 = vadd.f32 0.0, %v2147
      %v2149 = vpop.f32.mrf.mxu0
      %2150 = vmatprep.mubr.f32.mxu0 0.0
      %2151 = vmatmul.mubr.f32.gmra.mxu0 %v2053
      %v2152 = vpop.f32.mrf.mxu0
      %v2153 = vadd.f32 0.0, %v2152
      %v2154 = vpop.f32.mrf.mxu0
      %2155 = vmatprep.mubr.f32.mxu0 0.0
      %2156 = vmatmul.mubr.f32.gmra.mxu0 %v2056
      %v2157 = vpop.f32.mrf.mxu0
      %v2158 = vadd.f32 0.0, %v2157
      %v2159 = vpop.f32.mrf.mxu0
      %2160 = vmatprep.mubr.f32.mxu0 0.0
      %2161 = vmatmul.mubr.f32.gmra.mxu0 %v2059
      %v2162 = vpop.f32.mrf.mxu0
      %v2163 = vadd.f32 0.0, %v2162
      %v2164 = vpop.f32.mrf.mxu0
      %2165 = vmatprep.mubr.f32.mxu0 0.0
      %2166 = vmatmul.mubr.f32.gmra.mxu0 %v2062
      %v2167 = vpop.f32.mrf.mxu0
      %v2168 = vadd.f32 0.0, %v2167
      %v2169 = vpop.f32.mrf.mxu0
      %2170 = vmatprep.mubr.f32.mxu0 0.0
      %2171 = vmatmul.mubr.f32.gmra.mxu0 %v2065
      %v2172 = vpop.f32.mrf.mxu0
      %v2173 = vadd.f32 0.0, %v2172
      %v2174 = vpop.f32.mrf.mxu0
      %2175 = vmatprep.mubr.f32.mxu0 0.0
      %2176 = vmatmul.mubr.f32.gmra.mxu0 %v2068
      %v2177 = vpop.f32.mrf.mxu0
      %v2178 = vadd.f32 0.0, %v2177
      %v2179 = vpop.f32.mrf.mxu0
      %2180 = vmatprep.mubr.f32.mxu0 0.0
      %2181 = vmatmul.mubr.f32.gmra.mxu0 %v2071
      %v2182 = vpop.f32.mrf.mxu0
      %v2183 = vadd.f32 0.0, %v2182
      %v2184 = vpop.f32.mrf.mxu0
      %2185 = vmatprep.mubr.f32.mxu0 0.0
      %2186 = vmatmul.mubr.f32.gmra.mxu0 %v2074
      %v2187 = vpop.f32.mrf.mxu0
      %v2188 = vadd.f32 0.0, %v2187
      %v2189 = vpop.f32.mrf.mxu0
      %2190 = vdwg.mxu0
      %v2192 = vsel %vm256, %v2018, 0
      %v2195 = vsel %vm256, %v2019, 0
      %v2198 = vsel %vm256, %v2020, 0
      %v2201 = vsel %vm256, %v2021, 0
      %v2204 = vsel %vm256, %v2022, 0
      %v2207 = vsel %vm256, %v2023, 0
      %v2210 = vsel %vm256, %v2024, 0
      %v2213 = vsel %vm256, %v2025, 0
      %v2216 = vsel %vm256, %v2026, 0
      %v2219 = vsel %vm256, %v2027, 0
      %2221 = vmatprep.subr.mxu0 0.0
      %2222 = vmatpush1.msra.mxu0 0.0
      %2223 = vmatprep.subr.mxu0 0.0
      %2224 = vmatpush1.msra.mxu0 0.0
      %2225 = vmatprep.subr.mxu0 0.0
      %2226 = vmatpush1.msra.mxu0 0.0
      %2227 = vmatprep.subr.mxu0 0.0
      %2228 = vmatpush1.msra.mxu0 0.0
      %2229 = vmatprep.subr.mxu0 0.0
      %2230 = vmatpush1.msra.mxu0 0.0
      %2231 = vmatprep.subr.mxu0 0.0
      %2232 = vmatpush1.msra.mxu0 0.0
      %2233 = vmatprep.subr.mxu0 0.0
      %2234 = vmatpush1.msra.mxu0 0.0
      %2235 = vmatprep.subr.mxu0 0.0
      %2236 = vmatpush1.msra.mxu0 0.0
      %2237 = vmatprep.subr.mxu0 0.0
      %2238 = vmatpush1.msra.mxu0 0.0
      %2239 = vmatprep.subr.mxu0 0.0
      %2240 = vmatpush1.msra.mxu0 0.0
      %2241 = vmatprep.subr.mxu0 0.0
      %2242 = vmatpush1.msra.mxu0 0.0
      %2243 = vmatprep.subr.mxu0 0.0
      %2244 = vmatpush1.msra.mxu0 0.0
      %2245 = vmatprep.subr.mxu0 0.0
      %2246 = vmatpush1.msra.mxu0 %v2031
      %2247 = vmatprep.subr.mxu0 0.0
      %2248 = vmatpush1.msra.mxu0 %v2030
      %2249 = vmatprep.subr.mxu0 0.0
      %2250 = vmatpush1.msra.mxu0 %v2029
      %2251 = vmatprep.subr.mxu0 0.0
      %2252 = vmatpush1.msra.mxu0 %v2028
      %2253 = vmatprep.subr.mxu0 0.0
      %2254 = vmatpush2.msra.mxu0 0.0
      %2255 = vmatprep.subr.mxu0 0.0
      %2256 = vmatpush2.msra.mxu0 0.0
      %2257 = vmatprep.subr.mxu0 0.0
      %2258 = vmatpush2.msra.mxu0 0.0
      %2259 = vmatprep.subr.mxu0 0.0
      %2260 = vmatpush2.msra.mxu0 0.0
      %2261 = vmatprep.subr.mxu0 0.0
      %2262 = vmatpush2.msra.mxu0 0.0
      %2263 = vmatprep.subr.mxu0 0.0
      %2264 = vmatpush2.msra.mxu0 0.0
      %2265 = vmatprep.subr.mxu0 0.0
      %2266 = vmatpush2.msra.mxu0 0.0
      %2267 = vmatprep.subr.mxu0 0.0
      %2268 = vmatpush2.msra.mxu0 0.0
      %2269 = vmatprep.subr.mxu0 0.0
      %2270 = vmatpush2.msra.mxu0 0.0
      %2271 = vmatprep.subr.mxu0 0.0
      %2272 = vmatpush2.msra.mxu0 0.0
      %2273 = vmatprep.subr.mxu0 0.0
      %2274 = vmatpush2.msra.mxu0 0.0
      %2275 = vmatprep.subr.mxu0 0.0
      %2276 = vmatpush2.msra.mxu0 0.0
      %2277 = vmatprep.subr.mxu0 0.0
      %2278 = vmatpush2.msra.mxu0 0.0
      %2279 = vmatprep.subr.mxu0 0.0
      %2280 = vmatpush2.msra.mxu0 0.0
      %2281 = vmatprep.subr.mxu0 0.0
      %2282 = vmatpush2.msra.mxu0 0.0
      %2283 = vmatprep.subr.mxu0 0.0
      %2284 = vmatpush2.msra.mxu0 0.0
      %2285 = vmatprep.mubr.f32.mxu0 0.0
      %2286 = vmatmul.mubr.f32.gmra.mxu0 %v2192
      %v2287 = vpop.f32.mrf.mxu0
      %v2288 = vadd.f32 %v2143, %v2287
      %v2289 = vpop.f32.mrf.mxu0
      %2290 = vmatprep.mubr.f32.mxu0 0.0
      %2291 = vmatmul.mubr.f32.gmra.mxu0 %v2195
      %v2292 = vpop.f32.mrf.mxu0
      %v2293 = vadd.f32 %v2148, %v2292
      %v2294 = vpop.f32.mrf.mxu0
      %2295 = vmatprep.mubr.f32.mxu0 0.0
      %2296 = vmatmul.mubr.f32.gmra.mxu0 %v2198
      %v2297 = vpop.f32.mrf.mxu0
      %v2298 = vadd.f32 %v2153, %v2297
      %v2299 = vpop.f32.mrf.mxu0
      %2300 = vmatprep.mubr.f32.mxu0 0.0
      %2301 = vmatmul.mubr.f32.gmra.mxu0 %v2201
      %v2302 = vpop.f32.mrf.mxu0
      %v2303 = vadd.f32 %v2158, %v2302
      %v2304 = vpop.f32.mrf.mxu0
      %2305 = vmatprep.mubr.f32.mxu0 0.0
      %2306 = vmatmul.mubr.f32.gmra.mxu0 %v2204
      %v2307 = vpop.f32.mrf.mxu0
      %v2308 = vadd.f32 %v2163, %v2307
      %v2309 = vpop.f32.mrf.mxu0
      %2310 = vmatprep.mubr.f32.mxu0 0.0
      %2311 = vmatmul.mubr.f32.gmra.mxu0 %v2207
      %v2312 = vpop.f32.mrf.mxu0
      %v2313 = vadd.f32 %v2168, %v2312
      %v2314 = vpop.f32.mrf.mxu0
      %2315 = vmatprep.mubr.f32.mxu0 0.0
      %2316 = vmatmul.mubr.f32.gmra.mxu0 %v2210
      %v2317 = vpop.f32.mrf.mxu0
      %v2318 = vadd.f32 %v2173, %v2317
      %v2319 = vpop.f32.mrf.mxu0
      %2320 = vmatprep.mubr.f32.mxu0 0.0
      %2321 = vmatmul.mubr.f32.gmra.mxu0 %v2213
      %v2322 = vpop.f32.mrf.mxu0
      %v2323 = vadd.f32 %v2178, %v2322
      %v2324 = vpop.f32.mrf.mxu0
      %2325 = vmatprep.mubr.f32.mxu0 0.0
      %2326 = vmatmul.mubr.f32.gmra.mxu0 %v2216
      %v2327 = vpop.f32.mrf.mxu0
      %v2328 = vadd.f32 %v2183, %v2327
      %v2329 = vpop.f32.mrf.mxu0
      %2330 = vmatprep.mubr.f32.mxu0 0.0
      %2331 = vmatmul.mubr.f32.gmra.mxu0 %v2219
      %v2332 = vpop.f32.mrf.mxu0
      %v2333 = vadd.f32 %v2188, %v2332
      %v2334 = vpop.f32.mrf.mxu0
      %2335 = vdwg.mxu0
      %v2336 = vld [vmem:[#allocation3 + $0x2] sm:$0xff]
      %v2337 = vld [vmem:[#allocation3 + $0xa] sm:$0xff]
      %v2338 = vld [vmem:[#allocation3 + $0x12] sm:$0xff]
      %v2339 = vld [vmem:[#allocation3 + $0x1a] sm:$0xff]
      %v2340 = vld [vmem:[#allocation3 + $0x22] sm:$0xff]
      %v2341 = vld [vmem:[#allocation3 + $0x2a] sm:$0xff]
      %v2342 = vld [vmem:[#allocation3 + $0x32] sm:$0xff]
      %v2343 = vld [vmem:[#allocation3 + $0x3a] sm:$0xff]
      %v2344 = vld [vmem:[#allocation3 + $0x42] sm:$0xff]
      %v2345 = vld [vmem:[#allocation3 + $0x4a] sm:$0xff]
      %v2346 = vld [vmem:[%s2 + $0x40] sm:$0xff]
      %v2347 = vld [vmem:[%s2 + $0x48] sm:$0xff]
      %v2348 = vld [vmem:[%s2 + $0x50] sm:$0xff]
      %v2349 = vld [vmem:[%s2 + $0x58] sm:$0xff]
      %v2351 = vsel %vm256, %v2336, 0
      %v2354 = vsel %vm256, %v2337, 0
      %v2357 = vsel %vm256, %v2338, 0
      %v2360 = vsel %vm256, %v2339, 0
      %v2363 = vsel %vm256, %v2340, 0
      %v2366 = vsel %vm256, %v2341, 0
      %v2369 = vsel %vm256, %v2342, 0
      %v2372 = vsel %vm256, %v2343, 0
      %v2375 = vsel %vm256, %v2344, 0
      %v2378 = vsel %vm256, %v2345, 0
      %2380 = vmatprep.subr.mxu0 0.0
      %2381 = vmatpush1.msra.mxu0 0.0
      %2382 = vmatprep.subr.mxu0 0.0
      %2383 = vmatpush1.msra.mxu0 0.0
      %2384 = vmatprep.subr.mxu0 0.0
      %2385 = vmatpush1.msra.mxu0 0.0
      %2386 = vmatprep.subr.mxu0 0.0
      %2387 = vmatpush1.msra.mxu0 0.0
      %2388 = vmatprep.subr.mxu0 0.0
      %2389 = vmatpush1.msra.mxu0 0.0
      %2390 = vmatprep.subr.mxu0 0.0
      %2391 = vmatpush1.msra.mxu0 0.0
      %2392 = vmatprep.subr.mxu0 0.0
      %2393 = vmatpush1.msra.mxu0 0.0
      %2394 = vmatprep.subr.mxu0 0.0
      %2395 = vmatpush1.msra.mxu0 0.0
      %2396 = vmatprep.subr.mxu0 0.0
      %2397 = vmatpush1.msra.mxu0 0.0
      %2398 = vmatprep.subr.mxu0 0.0
      %2399 = vmatpush1.msra.mxu0 0.0
      %2400 = vmatprep.subr.mxu0 0.0
      %2401 = vmatpush1.msra.mxu0 0.0
      %2402 = vmatprep.subr.mxu0 0.0
      %2403 = vmatpush1.msra.mxu0 0.0
      %2404 = vmatprep.subr.mxu0 0.0
      %2405 = vmatpush1.msra.mxu0 %v2349
      %2406 = vmatprep.subr.mxu0 0.0
      %2407 = vmatpush1.msra.mxu0 %v2348
      %2408 = vmatprep.subr.mxu0 0.0
      %2409 = vmatpush1.msra.mxu0 %v2347
      %2410 = vmatprep.subr.mxu0 0.0
      %2411 = vmatpush1.msra.mxu0 %v2346
      %2412 = vmatprep.subr.mxu0 0.0
      %2413 = vmatpush2.msra.mxu0 0.0
      %2414 = vmatprep.subr.mxu0 0.0
      %2415 = vmatpush2.msra.mxu0 0.0
      %2416 = vmatprep.subr.mxu0 0.0
      %2417 = vmatpush2.msra.mxu0 0.0
      %2418 = vmatprep.subr.mxu0 0.0
      %2419 = vmatpush2.msra.mxu0 0.0
      %2420 = vmatprep.subr.mxu0 0.0
      %2421 = vmatpush2.msra.mxu0 0.0
      %2422 = vmatprep.subr.mxu0 0.0
      %2423 = vmatpush2.msra.mxu0 0.0
      %2424 = vmatprep.subr.mxu0 0.0
      %2425 = vmatpush2.msra.mxu0 0.0
      %2426 = vmatprep.subr.mxu0 0.0
      %2427 = vmatpush2.msra.mxu0 0.0
      %2428 = vmatprep.subr.mxu0 0.0
      %2429 = vmatpush2.msra.mxu0 0.0
      %2430 = vmatprep.subr.mxu0 0.0
      %2431 = vmatpush2.msra.mxu0 0.0
      %2432 = vmatprep.subr.mxu0 0.0
      %2433 = vmatpush2.msra.mxu0 0.0
      %2434 = vmatprep.subr.mxu0 0.0
      %2435 = vmatpush2.msra.mxu0 0.0
      %2436 = vmatprep.subr.mxu0 0.0
      %2437 = vmatpush2.msra.mxu0 0.0
      %2438 = vmatprep.subr.mxu0 0.0
      %2439 = vmatpush2.msra.mxu0 0.0
      %2440 = vmatprep.subr.mxu0 0.0
      %2441 = vmatpush2.msra.mxu0 0.0
      %2442 = vmatprep.subr.mxu0 0.0
      %2443 = vmatpush2.msra.mxu0 0.0
      %2444 = vmatprep.mubr.f32.mxu0 0.0
      %2445 = vmatmul.mubr.f32.gmra.mxu0 %v2351
      %v2446 = vpop.f32.mrf.mxu0
      %v2447 = vadd.f32 0.0, %v2446
      %v2448 = vpop.f32.mrf.mxu0
      %2449 = vmatprep.mubr.f32.mxu0 0.0
      %2450 = vmatmul.mubr.f32.gmra.mxu0 %v2354
      %v2451 = vpop.f32.mrf.mxu0
      %v2452 = vadd.f32 0.0, %v2451
      %v2453 = vpop.f32.mrf.mxu0
      %2454 = vmatprep.mubr.f32.mxu0 0.0
      %2455 = vmatmul.mubr.f32.gmra.mxu0 %v2357
      %v2456 = vpop.f32.mrf.mxu0
      %v2457 = vadd.f32 0.0, %v2456
      %v2458 = vpop.f32.mrf.mxu0
      %2459 = vmatprep.mubr.f32.mxu0 0.0
      %2460 = vmatmul.mubr.f32.gmra.mxu0 %v2360
      %v2461 = vpop.f32.mrf.mxu0
      %v2462 = vadd.f32 0.0, %v2461
      %v2463 = vpop.f32.mrf.mxu0
      %2464 = vmatprep.mubr.f32.mxu0 0.0
      %2465 = vmatmul.mubr.f32.gmra.mxu0 %v2363
      %v2466 = vpop.f32.mrf.mxu0
      %v2467 = vadd.f32 0.0, %v2466
      %v2468 = vpop.f32.mrf.mxu0
      %2469 = vmatprep.mubr.f32.mxu0 0.0
      %2470 = vmatmul.mubr.f32.gmra.mxu0 %v2366
      %v2471 = vpop.f32.mrf.mxu0
      %v2472 = vadd.f32 0.0, %v2471
      %v2473 = vpop.f32.mrf.mxu0
      %2474 = vmatprep.mubr.f32.mxu0 0.0
      %2475 = vmatmul.mubr.f32.gmra.mxu0 %v2369
      %v2476 = vpop.f32.mrf.mxu0
      %v2477 = vadd.f32 0.0, %v2476
      %v2478 = vpop.f32.mrf.mxu0
      %2479 = vmatprep.mubr.f32.mxu0 0.0
      %2480 = vmatmul.mubr.f32.gmra.mxu0 %v2372
      %v2481 = vpop.f32.mrf.mxu0
      %v2482 = vadd.f32 0.0, %v2481
      %v2483 = vpop.f32.mrf.mxu0
      %2484 = vmatprep.mubr.f32.mxu0 0.0
      %2485 = vmatmul.mubr.f32.gmra.mxu0 %v2375
      %v2486 = vpop.f32.mrf.mxu0
      %v2487 = vadd.f32 0.0, %v2486
      %v2488 = vpop.f32.mrf.mxu0
      %2489 = vmatprep.mubr.f32.mxu0 0.0
      %2490 = vmatmul.mubr.f32.gmra.mxu0 %v2378
      %v2491 = vpop.f32.mrf.mxu0
      %v2492 = vadd.f32 0.0, %v2491
      %v2493 = vpop.f32.mrf.mxu0
      %2494 = vdwg.mxu0
      %v2495 = vadd.f32 %v2288, %v2447
      %v2496 = vadd.f32 %v2293, %v2452
      %v2497 = vadd.f32 %v2298, %v2457
      %v2498 = vadd.f32 %v2303, %v2462
      %v2499 = vadd.f32 %v2308, %v2467
      %v2500 = vadd.f32 %v2313, %v2472
      %v2501 = vadd.f32 %v2318, %v2477
      %v2502 = vadd.f32 %v2323, %v2482
      %v2503 = vadd.f32 %v2328, %v2487
      %v2504 = vadd.f32 %v2333, %v2492
      %v2505 = vld [vmem:[#allocation3 + $0xa] sm:$0xff]
      %v2506 = vld [vmem:[#allocation3 + $0x12] sm:$0xff]
      %v2507 = vld [vmem:[#allocation3 + $0x1a] sm:$0xff]
      %v2508 = vld [vmem:[#allocation3 + $0x22] sm:$0xff]
      %v2509 = vld [vmem:[#allocation3 + $0x2a] sm:$0xff]
      %v2510 = vld [vmem:[#allocation3 + $0x32] sm:$0xff]
      %v2511 = vld [vmem:[#allocation3 + $0x3a] sm:$0xff]
      %v2512 = vld [vmem:[#allocation3 + $0x42] sm:$0xff]
      %v2513 = vld [vmem:[#allocation3 + $0x4a] sm:$0xff]
      %v2514 = vld [vmem:[#allocation3 + $0x52] sm:$0xff]
      %v2515 = vld [vmem:[%s2 + $0x60] sm:$0xff]
      %v2516 = vld [vmem:[%s2 + $0x68] sm:$0xff]
      %v2517 = vld [vmem:[%s2 + $0x70] sm:$0xff]
      %v2518 = vld [vmem:[%s2 + $0x78] sm:$0xff]
      %v2520 = vsel %vm256, %v2505, 0
      %v2523 = vsel %vm256, %v2506, 0
      %v2526 = vsel %vm256, %v2507, 0
      %v2529 = vsel %vm256, %v2508, 0
      %v2532 = vsel %vm256, %v2509, 0
      %v2535 = vsel %vm256, %v2510, 0
      %v2538 = vsel %vm256, %v2511, 0
      %v2541 = vsel %vm256, %v2512, 0
      %v2544 = vsel %vm256, %v2513, 0
      %v2547 = vsel %vm256, %v2514, 0
      %2549 = vmatprep.subr.mxu0 0.0
      %2550 = vmatpush1.msra.mxu0 0.0
      %2551 = vmatprep.subr.mxu0 0.0
      %2552 = vmatpush1.msra.mxu0 0.0
      %2553 = vmatprep.subr.mxu0 0.0
      %2554 = vmatpush1.msra.mxu0 0.0
      %2555 = vmatprep.subr.mxu0 0.0
      %2556 = vmatpush1.msra.mxu0 0.0
      %2557 = vmatprep.subr.mxu0 0.0
      %2558 = vmatpush1.msra.mxu0 0.0
      %2559 = vmatprep.subr.mxu0 0.0
      %2560 = vmatpush1.msra.mxu0 0.0
      %2561 = vmatprep.subr.mxu0 0.0
      %2562 = vmatpush1.msra.mxu0 0.0
      %2563 = vmatprep.subr.mxu0 0.0
      %2564 = vmatpush1.msra.mxu0 0.0
      %2565 = vmatprep.subr.mxu0 0.0
      %2566 = vmatpush1.msra.mxu0 0.0
      %2567 = vmatprep.subr.mxu0 0.0
      %2568 = vmatpush1.msra.mxu0 0.0
      %2569 = vmatprep.subr.mxu0 0.0
      %2570 = vmatpush1.msra.mxu0 0.0
      %2571 = vmatprep.subr.mxu0 0.0
      %2572 = vmatpush1.msra.mxu0 0.0
      %2573 = vmatprep.subr.mxu0 0.0
      %2574 = vmatpush1.msra.mxu0 %v2518
      %2575 = vmatprep.subr.mxu0 0.0
      %2576 = vmatpush1.msra.mxu0 %v2517
      %2577 = vmatprep.subr.mxu0 0.0
      %2578 = vmatpush1.msra.mxu0 %v2516
      %2579 = vmatprep.subr.mxu0 0.0
      %2580 = vmatpush1.msra.mxu0 %v2515
      %2581 = vmatprep.subr.mxu0 0.0
      %2582 = vmatpush2.msra.mxu0 0.0
      %2583 = vmatprep.subr.mxu0 0.0
      %2584 = vmatpush2.msra.mxu0 0.0
      %2585 = vmatprep.subr.mxu0 0.0
      %2586 = vmatpush2.msra.mxu0 0.0
      %2587 = vmatprep.subr.mxu0 0.0
      %2588 = vmatpush2.msra.mxu0 0.0
      %2589 = vmatprep.subr.mxu0 0.0
      %2590 = vmatpush2.msra.mxu0 0.0
      %2591 = vmatprep.subr.mxu0 0.0
      %2592 = vmatpush2.msra.mxu0 0.0
      %2593 = vmatprep.subr.mxu0 0.0
      %2594 = vmatpush2.msra.mxu0 0.0
      %2595 = vmatprep.subr.mxu0 0.0
      %2596 = vmatpush2.msra.mxu0 0.0
      %2597 = vmatprep.subr.mxu0 0.0
      %2598 = vmatpush2.msra.mxu0 0.0
      %2599 = vmatprep.subr.mxu0 0.0
      %2600 = vmatpush2.msra.mxu0 0.0
      %2601 = vmatprep.subr.mxu0 0.0
      %2602 = vmatpush2.msra.mxu0 0.0
      %2603 = vmatprep.subr.mxu0 0.0
      %2604 = vmatpush2.msra.mxu0 0.0
      %2605 = vmatprep.subr.mxu0 0.0
      %2606 = vmatpush2.msra.mxu0 0.0
      %2607 = vmatprep.subr.mxu0 0.0
      %2608 = vmatpush2.msra.mxu0 0.0
      %2609 = vmatprep.subr.mxu0 0.0
      %2610 = vmatpush2.msra.mxu0 0.0
      %2611 = vmatprep.subr.mxu0 0.0
      %2612 = vmatpush2.msra.mxu0 0.0
      %2613 = vmatprep.mubr.f32.mxu0 0.0
      %2614 = vmatmul.mubr.f32.gmra.mxu0 %v2520
      %v2615 = vpop.f32.mrf.mxu0
      %v2616 = vadd.f32 0.0, %v2615
      %v2617 = vpop.f32.mrf.mxu0
      %2618 = vmatprep.mubr.f32.mxu0 0.0
      %2619 = vmatmul.mubr.f32.gmra.mxu0 %v2523
      %v2620 = vpop.f32.mrf.mxu0
      %v2621 = vadd.f32 0.0, %v2620
      %v2622 = vpop.f32.mrf.mxu0
      %2623 = vmatprep.mubr.f32.mxu0 0.0
      %2624 = vmatmul.mubr.f32.gmra.mxu0 %v2526
      %v2625 = vpop.f32.mrf.mxu0
      %v2626 = vadd.f32 0.0, %v2625
      %v2627 = vpop.f32.mrf.mxu0
      %2628 = vmatprep.mubr.f32.mxu0 0.0
      %2629 = vmatmul.mubr.f32.gmra.mxu0 %v2529
      %v2630 = vpop.f32.mrf.mxu0
      %v2631 = vadd.f32 0.0, %v2630
      %v2632 = vpop.f32.mrf.mxu0
      %2633 = vmatprep.mubr.f32.mxu0 0.0
      %2634 = vmatmul.mubr.f32.gmra.mxu0 %v2532
      %v2635 = vpop.f32.mrf.mxu0
      %v2636 = vadd.f32 0.0, %v2635
      %v2637 = vpop.f32.mrf.mxu0
      %2638 = vmatprep.mubr.f32.mxu0 0.0
      %2639 = vmatmul.mubr.f32.gmra.mxu0 %v2535
      %v2640 = vpop.f32.mrf.mxu0
      %v2641 = vadd.f32 0.0, %v2640
      %v2642 = vpop.f32.mrf.mxu0
      %2643 = vmatprep.mubr.f32.mxu0 0.0
      %2644 = vmatmul.mubr.f32.gmra.mxu0 %v2538
      %v2645 = vpop.f32.mrf.mxu0
      %v2646 = vadd.f32 0.0, %v2645
      %v2647 = vpop.f32.mrf.mxu0
      %2648 = vmatprep.mubr.f32.mxu0 0.0
      %2649 = vmatmul.mubr.f32.gmra.mxu0 %v2541
      %v2650 = vpop.f32.mrf.mxu0
      %v2651 = vadd.f32 0.0, %v2650
      %v2652 = vpop.f32.mrf.mxu0
      %2653 = vmatprep.mubr.f32.mxu0 0.0
      %2654 = vmatmul.mubr.f32.gmra.mxu0 %v2544
      %v2655 = vpop.f32.mrf.mxu0
      %v2656 = vadd.f32 0.0, %v2655
      %v2657 = vpop.f32.mrf.mxu0
      %2658 = vmatprep.mubr.f32.mxu0 0.0
      %2659 = vmatmul.mubr.f32.gmra.mxu0 %v2547
      %v2660 = vpop.f32.mrf.mxu0
      %v2661 = vadd.f32 0.0, %v2660
      %v2662 = vpop.f32.mrf.mxu0
      %2663 = vdwg.mxu0
      %v2664 = vadd.f32 %v2495, %v2616
      %v2665 = vadd.f32 %v2496, %v2621
      %v2666 = vadd.f32 %v2497, %v2626
      %v2667 = vadd.f32 %v2498, %v2631
      %v2668 = vadd.f32 %v2499, %v2636
      %v2669 = vadd.f32 %v2500, %v2641
      %v2670 = vadd.f32 %v2501, %v2646
      %v2671 = vadd.f32 %v2502, %v2651
      %v2672 = vadd.f32 %v2503, %v2656
      %v2673 = vadd.f32 %v2504, %v2661
      %v2674 = vld [vmem:[#allocation3 + $0xb] sm:$0xff]
      %v2675 = vld [vmem:[#allocation3 + $0x13] sm:$0xff]
      %v2676 = vld [vmem:[#allocation3 + $0x1b] sm:$0xff]
      %v2677 = vld [vmem:[#allocation3 + $0x23] sm:$0xff]
      %v2678 = vld [vmem:[#allocation3 + $0x2b] sm:$0xff]
      %v2679 = vld [vmem:[#allocation3 + $0x33] sm:$0xff]
      %v2680 = vld [vmem:[#allocation3 + $0x3b] sm:$0xff]
      %v2681 = vld [vmem:[#allocation3 + $0x43] sm:$0xff]
      %v2682 = vld [vmem:[#allocation3 + $0x4b] sm:$0xff]
      %v2683 = vld [vmem:[#allocation3 + $0x53] sm:$0xff]
      %v2684 = vld [vmem:[%s2 + $0x80] sm:$0xff]
      %v2685 = vld [vmem:[%s2 + $0x88] sm:$0xff]
      %v2686 = vld [vmem:[%s2 + $0x90] sm:$0xff]
      %v2687 = vld [vmem:[%s2 + $0x98] sm:$0xff]
      %v2689 = vsel %vm256, %v2674, 0
      %v2692 = vsel %vm256, %v2675, 0
      %v2695 = vsel %vm256, %v2676, 0
      %v2698 = vsel %vm256, %v2677, 0
      %v2701 = vsel %vm256, %v2678, 0
      %v2704 = vsel %vm256, %v2679, 0
      %v2707 = vsel %vm256, %v2680, 0
      %v2710 = vsel %vm256, %v2681, 0
      %v2713 = vsel %vm256, %v2682, 0
      %v2716 = vsel %vm256, %v2683, 0
      %2718 = vmatprep.subr.mxu0 0.0
      %2719 = vmatpush1.msra.mxu0 0.0
      %2720 = vmatprep.subr.mxu0 0.0
      %2721 = vmatpush1.msra.mxu0 0.0
      %2722 = vmatprep.subr.mxu0 0.0
      %2723 = vmatpush1.msra.mxu0 0.0
      %2724 = vmatprep.subr.mxu0 0.0
      %2725 = vmatpush1.msra.mxu0 0.0
      %2726 = vmatprep.subr.mxu0 0.0
      %2727 = vmatpush1.msra.mxu0 0.0
      %2728 = vmatprep.subr.mxu0 0.0
      %2729 = vmatpush1.msra.mxu0 0.0
      %2730 = vmatprep.subr.mxu0 0.0
      %2731 = vmatpush1.msra.mxu0 0.0
      %2732 = vmatprep.subr.mxu0 0.0
      %2733 = vmatpush1.msra.mxu0 0.0
      %2734 = vmatprep.subr.mxu0 0.0
      %2735 = vmatpush1.msra.mxu0 0.0
      %2736 = vmatprep.subr.mxu0 0.0
      %2737 = vmatpush1.msra.mxu0 0.0
      %2738 = vmatprep.subr.mxu0 0.0
      %2739 = vmatpush1.msra.mxu0 0.0
      %2740 = vmatprep.subr.mxu0 0.0
      %2741 = vmatpush1.msra.mxu0 0.0
      %2742 = vmatprep.subr.mxu0 0.0
      %2743 = vmatpush1.msra.mxu0 %v2687
      %2744 = vmatprep.subr.mxu0 0.0
      %2745 = vmatpush1.msra.mxu0 %v2686
      %2746 = vmatprep.subr.mxu0 0.0
      %2747 = vmatpush1.msra.mxu0 %v2685
      %2748 = vmatprep.subr.mxu0 0.0
      %2749 = vmatpush1.msra.mxu0 %v2684
      %2750 = vmatprep.subr.mxu0 0.0
      %2751 = vmatpush2.msra.mxu0 0.0
      %2752 = vmatprep.subr.mxu0 0.0
      %2753 = vmatpush2.msra.mxu0 0.0
      %2754 = vmatprep.subr.mxu0 0.0
      %2755 = vmatpush2.msra.mxu0 0.0
      %2756 = vmatprep.subr.mxu0 0.0
      %2757 = vmatpush2.msra.mxu0 0.0
      %2758 = vmatprep.subr.mxu0 0.0
      %2759 = vmatpush2.msra.mxu0 0.0
      %2760 = vmatprep.subr.mxu0 0.0
      %2761 = vmatpush2.msra.mxu0 0.0
      %2762 = vmatprep.subr.mxu0 0.0
      %2763 = vmatpush2.msra.mxu0 0.0
      %2764 = vmatprep.subr.mxu0 0.0
      %2765 = vmatpush2.msra.mxu0 0.0
      %2766 = vmatprep.subr.mxu0 0.0
      %2767 = vmatpush2.msra.mxu0 0.0
      %2768 = vmatprep.subr.mxu0 0.0
      %2769 = vmatpush2.msra.mxu0 0.0
      %2770 = vmatprep.subr.mxu0 0.0
      %2771 = vmatpush2.msra.mxu0 0.0
      %2772 = vmatprep.subr.mxu0 0.0
      %2773 = vmatpush2.msra.mxu0 0.0
      %2774 = vmatprep.subr.mxu0 0.0
      %2775 = vmatpush2.msra.mxu0 0.0
      %2776 = vmatprep.subr.mxu0 0.0
      %2777 = vmatpush2.msra.mxu0 0.0
      %2778 = vmatprep.subr.mxu0 0.0
      %2779 = vmatpush2.msra.mxu0 0.0
      %2780 = vmatprep.subr.mxu0 0.0
      %2781 = vmatpush2.msra.mxu0 0.0
      %2782 = vmatprep.mubr.f32.mxu0 0.0
      %2783 = vmatmul.mubr.f32.gmra.mxu0 %v2689
      %v2784 = vpop.f32.mrf.mxu0
      %v2785 = vadd.f32 0.0, %v2784
      %v2786 = vpop.f32.mrf.mxu0
      %2787 = vmatprep.mubr.f32.mxu0 0.0
      %2788 = vmatmul.mubr.f32.gmra.mxu0 %v2692
      %v2789 = vpop.f32.mrf.mxu0
      %v2790 = vadd.f32 0.0, %v2789
      %v2791 = vpop.f32.mrf.mxu0
      %2792 = vmatprep.mubr.f32.mxu0 0.0
      %2793 = vmatmul.mubr.f32.gmra.mxu0 %v2695
      %v2794 = vpop.f32.mrf.mxu0
      %v2795 = vadd.f32 0.0, %v2794
      %v2796 = vpop.f32.mrf.mxu0
      %2797 = vmatprep.mubr.f32.mxu0 0.0
      %2798 = vmatmul.mubr.f32.gmra.mxu0 %v2698
      %v2799 = vpop.f32.mrf.mxu0
      %v2800 = vadd.f32 0.0, %v2799
      %v2801 = vpop.f32.mrf.mxu0
      %2802 = vmatprep.mubr.f32.mxu0 0.0
      %2803 = vmatmul.mubr.f32.gmra.mxu0 %v2701
      %v2804 = vpop.f32.mrf.mxu0
      %v2805 = vadd.f32 0.0, %v2804
      %v2806 = vpop.f32.mrf.mxu0
      %2807 = vmatprep.mubr.f32.mxu0 0.0
      %2808 = vmatmul.mubr.f32.gmra.mxu0 %v2704
      %v2809 = vpop.f32.mrf.mxu0
      %v2810 = vadd.f32 0.0, %v2809
      %v2811 = vpop.f32.mrf.mxu0
      %2812 = vmatprep.mubr.f32.mxu0 0.0
      %2813 = vmatmul.mubr.f32.gmra.mxu0 %v2707
      %v2814 = vpop.f32.mrf.mxu0
      %v2815 = vadd.f32 0.0, %v2814
      %v2816 = vpop.f32.mrf.mxu0
      %2817 = vmatprep.mubr.f32.mxu0 0.0
      %2818 = vmatmul.mubr.f32.gmra.mxu0 %v2710
      %v2819 = vpop.f32.mrf.mxu0
      %v2820 = vadd.f32 0.0, %v2819
      %v2821 = vpop.f32.mrf.mxu0
      %2822 = vmatprep.mubr.f32.mxu0 0.0
      %2823 = vmatmul.mubr.f32.gmra.mxu0 %v2713
      %v2824 = vpop.f32.mrf.mxu0
      %v2825 = vadd.f32 0.0, %v2824
      %v2826 = vpop.f32.mrf.mxu0
      %2827 = vmatprep.mubr.f32.mxu0 0.0
      %2828 = vmatmul.mubr.f32.gmra.mxu0 %v2716
      %v2829 = vpop.f32.mrf.mxu0
      %v2830 = vadd.f32 0.0, %v2829
      %v2831 = vpop.f32.mrf.mxu0
      %2832 = vdwg.mxu0
      %v2833 = vadd.f32 %v2664, %v2785
      %v2834 = vadd.f32 %v2665, %v2790
      %v2835 = vadd.f32 %v2666, %v2795
      %v2836 = vadd.f32 %v2667, %v2800
      %v2837 = vadd.f32 %v2668, %v2805
      %v2838 = vadd.f32 %v2669, %v2810
      %v2839 = vadd.f32 %v2670, %v2815
      %v2840 = vadd.f32 %v2671, %v2820
      %v2841 = vadd.f32 %v2672, %v2825
      %v2842 = vadd.f32 %v2673, %v2830
      %v2843 = vld [vmem:[#allocation3 + $0xc] sm:$0xff]
      %v2844 = vld [vmem:[#allocation3 + $0x14] sm:$0xff]
      %v2845 = vld [vmem:[#allocation3 + $0x1c] sm:$0xff]
      %v2846 = vld [vmem:[#allocation3 + $0x24] sm:$0xff]
      %v2847 = vld [vmem:[#allocation3 + $0x2c] sm:$0xff]
      %v2848 = vld [vmem:[#allocation3 + $0x34] sm:$0xff]
      %v2849 = vld [vmem:[#allocation3 + $0x3c] sm:$0xff]
      %v2850 = vld [vmem:[#allocation3 + $0x44] sm:$0xff]
      %v2851 = vld [vmem:[#allocation3 + $0x4c] sm:$0xff]
      %v2852 = vld [vmem:[#allocation3 + $0x54] sm:$0xff]
      %v2853 = vld [vmem:[%s2 + $0xa0] sm:$0xff]
      %v2854 = vld [vmem:[%s2 + $0xa8] sm:$0xff]
      %v2855 = vld [vmem:[%s2 + $0xb0] sm:$0xff]
      %v2856 = vld [vmem:[%s2 + $0xb8] sm:$0xff]
      %v2858 = vsel %vm256, %v2843, 0
      %v2861 = vsel %vm256, %v2844, 0
      %v2864 = vsel %vm256, %v2845, 0
      %v2867 = vsel %vm256, %v2846, 0
      %v2870 = vsel %vm256, %v2847, 0
      %v2873 = vsel %vm256, %v2848, 0
      %v2876 = vsel %vm256, %v2849, 0
      %v2879 = vsel %vm256, %v2850, 0
      %v2882 = vsel %vm256, %v2851, 0
      %v2885 = vsel %vm256, %v2852, 0
      %2887 = vmatprep.subr.mxu0 0.0
      %2888 = vmatpush1.msra.mxu0 0.0
      %2889 = vmatprep.subr.mxu0 0.0
      %2890 = vmatpush1.msra.mxu0 0.0
      %2891 = vmatprep.subr.mxu0 0.0
      %2892 = vmatpush1.msra.mxu0 0.0
      %2893 = vmatprep.subr.mxu0 0.0
      %2894 = vmatpush1.msra.mxu0 0.0
      %2895 = vmatprep.subr.mxu0 0.0
      %2896 = vmatpush1.msra.mxu0 0.0
      %2897 = vmatprep.subr.mxu0 0.0
      %2898 = vmatpush1.msra.mxu0 0.0
      %2899 = vmatprep.subr.mxu0 0.0
      %2900 = vmatpush1.msra.mxu0 0.0
      %2901 = vmatprep.subr.mxu0 0.0
      %2902 = vmatpush1.msra.mxu0 0.0
      %2903 = vmatprep.subr.mxu0 0.0
      %2904 = vmatpush1.msra.mxu0 0.0
      %2905 = vmatprep.subr.mxu0 0.0
      %2906 = vmatpush1.msra.mxu0 0.0
      %2907 = vmatprep.subr.mxu0 0.0
      %2908 = vmatpush1.msra.mxu0 0.0
      %2909 = vmatprep.subr.mxu0 0.0
      %2910 = vmatpush1.msra.mxu0 0.0
      %2911 = vmatprep.subr.mxu0 0.0
      %2912 = vmatpush1.msra.mxu0 %v2856
      %2913 = vmatprep.subr.mxu0 0.0
      %2914 = vmatpush1.msra.mxu0 %v2855
      %2915 = vmatprep.subr.mxu0 0.0
      %2916 = vmatpush1.msra.mxu0 %v2854
      %2917 = vmatprep.subr.mxu0 0.0
      %2918 = vmatpush1.msra.mxu0 %v2853
      %2919 = vmatprep.subr.mxu0 0.0
      %2920 = vmatpush2.msra.mxu0 0.0
      %2921 = vmatprep.subr.mxu0 0.0
      %2922 = vmatpush2.msra.mxu0 0.0
      %2923 = vmatprep.subr.mxu0 0.0
      %2924 = vmatpush2.msra.mxu0 0.0
      %2925 = vmatprep.subr.mxu0 0.0
      %2926 = vmatpush2.msra.mxu0 0.0
      %2927 = vmatprep.subr.mxu0 0.0
      %2928 = vmatpush2.msra.mxu0 0.0
      %2929 = vmatprep.subr.mxu0 0.0
      %2930 = vmatpush2.msra.mxu0 0.0
      %2931 = vmatprep.subr.mxu0 0.0
      %2932 = vmatpush2.msra.mxu0 0.0
      %2933 = vmatprep.subr.mxu0 0.0
      %2934 = vmatpush2.msra.mxu0 0.0
      %2935 = vmatprep.subr.mxu0 0.0
      %2936 = vmatpush2.msra.mxu0 0.0
      %2937 = vmatprep.subr.mxu0 0.0
      %2938 = vmatpush2.msra.mxu0 0.0
      %2939 = vmatprep.subr.mxu0 0.0
      %2940 = vmatpush2.msra.mxu0 0.0
      %2941 = vmatprep.subr.mxu0 0.0
      %2942 = vmatpush2.msra.mxu0 0.0
      %2943 = vmatprep.subr.mxu0 0.0
      %2944 = vmatpush2.msra.mxu0 0.0
      %2945 = vmatprep.subr.mxu0 0.0
      %2946 = vmatpush2.msra.mxu0 0.0
      %2947 = vmatprep.subr.mxu0 0.0
      %2948 = vmatpush2.msra.mxu0 0.0
      %2949 = vmatprep.subr.mxu0 0.0
      %2950 = vmatpush2.msra.mxu0 0.0
      %2951 = vmatprep.mubr.f32.mxu0 0.0
      %2952 = vmatmul.mubr.f32.gmra.mxu0 %v2858
      %v2953 = vpop.f32.mrf.mxu0
      %v2954 = vadd.f32 0.0, %v2953
      %v2955 = vpop.f32.mrf.mxu0
      %2956 = vmatprep.mubr.f32.mxu0 0.0
      %2957 = vmatmul.mubr.f32.gmra.mxu0 %v2861
      %v2958 = vpop.f32.mrf.mxu0
      %v2959 = vadd.f32 0.0, %v2958
      %v2960 = vpop.f32.mrf.mxu0
      %2961 = vmatprep.mubr.f32.mxu0 0.0
      %2962 = vmatmul.mubr.f32.gmra.mxu0 %v2864
      %v2963 = vpop.f32.mrf.mxu0
      %v2964 = vadd.f32 0.0, %v2963
      %v2965 = vpop.f32.mrf.mxu0
      %2966 = vmatprep.mubr.f32.mxu0 0.0
      %2967 = vmatmul.mubr.f32.gmra.mxu0 %v2867
      %v2968 = vpop.f32.mrf.mxu0
      %v2969 = vadd.f32 0.0, %v2968
      %v2970 = vpop.f32.mrf.mxu0
      %2971 = vmatprep.mubr.f32.mxu0 0.0
      %2972 = vmatmul.mubr.f32.gmra.mxu0 %v2870
      %v2973 = vpop.f32.mrf.mxu0
      %v2974 = vadd.f32 0.0, %v2973
      %v2975 = vpop.f32.mrf.mxu0
      %2976 = vmatprep.mubr.f32.mxu0 0.0
      %2977 = vmatmul.mubr.f32.gmra.mxu0 %v2873
      %v2978 = vpop.f32.mrf.mxu0
      %v2979 = vadd.f32 0.0, %v2978
      %v2980 = vpop.f32.mrf.mxu0
      %2981 = vmatprep.mubr.f32.mxu0 0.0
      %2982 = vmatmul.mubr.f32.gmra.mxu0 %v2876
      %v2983 = vpop.f32.mrf.mxu0
      %v2984 = vadd.f32 0.0, %v2983
      %v2985 = vpop.f32.mrf.mxu0
      %2986 = vmatprep.mubr.f32.mxu0 0.0
      %2987 = vmatmul.mubr.f32.gmra.mxu0 %v2879
      %v2988 = vpop.f32.mrf.mxu0
      %v2989 = vadd.f32 0.0, %v2988
      %v2990 = vpop.f32.mrf.mxu0
      %2991 = vmatprep.mubr.f32.mxu0 0.0
      %2992 = vmatmul.mubr.f32.gmra.mxu0 %v2882
      %v2993 = vpop.f32.mrf.mxu0
      %v2994 = vadd.f32 0.0, %v2993
      %v2995 = vpop.f32.mrf.mxu0
      %2996 = vmatprep.mubr.f32.mxu0 0.0
      %2997 = vmatmul.mubr.f32.gmra.mxu0 %v2885
      %v2998 = vpop.f32.mrf.mxu0
      %v2999 = vadd.f32 0.0, %v2998
      %v3000 = vpop.f32.mrf.mxu0
      %3001 = vdwg.mxu0
      %v3002 = vadd.f32 %v2833, %v2954
      %v3003 = vadd.f32 %v2834, %v2959
      %v3004 = vadd.f32 %v2835, %v2964
      %v3005 = vadd.f32 %v2836, %v2969
      %v3006 = vadd.f32 %v2837, %v2974
      %v3007 = vadd.f32 %v2838, %v2979
      %v3008 = vadd.f32 %v2839, %v2984
      %v3009 = vadd.f32 %v2840, %v2989
      %v3010 = vadd.f32 %v2841, %v2994
      %v3011 = vadd.f32 %v2842, %v2999
      %v3012 = vld [vmem:[#allocation3 + $0x14] sm:$0xff]
      %v3013 = vld [vmem:[#allocation3 + $0x1c] sm:$0xff]
      %v3014 = vld [vmem:[#allocation3 + $0x24] sm:$0xff]
      %v3015 = vld [vmem:[#allocation3 + $0x2c] sm:$0xff]
      %v3016 = vld [vmem:[#allocation3 + $0x34] sm:$0xff]
      %v3017 = vld [vmem:[#allocation3 + $0x3c] sm:$0xff]
      %v3018 = vld [vmem:[#allocation3 + $0x44] sm:$0xff]
      %v3019 = vld [vmem:[#allocation3 + $0x4c] sm:$0xff]
      %v3020 = vld [vmem:[#allocation3 + $0x54] sm:$0xff]
      %v3021 = vld [vmem:[#allocation3 + $0x5c] sm:$0xff]
      %v3022 = vld [vmem:[%s2 + $0xc0] sm:$0xff]
      %v3023 = vld [vmem:[%s2 + $0xc8] sm:$0xff]
      %v3024 = vld [vmem:[%s2 + $0xd0] sm:$0xff]
      %v3025 = vld [vmem:[%s2 + $0xd8] sm:$0xff]
      %v3027 = vsel %vm256, %v3012, 0
      %v3030 = vsel %vm256, %v3013, 0
      %v3033 = vsel %vm256, %v3014, 0
      %v3036 = vsel %vm256, %v3015, 0
      %v3039 = vsel %vm256, %v3016, 0
      %v3042 = vsel %vm256, %v3017, 0
      %v3045 = vsel %vm256, %v3018, 0
      %v3048 = vsel %vm256, %v3019, 0
      %v3051 = vsel %vm256, %v3020, 0
      %v3054 = vsel %vm256, %v3021, 0
      %3056 = vmatprep.subr.mxu0 0.0
      %3057 = vmatpush1.msra.mxu0 0.0
      %3058 = vmatprep.subr.mxu0 0.0
      %3059 = vmatpush1.msra.mxu0 0.0
      %3060 = vmatprep.subr.mxu0 0.0
      %3061 = vmatpush1.msra.mxu0 0.0
      %3062 = vmatprep.subr.mxu0 0.0
      %3063 = vmatpush1.msra.mxu0 0.0
      %3064 = vmatprep.subr.mxu0 0.0
      %3065 = vmatpush1.msra.mxu0 0.0
      %3066 = vmatprep.subr.mxu0 0.0
      %3067 = vmatpush1.msra.mxu0 0.0
      %3068 = vmatprep.subr.mxu0 0.0
      %3069 = vmatpush1.msra.mxu0 0.0
      %3070 = vmatprep.subr.mxu0 0.0
      %3071 = vmatpush1.msra.mxu0 0.0
      %3072 = vmatprep.subr.mxu0 0.0
      %3073 = vmatpush1.msra.mxu0 0.0
      %3074 = vmatprep.subr.mxu0 0.0
      %3075 = vmatpush1.msra.mxu0 0.0
      %3076 = vmatprep.subr.mxu0 0.0
      %3077 = vmatpush1.msra.mxu0 0.0
      %3078 = vmatprep.subr.mxu0 0.0
      %3079 = vmatpush1.msra.mxu0 0.0
      %3080 = vmatprep.subr.mxu0 0.0
      %3081 = vmatpush1.msra.mxu0 %v3025
      %3082 = vmatprep.subr.mxu0 0.0
      %3083 = vmatpush1.msra.mxu0 %v3024
      %3084 = vmatprep.subr.mxu0 0.0
      %3085 = vmatpush1.msra.mxu0 %v3023
      %3086 = vmatprep.subr.mxu0 0.0
      %3087 = vmatpush1.msra.mxu0 %v3022
      %3088 = vmatprep.subr.mxu0 0.0
      %3089 = vmatpush2.msra.mxu0 0.0
      %3090 = vmatprep.subr.mxu0 0.0
      %3091 = vmatpush2.msra.mxu0 0.0
      %3092 = vmatprep.subr.mxu0 0.0
      %3093 = vmatpush2.msra.mxu0 0.0
      %3094 = vmatprep.subr.mxu0 0.0
      %3095 = vmatpush2.msra.mxu0 0.0
      %3096 = vmatprep.subr.mxu0 0.0
      %3097 = vmatpush2.msra.mxu0 0.0
      %3098 = vmatprep.subr.mxu0 0.0
      %3099 = vmatpush2.msra.mxu0 0.0
      %3100 = vmatprep.subr.mxu0 0.0
      %3101 = vmatpush2.msra.mxu0 0.0
      %3102 = vmatprep.subr.mxu0 0.0
      %3103 = vmatpush2.msra.mxu0 0.0
      %3104 = vmatprep.subr.mxu0 0.0
      %3105 = vmatpush2.msra.mxu0 0.0
      %3106 = vmatprep.subr.mxu0 0.0
      %3107 = vmatpush2.msra.mxu0 0.0
      %3108 = vmatprep.subr.mxu0 0.0
      %3109 = vmatpush2.msra.mxu0 0.0
      %3110 = vmatprep.subr.mxu0 0.0
      %3111 = vmatpush2.msra.mxu0 0.0
      %3112 = vmatprep.subr.mxu0 0.0
      %3113 = vmatpush2.msra.mxu0 0.0
      %3114 = vmatprep.subr.mxu0 0.0
      %3115 = vmatpush2.msra.mxu0 0.0
      %3116 = vmatprep.subr.mxu0 0.0
      %3117 = vmatpush2.msra.mxu0 0.0
      %3118 = vmatprep.subr.mxu0 0.0
      %3119 = vmatpush2.msra.mxu0 0.0
      %3120 = vmatprep.mubr.f32.mxu0 0.0
      %3121 = vmatmul.mubr.f32.gmra.mxu0 %v3027
      %v3122 = vpop.f32.mrf.mxu0
      %v3123 = vadd.f32 0.0, %v3122
      %v3124 = vpop.f32.mrf.mxu0
      %3125 = vmatprep.mubr.f32.mxu0 0.0
      %3126 = vmatmul.mubr.f32.gmra.mxu0 %v3030
      %v3127 = vpop.f32.mrf.mxu0
      %v3128 = vadd.f32 0.0, %v3127
      %v3129 = vpop.f32.mrf.mxu0
      %3130 = vmatprep.mubr.f32.mxu0 0.0
      %3131 = vmatmul.mubr.f32.gmra.mxu0 %v3033
      %v3132 = vpop.f32.mrf.mxu0
      %v3133 = vadd.f32 0.0, %v3132
      %v3134 = vpop.f32.mrf.mxu0
      %3135 = vmatprep.mubr.f32.mxu0 0.0
      %3136 = vmatmul.mubr.f32.gmra.mxu0 %v3036
      %v3137 = vpop.f32.mrf.mxu0
      %v3138 = vadd.f32 0.0, %v3137
      %v3139 = vpop.f32.mrf.mxu0
      %3140 = vmatprep.mubr.f32.mxu0 0.0
      %3141 = vmatmul.mubr.f32.gmra.mxu0 %v3039
      %v3142 = vpop.f32.mrf.mxu0
      %v3143 = vadd.f32 0.0, %v3142
      %v3144 = vpop.f32.mrf.mxu0
      %3145 = vmatprep.mubr.f32.mxu0 0.0
      %3146 = vmatmul.mubr.f32.gmra.mxu0 %v3042
      %v3147 = vpop.f32.mrf.mxu0
      %v3148 = vadd.f32 0.0, %v3147
      %v3149 = vpop.f32.mrf.mxu0
      %3150 = vmatprep.mubr.f32.mxu0 0.0
      %3151 = vmatmul.mubr.f32.gmra.mxu0 %v3045
      %v3152 = vpop.f32.mrf.mxu0
      %v3153 = vadd.f32 0.0, %v3152
      %v3154 = vpop.f32.mrf.mxu0
      %3155 = vmatprep.mubr.f32.mxu0 0.0
      %3156 = vmatmul.mubr.f32.gmra.mxu0 %v3048
      %v3157 = vpop.f32.mrf.mxu0
      %v3158 = vadd.f32 0.0, %v3157
      %v3159 = vpop.f32.mrf.mxu0
      %3160 = vmatprep.mubr.f32.mxu0 0.0
      %3161 = vmatmul.mubr.f32.gmra.mxu0 %v3051
      %v3162 = vpop.f32.mrf.mxu0
      %v3163 = vadd.f32 0.0, %v3162
      %v3164 = vpop.f32.mrf.mxu0
      %3165 = vmatprep.mubr.f32.mxu0 0.0
      %3166 = vmatmul.mubr.f32.gmra.mxu0 %v3054
      %v3167 = vpop.f32.mrf.mxu0
      %v3168 = vadd.f32 0.0, %v3167
      %v3169 = vpop.f32.mrf.mxu0
      %3170 = vdwg.mxu0
      %v3171 = vadd.f32 %v3002, %v3123
      %v3172 = vadd.f32 %v3003, %v3128
      %v3173 = vadd.f32 %v3004, %v3133
      %v3174 = vadd.f32 %v3005, %v3138
      %v3175 = vadd.f32 %v3006, %v3143
      %v3176 = vadd.f32 %v3007, %v3148
      %v3177 = vadd.f32 %v3008, %v3153
      %v3178 = vadd.f32 %v3009, %v3158
      %v3179 = vadd.f32 %v3010, %v3163
      %v3180 = vadd.f32 %v3011, %v3168
      %v3181 = vld [vmem:[#allocation3 + $0x15] sm:$0xff]
      %v3182 = vld [vmem:[#allocation3 + $0x1d] sm:$0xff]
      %v3183 = vld [vmem:[#allocation3 + $0x25] sm:$0xff]
      %v3184 = vld [vmem:[#allocation3 + $0x2d] sm:$0xff]
      %v3185 = vld [vmem:[#allocation3 + $0x35] sm:$0xff]
      %v3186 = vld [vmem:[#allocation3 + $0x3d] sm:$0xff]
      %v3187 = vld [vmem:[#allocation3 + $0x45] sm:$0xff]
      %v3188 = vld [vmem:[#allocation3 + $0x4d] sm:$0xff]
      %v3189 = vld [vmem:[#allocation3 + $0x55] sm:$0xff]
      %v3190 = vld [vmem:[#allocation3 + $0x5d] sm:$0xff]
      %v3191 = vld [vmem:[%s2 + $0xe0] sm:$0xff]
      %v3192 = vld [vmem:[%s2 + $0xe8] sm:$0xff]
      %v3193 = vld [vmem:[%s2 + $0xf0] sm:$0xff]
      %v3194 = vld [vmem:[%s2 + $0xf8] sm:$0xff]
      %v3196 = vsel %vm256, %v3181, 0
      %v3199 = vsel %vm256, %v3182, 0
      %v3202 = vsel %vm256, %v3183, 0
      %v3205 = vsel %vm256, %v3184, 0
      %v3208 = vsel %vm256, %v3185, 0
      %v3211 = vsel %vm256, %v3186, 0
      %v3214 = vsel %vm256, %v3187, 0
      %v3217 = vsel %vm256, %v3188, 0
      %v3220 = vsel %vm256, %v3189, 0
      %v3223 = vsel %vm256, %v3190, 0
      %3225 = vmatprep.subr.mxu0 0.0
      %3226 = vmatpush1.msra.mxu0 0.0
      %3227 = vmatprep.subr.mxu0 0.0
      %3228 = vmatpush1.msra.mxu0 0.0
      %3229 = vmatprep.subr.mxu0 0.0
      %3230 = vmatpush1.msra.mxu0 0.0
      %3231 = vmatprep.subr.mxu0 0.0
      %3232 = vmatpush1.msra.mxu0 0.0
      %3233 = vmatprep.subr.mxu0 0.0
      %3234 = vmatpush1.msra.mxu0 0.0
      %3235 = vmatprep.subr.mxu0 0.0
      %3236 = vmatpush1.msra.mxu0 0.0
      %3237 = vmatprep.subr.mxu0 0.0
      %3238 = vmatpush1.msra.mxu0 0.0
      %3239 = vmatprep.subr.mxu0 0.0
      %3240 = vmatpush1.msra.mxu0 0.0
      %3241 = vmatprep.subr.mxu0 0.0
      %3242 = vmatpush1.msra.mxu0 0.0
      %3243 = vmatprep.subr.mxu0 0.0
      %3244 = vmatpush1.msra.mxu0 0.0
      %3245 = vmatprep.subr.mxu0 0.0
      %3246 = vmatpush1.msra.mxu0 0.0
      %3247 = vmatprep.subr.mxu0 0.0
      %3248 = vmatpush1.msra.mxu0 0.0
      %3249 = vmatprep.subr.mxu0 0.0
      %3250 = vmatpush1.msra.mxu0 %v3194
      %3251 = vmatprep.subr.mxu0 0.0
      %3252 = vmatpush1.msra.mxu0 %v3193
      %3253 = vmatprep.subr.mxu0 0.0
      %3254 = vmatpush1.msra.mxu0 %v3192
      %3255 = vmatprep.subr.mxu0 0.0
      %3256 = vmatpush1.msra.mxu0 %v3191
      %3257 = vmatprep.subr.mxu0 0.0
      %3258 = vmatpush2.msra.mxu0 0.0
      %3259 = vmatprep.subr.mxu0 0.0
      %3260 = vmatpush2.msra.mxu0 0.0
      %3261 = vmatprep.subr.mxu0 0.0
      %3262 = vmatpush2.msra.mxu0 0.0
      %3263 = vmatprep.subr.mxu0 0.0
      %3264 = vmatpush2.msra.mxu0 0.0
      %3265 = vmatprep.subr.mxu0 0.0
      %3266 = vmatpush2.msra.mxu0 0.0
      %3267 = vmatprep.subr.mxu0 0.0
      %3268 = vmatpush2.msra.mxu0 0.0
      %3269 = vmatprep.subr.mxu0 0.0
      %3270 = vmatpush2.msra.mxu0 0.0
      %3271 = vmatprep.subr.mxu0 0.0
      %3272 = vmatpush2.msra.mxu0 0.0
      %3273 = vmatprep.subr.mxu0 0.0
      %3274 = vmatpush2.msra.mxu0 0.0
      %3275 = vmatprep.subr.mxu0 0.0
      %3276 = vmatpush2.msra.mxu0 0.0
      %3277 = vmatprep.subr.mxu0 0.0
      %3278 = vmatpush2.msra.mxu0 0.0
      %3279 = vmatprep.subr.mxu0 0.0
      %3280 = vmatpush2.msra.mxu0 0.0
      %3281 = vmatprep.subr.mxu0 0.0
      %3282 = vmatpush2.msra.mxu0 0.0
      %3283 = vmatprep.subr.mxu0 0.0
      %3284 = vmatpush2.msra.mxu0 0.0
      %3285 = vmatprep.subr.mxu0 0.0
      %3286 = vmatpush2.msra.mxu0 0.0
      %3287 = vmatprep.subr.mxu0 0.0
      %3288 = vmatpush2.msra.mxu0 0.0
      %3289 = vmatprep.mubr.f32.mxu0 0.0
      %3290 = vmatmul.mubr.f32.gmra.mxu0 %v3196
      %v3291 = vpop.f32.mrf.mxu0
      %v3292 = vadd.f32 0.0, %v3291
      %v3293 = vpop.f32.mrf.mxu0
      %3294 = vmatprep.mubr.f32.mxu0 0.0
      %3295 = vmatmul.mubr.f32.gmra.mxu0 %v3199
      %v3296 = vpop.f32.mrf.mxu0
      %v3297 = vadd.f32 0.0, %v3296
      %v3298 = vpop.f32.mrf.mxu0
      %3299 = vmatprep.mubr.f32.mxu0 0.0
      %3300 = vmatmul.mubr.f32.gmra.mxu0 %v3202
      %v3301 = vpop.f32.mrf.mxu0
      %v3302 = vadd.f32 0.0, %v3301
      %v3303 = vpop.f32.mrf.mxu0
      %3304 = vmatprep.mubr.f32.mxu0 0.0
      %3305 = vmatmul.mubr.f32.gmra.mxu0 %v3205
      %v3306 = vpop.f32.mrf.mxu0
      %v3307 = vadd.f32 0.0, %v3306
      %v3308 = vpop.f32.mrf.mxu0
      %3309 = vmatprep.mubr.f32.mxu0 0.0
      %3310 = vmatmul.mubr.f32.gmra.mxu0 %v3208
      %v3311 = vpop.f32.mrf.mxu0
      %v3312 = vadd.f32 0.0, %v3311
      %v3313 = vpop.f32.mrf.mxu0
      %3314 = vmatprep.mubr.f32.mxu0 0.0
      %3315 = vmatmul.mubr.f32.gmra.mxu0 %v3211
      %v3316 = vpop.f32.mrf.mxu0
      %v3317 = vadd.f32 0.0, %v3316
      %v3318 = vpop.f32.mrf.mxu0
      %3319 = vmatprep.mubr.f32.mxu0 0.0
      %3320 = vmatmul.mubr.f32.gmra.mxu0 %v3214
      %v3321 = vpop.f32.mrf.mxu0
      %v3322 = vadd.f32 0.0, %v3321
      %v3323 = vpop.f32.mrf.mxu0
      %3324 = vmatprep.mubr.f32.mxu0 0.0
      %3325 = vmatmul.mubr.f32.gmra.mxu0 %v3217
      %v3326 = vpop.f32.mrf.mxu0
      %v3327 = vadd.f32 0.0, %v3326
      %v3328 = vpop.f32.mrf.mxu0
      %3329 = vmatprep.mubr.f32.mxu0 0.0
      %3330 = vmatmul.mubr.f32.gmra.mxu0 %v3220
      %v3331 = vpop.f32.mrf.mxu0
      %v3332 = vadd.f32 0.0, %v3331
      %v3333 = vpop.f32.mrf.mxu0
      %3334 = vmatprep.mubr.f32.mxu0 0.0
      %3335 = vmatmul.mubr.f32.gmra.mxu0 %v3223
      %v3336 = vpop.f32.mrf.mxu0
      %v3337 = vadd.f32 0.0, %v3336
      %v3338 = vpop.f32.mrf.mxu0
      %3339 = vdwg.mxu0
      %v3340 = vadd.f32 %v3171, %v3292
      %v3341 = vadd.f32 %v3172, %v3297
      %v3342 = vadd.f32 %v3173, %v3302
      %v3343 = vadd.f32 %v3174, %v3307
      %v3344 = vadd.f32 %v3175, %v3312
      %v3345 = vadd.f32 %v3176, %v3317
      %v3346 = vadd.f32 %v3177, %v3322
      %v3347 = vadd.f32 %v3178, %v3327
      %v3348 = vadd.f32 %v3179, %v3332
      %v3349 = vadd.f32 %v3180, %v3337
      %v3350 = vld [vmem:[#allocation3 + $0x16] sm:$0xff]
      %v3351 = vld [vmem:[#allocation3 + $0x1e] sm:$0xff]
      %v3352 = vld [vmem:[#allocation3 + $0x26] sm:$0xff]
      %v3353 = vld [vmem:[#allocation3 + $0x2e] sm:$0xff]
      %v3354 = vld [vmem:[#allocation3 + $0x36] sm:$0xff]
      %v3355 = vld [vmem:[#allocation3 + $0x3e] sm:$0xff]
      %v3356 = vld [vmem:[#allocation3 + $0x46] sm:$0xff]
      %v3357 = vld [vmem:[#allocation3 + $0x4e] sm:$0xff]
      %v3358 = vld [vmem:[#allocation3 + $0x56] sm:$0xff]
      %v3359 = vld [vmem:[#allocation3 + $0x5e] sm:$0xff]
      %v3360 = vld [vmem:[%s2 + $0x100] sm:$0xff]
      %v3361 = vld [vmem:[%s2 + $0x108] sm:$0xff]
      %v3362 = vld [vmem:[%s2 + $0x110] sm:$0xff]
      %v3363 = vld [vmem:[%s2 + $0x118] sm:$0xff]
      %v3365 = vsel %vm256, %v3350, 0
      %v3368 = vsel %vm256, %v3351, 0
      %v3371 = vsel %vm256, %v3352, 0
      %v3374 = vsel %vm256, %v3353, 0
      %v3377 = vsel %vm256, %v3354, 0
      %v3380 = vsel %vm256, %v3355, 0
      %v3383 = vsel %vm256, %v3356, 0
      %v3386 = vsel %vm256, %v3357, 0
      %v3389 = vsel %vm256, %v3358, 0
      %v3392 = vsel %vm256, %v3359, 0
      %3394 = vmatprep.subr.mxu0 0.0
      %3395 = vmatpush1.msra.mxu0 0.0
      %3396 = vmatprep.subr.mxu0 0.0
      %3397 = vmatpush1.msra.mxu0 0.0
      %3398 = vmatprep.subr.mxu0 0.0
      %3399 = vmatpush1.msra.mxu0 0.0
      %3400 = vmatprep.subr.mxu0 0.0
      %3401 = vmatpush1.msra.mxu0 0.0
      %3402 = vmatprep.subr.mxu0 0.0
      %3403 = vmatpush1.msra.mxu0 0.0
      %3404 = vmatprep.subr.mxu0 0.0
      %3405 = vmatpush1.msra.mxu0 0.0
      %3406 = vmatprep.subr.mxu0 0.0
      %3407 = vmatpush1.msra.mxu0 0.0
      %3408 = vmatprep.subr.mxu0 0.0
      %3409 = vmatpush1.msra.mxu0 0.0
      %3410 = vmatprep.subr.mxu0 0.0
      %3411 = vmatpush1.msra.mxu0 0.0
      %3412 = vmatprep.subr.mxu0 0.0
      %3413 = vmatpush1.msra.mxu0 0.0
      %3414 = vmatprep.subr.mxu0 0.0
      %3415 = vmatpush1.msra.mxu0 0.0
      %3416 = vmatprep.subr.mxu0 0.0
      %3417 = vmatpush1.msra.mxu0 0.0
      %3418 = vmatprep.subr.mxu0 0.0
      %3419 = vmatpush1.msra.mxu0 %v3363
      %3420 = vmatprep.subr.mxu0 0.0
      %3421 = vmatpush1.msra.mxu0 %v3362
      %3422 = vmatprep.subr.mxu0 0.0
      %3423 = vmatpush1.msra.mxu0 %v3361
      %3424 = vmatprep.subr.mxu0 0.0
      %3425 = vmatpush1.msra.mxu0 %v3360
      %3426 = vmatprep.subr.mxu0 0.0
      %3427 = vmatpush2.msra.mxu0 0.0
      %3428 = vmatprep.subr.mxu0 0.0
      %3429 = vmatpush2.msra.mxu0 0.0
      %3430 = vmatprep.subr.mxu0 0.0
      %3431 = vmatpush2.msra.mxu0 0.0
      %3432 = vmatprep.subr.mxu0 0.0
      %3433 = vmatpush2.msra.mxu0 0.0
      %3434 = vmatprep.subr.mxu0 0.0
      %3435 = vmatpush2.msra.mxu0 0.0
      %3436 = vmatprep.subr.mxu0 0.0
      %3437 = vmatpush2.msra.mxu0 0.0
      %3438 = vmatprep.subr.mxu0 0.0
      %3439 = vmatpush2.msra.mxu0 0.0
      %3440 = vmatprep.subr.mxu0 0.0
      %3441 = vmatpush2.msra.mxu0 0.0
      %3442 = vmatprep.subr.mxu0 0.0
      %3443 = vmatpush2.msra.mxu0 0.0
      %3444 = vmatprep.subr.mxu0 0.0
      %3445 = vmatpush2.msra.mxu0 0.0
      %3446 = vmatprep.subr.mxu0 0.0
      %3447 = vmatpush2.msra.mxu0 0.0
      %3448 = vmatprep.subr.mxu0 0.0
      %3449 = vmatpush2.msra.mxu0 0.0
      %3450 = vmatprep.subr.mxu0 0.0
      %3451 = vmatpush2.msra.mxu0 0.0
      %3452 = vmatprep.subr.mxu0 0.0
      %3453 = vmatpush2.msra.mxu0 0.0
      %3454 = vmatprep.subr.mxu0 0.0
      %3455 = vmatpush2.msra.mxu0 0.0
      %3456 = vmatprep.subr.mxu0 0.0
      %3457 = vmatpush2.msra.mxu0 0.0
      %3458 = vmatprep.mubr.f32.mxu0 0.0
      %3459 = vmatmul.mubr.f32.gmra.mxu0 %v3365
      %v3460 = vpop.f32.mrf.mxu0
      %v3461 = vadd.f32 0.0, %v3460
      %v3462 = vpop.f32.mrf.mxu0
      %3463 = vmatprep.mubr.f32.mxu0 0.0
      %3464 = vmatmul.mubr.f32.gmra.mxu0 %v3368
      %v3465 = vpop.f32.mrf.mxu0
      %v3466 = vadd.f32 0.0, %v3465
      %v3467 = vpop.f32.mrf.mxu0
      %3468 = vmatprep.mubr.f32.mxu0 0.0
      %3469 = vmatmul.mubr.f32.gmra.mxu0 %v3371
      %v3470 = vpop.f32.mrf.mxu0
      %v3471 = vadd.f32 0.0, %v3470
      %v3472 = vpop.f32.mrf.mxu0
      %3473 = vmatprep.mubr.f32.mxu0 0.0
      %3474 = vmatmul.mubr.f32.gmra.mxu0 %v3374
      %v3475 = vpop.f32.mrf.mxu0
      %v3476 = vadd.f32 0.0, %v3475
      %v3477 = vpop.f32.mrf.mxu0
      %3478 = vmatprep.mubr.f32.mxu0 0.0
      %3479 = vmatmul.mubr.f32.gmra.mxu0 %v3377
      %v3480 = vpop.f32.mrf.mxu0
      %v3481 = vadd.f32 0.0, %v3480
      %v3482 = vpop.f32.mrf.mxu0
      %3483 = vmatprep.mubr.f32.mxu0 0.0
      %3484 = vmatmul.mubr.f32.gmra.mxu0 %v3380
      %v3485 = vpop.f32.mrf.mxu0
      %v3486 = vadd.f32 0.0, %v3485
      %v3487 = vpop.f32.mrf.mxu0
      %3488 = vmatprep.mubr.f32.mxu0 0.0
      %3489 = vmatmul.mubr.f32.gmra.mxu0 %v3383
      %v3490 = vpop.f32.mrf.mxu0
      %v3491 = vadd.f32 0.0, %v3490
      %v3492 = vpop.f32.mrf.mxu0
      %3493 = vmatprep.mubr.f32.mxu0 0.0
      %3494 = vmatmul.mubr.f32.gmra.mxu0 %v3386
      %v3495 = vpop.f32.mrf.mxu0
      %v3496 = vadd.f32 0.0, %v3495
      %v3497 = vpop.f32.mrf.mxu0
      %3498 = vmatprep.mubr.f32.mxu0 0.0
      %3499 = vmatmul.mubr.f32.gmra.mxu0 %v3389
      %v3500 = vpop.f32.mrf.mxu0
      %v3501 = vadd.f32 0.0, %v3500
      %v3502 = vpop.f32.mrf.mxu0
      %3503 = vmatprep.mubr.f32.mxu0 0.0
      %3504 = vmatmul.mubr.f32.gmra.mxu0 %v3392
      %v3505 = vpop.f32.mrf.mxu0
      %v3506 = vadd.f32 0.0, %v3505
      %v3507 = vpop.f32.mrf.mxu0
      %3508 = vdwg.mxu0
      %v3509 = vadd.f32 %v3340, %v3461
      %v3510 = vadd.f32 %v3341, %v3466
      %v3511 = vadd.f32 %v3342, %v3471
      %v3512 = vadd.f32 %v3343, %v3476
      %v3513 = vadd.f32 %v3344, %v3481
      %v3514 = vadd.f32 %v3345, %v3486
      %v3515 = vadd.f32 %v3346, %v3491
      %v3516 = vadd.f32 %v3347, %v3496
      %v3517 = vadd.f32 %v3348, %v3501
      %v3518 = vadd.f32 %v3349, %v3506
      %3519 = vst.msk [vmem:[%s251] sm:$0xff] %vm256, %v3509
      %3520 = vst.msk [vmem:[%s251 + $0x8] sm:$0xff] %vm256, %v3510
      %3521 = vst.msk [vmem:[%s251 + $0x10] sm:$0xff] %vm256, %v3511
      %3522 = vst.msk [vmem:[%s251 + $0x18] sm:$0xff] %vm256, %v3512
      %3523 = vst.msk [vmem:[%s251 + $0x20] sm:$0xff] %vm256, %v3513
      %3524 = vst.msk [vmem:[%s251 + $0x28] sm:$0xff] %vm256, %v3514
      %3525 = vst.msk [vmem:[%s251 + $0x30] sm:$0xff] %vm256, %v3515
      %3526 = vst.msk [vmem:[%s251 + $0x38] sm:$0xff] %vm256, %v3516
      %3527 = vst.msk [vmem:[%s251 + $0x40] sm:$0xff] %vm256, %v3517
      %3528 = vst.msk [vmem:[%s251 + $0x48] sm:$0xff] %vm256, %v3518
      %p3529 = scmp.lt.s32.totalorder %s17, 1
      %s3530 = scalar_select %p3529, %s17, 1
      %s3531 = smul.addr %s3530, 10
      %s3532 = smul.addr %s3531, 8
      %s3533 = scalar_lea.vmem %s6, %s3532
      // Predicated region
      $region45: #{bottleneck_forward.1} parent=43 // pred_check
        %p3534 = pneg %p166
      $region46: #{bottleneck_forward.1} parent=43 // pred_check_branch
        %3536 = sbr.rel (%p3534) target = $region48
      $region47: #{bottleneck_forward.1} parent=43 // pred_region
        _
      $region48: #{bottleneck_forward.1} parent=43 // pred_fallthru
        _
    $region44: #{bottleneck_forward.1} parent=5 // pred_fallthru
      _
    %p3537 = scmp.le.s32.totalorder 2, %s12
    // Predicated region
    $region49: #{bottleneck_forward.1} parent=5 // pred_check
      %p3538 = pneg %p3537
    $region50: #{bottleneck_forward.1} parent=5 // pred_check_branch
      %3540 = sbr.rel (%p3538) target = $region52
    $region51: #{bottleneck_forward.1} parent=5 // pred_region
      %s3541 = ssub.s32 %s12, 2
      // Predicated region
      $region53: #{bottleneck_forward.1} parent=51 // pred_check
        %p3542 = pneg %p172
      $region54: #{bottleneck_forward.1} parent=51 // pred_check_branch
        %3544 = sbr.rel (%p3542) target = $region56
      $region55: #{bottleneck_forward.1} parent=51 // pred_region
        %p3545 = scmp.lt.s32.totalorder %s18, 1
        %s3546 = scalar_select %p3545, %s18, 1
        %s3547 = smul.addr %s3546, 10
        %s3548 = smul.addr %s3547, 8
        %s3549 = scalar_lea.vmem %s6, %s3548
      $region56: #{bottleneck_forward.1} parent=51 // pred_fallthru
        _
    $region52: #{bottleneck_forward.1} parent=5 // pred_fallthru
      _
  $region6: #{bottleneck_forward.1} parent=0 // loop_footer
    %s16 = sadd.s32 1, %s12
  $region7: #{bottleneck_forward.1} parent=0 // loop_footer_branch
    %11 = sbr.rel target = $region3
  $region8: #{bottleneck_forward.1} parent=0 // loop_exit
    _

</llo_original>
